<compile_context>
chip_gen: v5e
topology: v5e:2x2
jax: 0.10.0
libtpu: 0.0.40
codegen_flags: <defaults>
</compile_context>

<pallas_src>
import math

import jax
import jax.numpy as jnp
from jax.experimental import pallas as pl
from jax.experimental.pallas import tpu as pltpu

# ---- hyper-parameters (small, consistent with the module) ----
IMAGE_SIZE = 16
PATCH_SIZE = 4
CHANNELS = 4
NUM_CLASSES = 10
DIM = 32
DEPTH = 2
HEADS = 2
DIM_HEAD = 32          # must equal DIM (see note above)
MLP_DIM = 64
EPS = 1e-5             # torch nn.LayerNorm default
BATCH = 2

assert DIM == DIM_HEAD, "reference module requires dim == dim_head"

NUM_PATCHES = (IMAGE_SIZE // PATCH_SIZE) ** 2
PATCH_DIM = CHANNELS * PATCH_SIZE * PATCH_SIZE   # 64
SEQ = NUM_PATCHES + 1                            # 17
SEQ_PAD = ((SEQ + 7) // 8) * 8                   # 24: sublane-aligned per-batch row block
RT = BATCH * SEQ_PAD                             # 48 folded rows
E_DIM = HEADS * DIM                              # 64
QKV_DIM = 3 * E_DIM                              # 192 (fused q|k|v output width)
OUT_PAD = 128                                    # lane-dense classifier output width
LANES = QKV_DIM                                  # packed-slab lane width

USE_APPROX_RECIP = True                          # exact-reciprocal fallback switch


# ---------------- packed parameter-slab layout (static, module-level) ----------------
def _build_layout():
    layout = {}
    row = 0

    def add(name, h, c, align=1):
        nonlocal row
        row = ((row + align - 1) // align) * align
        layout[name] = (row, (h, c))
        row += h

    # -- matmul weights (heights are multiples of 8 -> rows stay sublane-aligned) --
    add("pe_w", PATCH_DIM, DIM)
    for l in range(DEPTH):
        add(f"wqkv{l}", DIM, QKV_DIM)            # [Wq | Wk | Wv], each HEADS*DIM wide
        add(f"wo{l}", E_DIM, DIM)
        add(f"w1_{l}", DIM, MLP_DIM)
        add(f"w2_{l}", MLP_DIM, DIM)
    add("head_w", DIM, OUT_PAD)                  # real width NUM_CLASSES, zero-padded to 128 lanes
    # -- 1-row vectors (LN gains/biases, linear biases) --
    add("pe_g1", 1, PATCH_DIM)
    add("pe_b1", 1, PATCH_DIM)
    add("pe_bw", 1, DIM)
    add("pe_g2", 1, DIM)
    add("pe_b2", 1, DIM)
    for l in range(DEPTH):
        add(f"ln1_g{l}", 1, DIM)
        add(f"ln1_b{l}", 1, DIM)
        add(f"bqkv{l}", 1, QKV_DIM)
        add(f"bo{l}", 1, DIM)
        add(f"ln2_g{l}", 1, DIM)
        add(f"ln2_b{l}", 1, DIM)
        add(f"b1_{l}", 1, MLP_DIM)
        add(f"b2_{l}", 1, DIM)
    add("head_g", 1, DIM)
    add("head_b", 1, DIM)
    add("head_bw", 1, OUT_PAD)
    # -- additive per-row table: (cls + pos[0]) on cls rows, pos[1:] elsewhere, 0 on pad rows --
    add("pos_cls", RT, DIM, align=8)
    total = ((row + 7) // 8) * 8
    return layout, total


_LAYOUT, _SLAB_ROWS = _build_layout()


# ---------------- shared math helpers (used inside the kernel) ----------------
def _layernorm(x, g, b):
    # One-pass form: two independent reductions (E[x], E[x^2]) pipeline in the XLU.
    m1 = jnp.mean(x, axis=-1, keepdims=True)
    m2 = jnp.mean(x * x, axis=-1, keepdims=True)
    var = m2 - m1 * m1
    return (x - m1) * jax.lax.rsqrt(var + EPS) * g + b


_SQRT_2_OVER_PI = math.sqrt(2.0 / math.pi)


def _gelu_tanh(x):
    # tanh approximation of GELU (kernel-side; see TODO(synk) at top).
    return 0.5 * x * (1.0 + jnp.tanh(_SQRT_2_OVER_PI * (x + 0.044715 * x * x * x)))


def _gelu_exact(x):
    # torch nn.GELU() default (erf-based); used only in the pure-JAX reference.
    return 0.5 * x * (1.0 + jax.lax.erf(x * (2.0 ** -0.5)))


# ---------------- fused forward kernel (single invocation, no grid) ----------------
def vit_fused_kernel(x_ref, w_ref, o_ref):
    # x_ref: (RT, PATCH_DIM) folded batch rows (row b*SEQ_PAD is a dummy cls row,
    #        rows SEQ..SEQ_PAD-1 of each batch block are zero padding).
    # w_ref: (_SLAB_ROWS, LANES) packed parameter slab.
    # o_ref: (RT, OUT_PAD) lane-dense per-row head output (cls rows sliced in wrapper).
    def wp(name):
        r, (h, c) = _LAYOUT[name]
        return w_ref[r:r + h, 0:c]

    scale = 1.0 / math.sqrt(DIM_HEAD)

    # ---- patch embedding: LN(patch_dim) -> Linear -> LN(dim), all folded rows ----
    x = _layernorm(x_ref[...], wp("pe_g1"), wp("pe_b1"))
    x = jnp.dot(x, wp("pe_w"), preferred_element_type=jnp.float32) + wp("pe_bw")
    x = _layernorm(x, wp("pe_g2"), wp("pe_b2"))                     # (RT, DIM)

    # ---- cls token + positional embedding ----
    # Zero the dummy cls rows, then add the pre-folded (cls + pos) additive table.
    ridx = jax.lax.broadcasted_iota(jnp.int32, (RT, DIM), 0)
    keep = ridx != 0
    for b in range(1, BATCH):
        keep = jnp.logical_and(keep, ridx != b * SEQ_PAD)
    x = jnp.where(keep, x, 0.0) + wp("pos_cls")                     # (RT, DIM)

    # ---- block-diagonal attention mask (hoisted out of the layer loop) ----
    # Query rows only see the SEQ real key rows of their own batch block.
    qi = jax.lax.broadcasted_iota(jnp.int32, (RT, RT), 0)
    ki = jax.lax.broadcasted_iota(jnp.int32, (RT, RT), 1)
    amask = None
    for b in range(BATCH):
        q_in = jnp.logical_and(qi >= b * SEQ_PAD, qi < (b + 1) * SEQ_PAD)
        k_in = jnp.logical_and(ki >= b * SEQ_PAD, ki < b * SEQ_PAD + SEQ)
        blk = jnp.logical_and(q_in, k_in)
        amask = blk if amask is None else jnp.logical_or(amask, blk)

    # ---- transformer layers (static unroll over DEPTH) ----
    for l in range(DEPTH):
        # PreNorm + Attention; single fused QKV matmul (RT, DIM) @ (DIM, 3E)
        yn = _layernorm(x, wp(f"ln1_g{l}"), wp(f"ln1_b{l}"))
        qkv = jnp.dot(yn, wp(f"wqkv{l}"),
                      preferred_element_type=jnp.float32) + wp(f"bqkv{l}")
        wo = wp(f"wo{l}")                                           # (E_DIM, DIM)
        proj = wp(f"bo{l}")                                         # (1, DIM), broadcasts

        # proj == concat_h(attn_h) @ Wo + bo, as a contraction split over heads
        for h in range(HEADS):
            qh = qkv[:, h * DIM_HEAD:(h + 1) * DIM_HEAD]
            kh = qkv[:, E_DIM + h * DIM_HEAD:E_DIM + (h + 1) * DIM_HEAD]
            vh = qkv[:, 2 * E_DIM + h * DIM_HEAD:2 * E_DIM + (h + 1) * DIM_HEAD]
            logits = jax.lax.dot_general(
                qh, kh, (((1,), (1,)), ((), ())),
                preferred_element_type=jnp.float32) * scale         # (RT, RT) = q @ k^T
            logits = jnp.where(amask, logits, -1e30)
            logits = logits - jnp.max(logits, axis=-1, keepdims=True)
            p = jnp.exp(logits)                                     # masked cols underflow to 0
            denom = jnp.sum(p, axis=-1, keepdims=True)
            if USE_APPROX_RECIP:
                p = p * pl.reciprocal(denom, approx=True)
            else:
                p = p / denom
            oh = jnp.dot(p, vh, preferred_element_type=jnp.float32)               # (RT, DIM)
            proj = proj + jnp.dot(oh, wo[h * DIM_HEAD:(h + 1) * DIM_HEAD, :],
                                  preferred_element_type=jnp.float32)
        # Attention adds its (pre-normed) input; Transformer adds the raw residual.
        x = (yn + proj) + x

        # PreNorm + FeedForward + residual
        yn = _layernorm(x, wp(f"ln2_g{l}"), wp(f"ln2_b{l}"))
        hmid = _gelu_tanh(jnp.dot(yn, wp(f"w1_{l}"),
                                  preferred_element_type=jnp.float32) + wp(f"b1_{l}"))
        x = jnp.dot(hmid, wp(f"w2_{l}"),
                    preferred_element_type=jnp.float32) + wp(f"b2_{l}") + x

    # ---- head LN + classifier on all rows (lane-dense (RT, 128) store) ----
    # The wrapper picks rows b*SEQ_PAD (cls pooling) and the first NUM_CLASSES lanes.
    yh = _layernorm(x, wp("head_g"), wp("head_b"))
    o_ref[...] = jnp.dot(yh, wp("head_w"),
                         preferred_element_type=jnp.float32) + wp("head_bw")


# ---------------- pallas_call wrapper (single launch per forward) ----------------
def vit_forward(img, w_slab):
    B, C, H, W = img.shape
    assert (B, C, H, W) == (BATCH, CHANNELS, IMAGE_SIZE, IMAGE_SIZE), img.shape
    h, w = H // PATCH_SIZE, W // PATCH_SIZE
    # TODO(synk): the einops 'b c (h p1) (w p2) -> b (h w) (p1 p2 c)' rearrange stays
    # as one plain-XLA reshape/transpose; the pixel gather has no cheap in-kernel form.
    x = img.reshape(B, C, h, PATCH_SIZE, w, PATCH_SIZE)
    x = jnp.transpose(x, (0, 2, 4, 3, 5, 1)).reshape(B, h * w, PATCH_DIM)
    # Row 0 per batch = dummy (replaced by the cls token in-kernel);
    # rows SEQ..SEQ_PAD-1 = zero padding (masked out of the attention).
    x = jnp.pad(x, ((0, 0), (1, SEQ_PAD - SEQ), (0, 0))).reshape(RT, PATCH_DIM)

    out = pl.pallas_call(
        vit_fused_kernel,
        out_shape=jax.ShapeDtypeStruct((RT, OUT_PAD), jnp.float32),
        compiler_params=pltpu.CompilerParams(
            vmem_limit_bytes=32 * 1024 * 1024,   # explicit budget; usage ~1 MiB
        ),
    )(x, w_slab)
    # cls pooling + logit slice: rows b*SEQ_PAD, first NUM_CLASSES lanes.
    return out.reshape(BATCH, SEQ_PAD, OUT_PAD)[:, 0, :NUM_CLASSES]


# ---------------- parameter packing (done once, off the hot path) ----------------
def pack_params(params):
    slab = jnp.zeros((_SLAB_ROWS, LANES), jnp.float32)

    def put(s, name, arr):
        arr = jnp.asarray(arr, jnp.float32)
        if arr.ndim == 1:
            arr = arr[None, :]
        r, _ = _LAYOUT[name]
        return s.at[r:r + arr.shape[0], :arr.shape[1]].set(arr)

    pe, hd = params["pe"], params["head"]
    slab = put(slab, "pe_w", pe["w"])
    for name, arr in (("pe_g1", pe["g1"]), ("pe_b1", pe["b1"]), ("pe_bw", pe["bw"]),
                      ("pe_g2", pe["g2"]), ("pe_b2", pe["b2"])):
        slab = put(slab, name, arr)
    for l in range(DEPTH):
        slab = put(slab, f"wqkv{l}", params["wqkv"][l])
        slab = put(slab, f"wo{l}", params["wo"][l])
        slab = put(slab, f"w1_{l}", params["w1"][l])
        slab = put(slab, f"w2_{l}", params["w2"][l])
        slab = put(slab, f"ln1_g{l}", params["ln1_g"][l])
        slab = put(slab, f"ln1_b{l}", params["ln1_b"][l])
        slab = put(slab, f"bqkv{l}", params["bqkv"][l])
        slab = put(slab, f"bo{l}", params["bo"][l])
        slab = put(slab, f"ln2_g{l}", params["ln2_g"][l])
        slab = put(slab, f"ln2_b{l}", params["ln2_b"][l])
        slab = put(slab, f"b1_{l}", params["b1"][l])
        slab = put(slab, f"b2_{l}", params["b2"][l])
    slab = put(slab, "head_w", hd["w"])
    slab = put(slab, "head_g", hd["g"])
    slab = put(slab, "head_b", hd["b"])
    slab = put(slab, "head_bw", hd["bw"])
    # Fold cls token + positional embedding into one additive per-row table.
    pos_cls = jnp.concatenate(
        [params["cls"].reshape(1, DIM) + params["pos"][0:1], params["pos"][1:]], axis=0)
    pos_cls = jnp.pad(pos_cls, ((0, SEQ_PAD - SEQ), (0, 0)))
    slab = put(slab, "pos_cls", jnp.tile(pos_cls, (BATCH, 1)))
    return slab


# ---------------- pure-JAX reference (mirrors the PyTorch module) ----------------
def reference_forward(img, params):
    B, C, H, W = img.shape
    h, w = H // PATCH_SIZE, W // PATCH_SIZE
    x = img.reshape(B, C, h, PATCH_SIZE, w, PATCH_SIZE)
    x = jnp.transpose(x, (0, 2, 4, 3, 5, 1)).reshape(B, h * w, PATCH_DIM)

    def ln(t, g, b):
        mu = t.mean(-1, keepdims=True)
        var = jnp.square(t - mu).mean(-1, keepdims=True)
        return (t - mu) / jnp.sqrt(var + EPS) * g + b

    pe = params["pe"]
    x = ln(x, pe["g1"], pe["b1"])
    x = x @ pe["w"] + pe["bw"]
    x = ln(x, pe["g2"], pe["b2"])
    cls = jnp.broadcast_to(params["cls"][None], (B, 1, DIM))
    x = jnp.concatenate([cls, x], axis=1) + params["pos"][None]
    N = x.shape[1]

    for l in range(DEPTH):
        y = ln(x, params["ln1_g"][l], params["ln1_b"][l])
        qkv = y @ params["wqkv"][l] + params["bqkv"][l]
        q = qkv[..., :E_DIM].reshape(B, N, HEADS, DIM).transpose(0, 2, 1, 3)
        k = qkv[..., E_DIM:2 * E_DIM].reshape(B, N, HEADS, DIM).transpose(0, 2, 1, 3)
        v = qkv[..., 2 * E_DIM:].reshape(B, N, HEADS, DIM).transpose(0, 2, 1, 3)
        att = jnp.einsum("bhqd,bhkd->bhqk", q, k) / math.sqrt(DIM_HEAD)
        att = jax.nn.softmax(att, axis=-1)
        o = jnp.einsum("bhqk,bhkd->bhqd", att, v)
        o = o.transpose(0, 2, 1, 3).reshape(B, N, HEADS * DIM_HEAD)
        o = o @ params["wo"][l] + params["bo"][l]
        x = (y + o) + x
        y = ln(x, params["ln2_g"][l], params["ln2_b"][l])
        hmid = _gelu_exact(y @ params["w1"][l] + params["b1"][l])
        x = (hmid @ params["w2"][l] + params["b2"][l]) + x

    hd = params["head"]
    y = ln(x[:, 0], hd["g"], hd["b"])
    return y @ hd["w"] + hd["bw"]


# ---------------- deterministic parameter init (logical layout) ----------------
def init_params(key):
    keys = iter(jax.random.split(key, 64))

    def w_init(shape, scale=0.02):
        return jax.random.normal(next(keys), shape, jnp.float32) * scale

    pe = dict(
        g1=jnp.ones((1, PATCH_DIM), jnp.float32), b1=jnp.zeros((1, PATCH_DIM), jnp.float32),
        w=w_init((PATCH_DIM, DIM)), bw=w_init((1, DIM)),
        g2=jnp.ones((1, DIM), jnp.float32), b2=jnp.zeros((1, DIM), jnp.float32))
    layers = dict(
        ln1_g=jnp.ones((DEPTH, 1, DIM), jnp.float32),
        ln1_b=jnp.zeros((DEPTH, 1, DIM), jnp.float32),
        wqkv=w_init((DEPTH, DIM, 3 * E_DIM)),          # [wq | wk | wv] fused on output dim
        bqkv=w_init((DEPTH, 1, 3 * E_DIM)),
        wo=w_init((DEPTH, E_DIM, DIM)), bo=w_init((DEPTH, 1, DIM)),
        ln2_g=jnp.ones((DEPTH, 1, DIM), jnp.float32),
        ln2_b=jnp.zeros((DEPTH, 1, DIM), jnp.float32),
        w1=w_init((DEPTH, DIM, MLP_DIM)), b1=w_init((DEPTH, 1, MLP_DIM)),
        w2=w_init((DEPTH, MLP_DIM, DIM)), b2=w_init((DEPTH, 1, DIM)))
    head = dict(
        g=jnp.ones((1, DIM), jnp.float32), b=jnp.zeros((1, DIM), jnp.float32),
        w=w_init((DIM, NUM_CLASSES)), bw=w_init((1, NUM_CLASSES)))
    return dict(pe=pe, cls=w_init((1, DIM), 1.0), pos=w_init((SEQ, DIM), 1.0),
                head=head, **layers)


if __name__ == "__main__":
    key = jax.random.PRNGKey(0)
    pkey, xkey = jax.random.split(key)
    params = init_params(pkey)
    packed = pack_params(params)                      # one-time packing, off the hot path
    img = jax.random.normal(xkey, (BATCH, CHANNELS, IMAGE_SIZE, IMAGE_SIZE), jnp.float32)

    fwd = jax.jit(vit_forward)
    out = jax.block_until_ready(fwd(img, packed))
    assert out.shape == (BATCH, NUM_CLASSES), out.shape

    with jax.default_matmul_precision("highest"):
        ref = reference_forward(img, params)
    if not jnp.allclose(out, ref, atol=1e-2, rtol=1e-2):
        raise AssertionError(f"mismatch: max abs err {jnp.max(jnp.abs(out - ref))}")

    print("KERNEL_OK")
</pallas_src>

<mosaic_0001>
module attributes {stable_mosaic.version = 11 : i64} {
  func.func @vit_fused_kernel(%arg0: memref<48x64xf32, #tpu.memory_space<vmem>>, %arg1: memref<552x192xf32, #tpu.memory_space<vmem>>, %arg2: memref<48x128xf32, #tpu.memory_space<vmem>>) attributes {dimension_semantics = [], scalar_prefetch = 0 : i64, scratch_operands = 0 : i64, tpu.core_type = #tpu.core_type<tc>} {
    %c0 = arith.constant 0 : index
    %c0_0 = arith.constant 0 : index
    %0 = vector.load %arg0[%c0, %c0_0] : memref<48x64xf32, #tpu.memory_space<vmem>>, vector<48x64xf32>
    %c480 = arith.constant 480 : index
    %c0_1 = arith.constant 0 : index
    %1 = vector.load %arg1[%c480, %c0_1] : memref<552x192xf32, #tpu.memory_space<vmem>>, vector<1x64xf32>
    %c481 = arith.constant 481 : index
    %c0_2 = arith.constant 0 : index
    %2 = vector.load %arg1[%c481, %c0_2] : memref<552x192xf32, #tpu.memory_space<vmem>>, vector<1x64xf32>
    %cst = arith.constant dense<0.000000e+00> : vector<48xf32>
    %3 = vector.multi_reduction <add>, %0, %cst [1] : vector<48x64xf32> to vector<48xf32>
    %4 = vector.shape_cast %3 : vector<48xf32> to vector<48x1xf32>
    %cst_3 = arith.constant 6.400000e+01 : f32
    %5 = vector.broadcast %cst_3 : f32 to vector<48x1xf32>
    %6 = arith.divf %4, %5 : vector<48x1xf32>
    %7 = arith.mulf %0, %0 : vector<48x64xf32>
    %cst_4 = arith.constant dense<0.000000e+00> : vector<48xf32>
    %8 = vector.multi_reduction <add>, %7, %cst_4 [1] : vector<48x64xf32> to vector<48xf32>
    %9 = vector.shape_cast %8 : vector<48xf32> to vector<48x1xf32>
    %cst_5 = arith.constant 6.400000e+01 : f32
    %10 = vector.broadcast %cst_5 : f32 to vector<48x1xf32>
    %11 = arith.divf %9, %10 : vector<48x1xf32>
    %12 = arith.mulf %6, %6 : vector<48x1xf32>
    %13 = arith.subf %11, %12 : vector<48x1xf32>
    %14 = vector.broadcast %6 : vector<48x1xf32> to vector<48x64xf32>
    %15 = arith.subf %0, %14 : vector<48x64xf32>
    %cst_6 = arith.constant 9.99999974E-6 : f32
    %16 = vector.broadcast %cst_6 : f32 to vector<48x1xf32>
    %17 = arith.addf %13, %16 : vector<48x1xf32>
    %18 = math.rsqrt %17 : vector<48x1xf32>
    %19 = vector.broadcast %18 : vector<48x1xf32> to vector<48x64xf32>
    %20 = arith.mulf %15, %19 : vector<48x64xf32>
    %21 = vector.broadcast %1 : vector<1x64xf32> to vector<48x64xf32>
    %22 = arith.mulf %20, %21 : vector<48x64xf32>
    %23 = vector.broadcast %2 : vector<1x64xf32> to vector<48x64xf32>
    %24 = arith.addf %22, %23 : vector<48x64xf32>
    %c0_7 = arith.constant 0 : index
    %c0_8 = arith.constant 0 : index
    %25 = vector.load %arg1[%c0_7, %c0_8] : memref<552x192xf32, #tpu.memory_space<vmem>>, vector<64x32xf32>
    %cst_9 = arith.constant dense<0.000000e+00> : vector<48x32xf32>
    %26 = tpu.matmul %24, %25, %cst_9 {dimension_numbers = #tpu.dot_dimension_numbers<[1], [0], [0], [1], [0, 0, 1, 1], [], []>} : vector<48x64xf32>, vector<64x32xf32>, vector<48x32xf32> -> vector<48x32xf32>
    %c482 = arith.constant 482 : index
    %c0_10 = arith.constant 0 : index
    %27 = vector.load %arg1[%c482, %c0_10] : memref<552x192xf32, #tpu.memory_space<vmem>>, vector<1x32xf32>
    %28 = vector.broadcast %27 : vector<1x32xf32> to vector<48x32xf32>
    %29 = arith.addf %26, %28 : vector<48x32xf32>
    %c483 = arith.constant 483 : index
    %c0_11 = arith.constant 0 : index
    %30 = vector.load %arg1[%c483, %c0_11] : memref<552x192xf32, #tpu.memory_space<vmem>>, vector<1x32xf32>
    %c484 = arith.constant 484 : index
    %c0_12 = arith.constant 0 : index
    %31 = vector.load %arg1[%c484, %c0_12] : memref<552x192xf32, #tpu.memory_space<vmem>>, vector<1x32xf32>
    %cst_13 = arith.constant dense<0.000000e+00> : vector<48xf32>
    %32 = vector.multi_reduction <add>, %29, %cst_13 [1] : vector<48x32xf32> to vector<48xf32>
    %33 = vector.shape_cast %32 : vector<48xf32> to vector<48x1xf32>
    %cst_14 = arith.constant 3.200000e+01 : f32
    %34 = vector.broadcast %cst_14 : f32 to vector<48x1xf32>
    %35 = arith.divf %33, %34 : vector<48x1xf32>
    %36 = arith.mulf %29, %29 : vector<48x32xf32>
    %cst_15 = arith.constant dense<0.000000e+00> : vector<48xf32>
    %37 = vector.multi_reduction <add>, %36, %cst_15 [1] : vector<48x32xf32> to vector<48xf32>
    %38 = vector.shape_cast %37 : vector<48xf32> to vector<48x1xf32>
    %cst_16 = arith.constant 3.200000e+01 : f32
    %39 = vector.broadcast %cst_16 : f32 to vector<48x1xf32>
    %40 = arith.divf %38, %39 : vector<48x1xf32>
    %41 = arith.mulf %35, %35 : vector<48x1xf32>
    %42 = arith.subf %40, %41 : vector<48x1xf32>
    %43 = vector.broadcast %35 : vector<48x1xf32> to vector<48x32xf32>
    %44 = arith.subf %29, %43 : vector<48x32xf32>
    %cst_17 = arith.constant 9.99999974E-6 : f32
    %45 = vector.broadcast %cst_17 : f32 to vector<48x1xf32>
    %46 = arith.addf %42, %45 : vector<48x1xf32>
    %47 = math.rsqrt %46 : vector<48x1xf32>
    %48 = vector.broadcast %47 : vector<48x1xf32> to vector<48x32xf32>
    %49 = arith.mulf %44, %48 : vector<48x32xf32>
    %50 = vector.broadcast %30 : vector<1x32xf32> to vector<48x32xf32>
    %51 = arith.mulf %49, %50 : vector<48x32xf32>
    %52 = vector.broadcast %31 : vector<1x32xf32> to vector<48x32xf32>
    %53 = arith.addf %51, %52 : vector<48x32xf32>
    %54 = tpu.iota {dimensions = array<i32: 0>} : vector<48x32xi32>
    %c0_i32 = arith.constant 0 : i32
    %55 = vector.broadcast %c0_i32 : i32 to vector<48x32xi32>
    %56 = arith.cmpi ne, %54, %55 : vector<48x32xi32>
    %c24_i32 = arith.constant 24 : i32
    %57 = vector.broadcast %c24_i32 : i32 to vector<48x32xi32>
    %58 = arith.cmpi ne, %54, %57 : vector<48x32xi32>
    %59 = arith.andi %56, %58 : vector<48x32xi1>
    %cst_18 = arith.constant 0.000000e+00 : f32
    %60 = vector.broadcast %cst_18 : f32 to vector<48x32xf32>
    %61 = arith.select %59, %53, %60 : vector<48x32xi1>, vector<48x32xf32>
    %c504 = arith.constant 504 : index
    %c0_19 = arith.constant 0 : index
    %62 = vector.load %arg1[%c504, %c0_19] : memref<552x192xf32, #tpu.memory_space<vmem>>, vector<48x32xf32>
    %63 = arith.addf %61, %62 : vector<48x32xf32>
    %64 = tpu.iota {dimensions = array<i32: 0>} : vector<48x48xi32>
    %65 = tpu.iota {dimensions = array<i32: 1>} : vector<48x48xi32>
    %c0_i32_20 = arith.constant 0 : i32
    %66 = vector.broadcast %c0_i32_20 : i32 to vector<48x48xi32>
    %67 = arith.cmpi sge, %64, %66 : vector<48x48xi32>
    %c24_i32_21 = arith.constant 24 : i32
    %68 = vector.broadcast %c24_i32_21 : i32 to vector<48x48xi32>
    %69 = arith.cmpi slt, %64, %68 : vector<48x48xi32>
    %70 = arith.andi %67, %69 : vector<48x48xi1>
    %c0_i32_22 = arith.constant 0 : i32
    %71 = vector.broadcast %c0_i32_22 : i32 to vector<48x48xi32>
    %72 = arith.cmpi sge, %65, %71 : vector<48x48xi32>
    %c17_i32 = arith.constant 17 : i32
    %73 = vector.broadcast %c17_i32 : i32 to vector<48x48xi32>
    %74 = arith.cmpi slt, %65, %73 : vector<48x48xi32>
    %75 = arith.andi %72, %74 : vector<48x48xi1>
    %76 = arith.andi %70, %75 : vector<48x48xi1>
    %c24_i32_23 = arith.constant 24 : i32
    %77 = vector.broadcast %c24_i32_23 : i32 to vector<48x48xi32>
    %78 = arith.cmpi sge, %64, %77 : vector<48x48xi32>
    %c48_i32 = arith.constant 48 : i32
    %79 = vector.broadcast %c48_i32 : i32 to vector<48x48xi32>
    %80 = arith.cmpi slt, %64, %79 : vector<48x48xi32>
    %81 = arith.andi %78, %80 : vector<48x48xi1>
    %c24_i32_24 = arith.constant 24 : i32
    %82 = vector.broadcast %c24_i32_24 : i32 to vector<48x48xi32>
    %83 = arith.cmpi sge, %65, %82 : vector<48x48xi32>
    %c41_i32 = arith.constant 41 : i32
    %84 = vector.broadcast %c41_i32 : i32 to vector<48x48xi32>
    %85 = arith.cmpi slt, %65, %84 : vector<48x48xi32>
    %86 = arith.andi %83, %85 : vector<48x48xi1>
    %87 = arith.andi %81, %86 : vector<48x48xi1>
    %88 = arith.ori %76, %87 : vector<48x48xi1>
    %c485 = arith.constant 485 : index
    %c0_25 = arith.constant 0 : index
    %89 = vector.load %arg1[%c485, %c0_25] : memref<552x192xf32, #tpu.memory_space<vmem>>, vector<1x32xf32>
    %c486 = arith.constant 486 : index
    %c0_26 = arith.constant 0 : index
    %90 = vector.load %arg1[%c486, %c0_26] : memref<552x192xf32, #tpu.memory_space<vmem>>, vector<1x32xf32>
    %cst_27 = arith.constant dense<0.000000e+00> : vector<48xf32>
    %91 = vector.multi_reduction <add>, %63, %cst_27 [1] : vector<48x32xf32> to vector<48xf32>
    %92 = vector.shape_cast %91 : vector<48xf32> to vector<48x1xf32>
    %cst_28 = arith.constant 3.200000e+01 : f32
    %93 = vector.broadcast %cst_28 : f32 to vector<48x1xf32>
    %94 = arith.divf %92, %93 : vector<48x1xf32>
    %95 = arith.mulf %63, %63 : vector<48x32xf32>
    %cst_29 = arith.constant dense<0.000000e+00> : vector<48xf32>
    %96 = vector.multi_reduction <add>, %95, %cst_29 [1] : vector<48x32xf32> to vector<48xf32>
    %97 = vector.shape_cast %96 : vector<48xf32> to vector<48x1xf32>
    %cst_30 = arith.constant 3.200000e+01 : f32
    %98 = vector.broadcast %cst_30 : f32 to vector<48x1xf32>
    %99 = arith.divf %97, %98 : vector<48x1xf32>
    %100 = arith.mulf %94, %94 : vector<48x1xf32>
    %101 = arith.subf %99, %100 : vector<48x1xf32>
    %102 = vector.broadcast %94 : vector<48x1xf32> to vector<48x32xf32>
    %103 = arith.subf %63, %102 : vector<48x32xf32>
    %cst_31 = arith.constant 9.99999974E-6 : f32
    %104 = vector.broadcast %cst_31 : f32 to vector<48x1xf32>
    %105 = arith.addf %101, %104 : vector<48x1xf32>
    %106 = math.rsqrt %105 : vector<48x1xf32>
    %107 = vector.broadcast %106 : vector<48x1xf32> to vector<48x32xf32>
    %108 = arith.mulf %103, %107 : vector<48x32xf32>
    %109 = vector.broadcast %89 : vector<1x32xf32> to vector<48x32xf32>
    %110 = arith.mulf %108, %109 : vector<48x32xf32>
    %111 = vector.broadcast %90 : vector<1x32xf32> to vector<48x32xf32>
    %112 = arith.addf %110, %111 : vector<48x32xf32>
    %c64 = arith.constant 64 : index
    %c0_32 = arith.constant 0 : index
    %113 = vector.load %arg1[%c64, %c0_32] : memref<552x192xf32, #tpu.memory_space<vmem>>, vector<32x192xf32>
    %cst_33 = arith.constant dense<0.000000e+00> : vector<48x192xf32>
    %114 = tpu.matmul %112, %113, %cst_33 {dimension_numbers = #tpu.dot_dimension_numbers<[1], [0], [0], [1], [0, 0, 1, 1], [], []>} : vector<48x32xf32>, vector<32x192xf32>, vector<48x192xf32> -> vector<48x192xf32>
    %c487 = arith.constant 487 : index
    %c0_34 = arith.constant 0 : index
    %115 = vector.load %arg1[%c487, %c0_34] : memref<552x192xf32, #tpu.memory_space<vmem>>, vector<1x192xf32>
    %116 = vector.broadcast %115 : vector<1x192xf32> to vector<48x192xf32>
    %117 = arith.addf %114, %116 : vector<48x192xf32>
    %c96 = arith.constant 96 : index
    %c0_35 = arith.constant 0 : index
    %118 = vector.load %arg1[%c96, %c0_35] : memref<552x192xf32, #tpu.memory_space<vmem>>, vector<64x32xf32>
    %c488 = arith.constant 488 : index
    %c0_36 = arith.constant 0 : index
    %119 = vector.load %arg1[%c488, %c0_36] : memref<552x192xf32, #tpu.memory_space<vmem>>, vector<1x32xf32>
    %120 = vector.extract_strided_slice %117 {offsets = [0, 0], sizes = [48, 32], strides = [1, 1]} : vector<48x192xf32> to vector<48x32xf32>
    %121 = vector.extract_strided_slice %117 {offsets = [0, 64], sizes = [48, 32], strides = [1, 1]} : vector<48x192xf32> to vector<48x32xf32>
    %122 = vector.extract_strided_slice %117 {offsets = [0, 128], sizes = [48, 32], strides = [1, 1]} : vector<48x192xf32> to vector<48x32xf32>
    %cst_37 = arith.constant dense<0.000000e+00> : vector<48x48xf32>
    %123 = tpu.matmul %120, %121, %cst_37 {dimension_numbers = #tpu.dot_dimension_numbers<[1], [1], [0], [0], [0, 0, 1, 0], [], []>} : vector<48x32xf32>, vector<48x32xf32>, vector<48x48xf32> -> vector<48x48xf32>
    %cst_38 = arith.constant 0.176776692 : f32
    %124 = vector.broadcast %cst_38 : f32 to vector<48x48xf32>
    %125 = arith.mulf %123, %124 : vector<48x48xf32>
    %cst_39 = arith.constant -1.000000e+30 : f32
    %126 = vector.broadcast %cst_39 : f32 to vector<48x48xf32>
    %127 = arith.select %88, %125, %126 : vector<48x48xi1>, vector<48x48xf32>
    %cst_40 = arith.constant dense<0xFF800000> : vector<48xf32>
    %128 = vector.multi_reduction <maximumf>, %127, %cst_40 [1] : vector<48x48xf32> to vector<48xf32>
    %129 = vector.shape_cast %128 : vector<48xf32> to vector<48x1xf32>
    %130 = vector.broadcast %129 : vector<48x1xf32> to vector<48x48xf32>
    %131 = arith.subf %127, %130 : vector<48x48xf32>
    %132 = math.exp %131 : vector<48x48xf32>
    %cst_41 = arith.constant dense<0.000000e+00> : vector<48xf32>
    %133 = vector.multi_reduction <add>, %132, %cst_41 [1] : vector<48x48xf32> to vector<48xf32>
    %134 = vector.shape_cast %133 : vector<48xf32> to vector<48x1xf32>
    %135 = tpu.reciprocal %134 {approx = true} : vector<48x1xf32> -> vector<48x1xf32>
    %136 = vector.broadcast %135 : vector<48x1xf32> to vector<48x48xf32>
    %137 = arith.mulf %132, %136 : vector<48x48xf32>
    %cst_42 = arith.constant dense<0.000000e+00> : vector<48x32xf32>
    %138 = tpu.matmul %137, %122, %cst_42 {dimension_numbers = #tpu.dot_dimension_numbers<[1], [0], [0], [1], [0, 0, 1, 1], [], []>} : vector<48x48xf32>, vector<48x32xf32>, vector<48x32xf32> -> vector<48x32xf32>
    %139 = vector.extract_strided_slice %118 {offsets = [0, 0], sizes = [32, 32], strides = [1, 1]} : vector<64x32xf32> to vector<32x32xf32>
    %cst_43 = arith.constant dense<0.000000e+00> : vector<48x32xf32>
    %140 = tpu.matmul %138, %139, %cst_43 {dimension_numbers = #tpu.dot_dimension_numbers<[1], [0], [0], [1], [0, 0, 1, 1], [], []>} : vector<48x32xf32>, vector<32x32xf32>, vector<48x32xf32> -> vector<48x32xf32>
    %141 = vector.broadcast %119 : vector<1x32xf32> to vector<48x32xf32>
    %142 = arith.addf %141, %140 : vector<48x32xf32>
    %143 = vector.extract_strided_slice %117 {offsets = [0, 32], sizes = [48, 32], strides = [1, 1]} : vector<48x192xf32> to vector<48x32xf32>
    %144 = vector.extract_strided_slice %117 {offsets = [0, 96], sizes = [48, 32], strides = [1, 1]} : vector<48x192xf32> to vector<48x32xf32>
    %145 = vector.extract_strided_slice %117 {offsets = [0, 160], sizes = [48, 32], strides = [1, 1]} : vector<48x192xf32> to vector<48x32xf32>
    %cst_44 = arith.constant dense<0.000000e+00> : vector<48x48xf32>
    %146 = tpu.matmul %143, %144, %cst_44 {dimension_numbers = #tpu.dot_dimension_numbers<[1], [1], [0], [0], [0, 0, 1, 0], [], []>} : vector<48x32xf32>, vector<48x32xf32>, vector<48x48xf32> -> vector<48x48xf32>
    %cst_45 = arith.constant 0.176776692 : f32
    %147 = vector.broadcast %cst_45 : f32 to vector<48x48xf32>
    %148 = arith.mulf %146, %147 : vector<48x48xf32>
    %cst_46 = arith.constant -1.000000e+30 : f32
    %149 = vector.broadcast %cst_46 : f32 to vector<48x48xf32>
    %150 = arith.select %88, %148, %149 : vector<48x48xi1>, vector<48x48xf32>
    %cst_47 = arith.constant dense<0xFF800000> : vector<48xf32>
    %151 = vector.multi_reduction <maximumf>, %150, %cst_47 [1] : vector<48x48xf32> to vector<48xf32>
    %152 = vector.shape_cast %151 : vector<48xf32> to vector<48x1xf32>
    %153 = vector.broadcast %152 : vector<48x1xf32> to vector<48x48xf32>
    %154 = arith.subf %150, %153 : vector<48x48xf32>
    %155 = math.exp %154 : vector<48x48xf32>
    %cst_48 = arith.constant dense<0.000000e+00> : vector<48xf32>
    %156 = vector.multi_reduction <add>, %155, %cst_48 [1] : vector<48x48xf32> to vector<48xf32>
    %157 = vector.shape_cast %156 : vector<48xf32> to vector<48x1xf32>
    %158 = tpu.reciprocal %157 {approx = true} : vector<48x1xf32> -> vector<48x1xf32>
    %159 = vector.broadcast %158 : vector<48x1xf32> to vector<48x48xf32>
    %160 = arith.mulf %155, %159 : vector<48x48xf32>
    %cst_49 = arith.constant dense<0.000000e+00> : vector<48x32xf32>
    %161 = tpu.matmul %160, %145, %cst_49 {dimension_numbers = #tpu.dot_dimension_numbers<[1], [0], [0], [1], [0, 0, 1, 1], [], []>} : vector<48x48xf32>, vector<48x32xf32>, vector<48x32xf32> -> vector<48x32xf32>
    %162 = vector.extract_strided_slice %118 {offsets = [32, 0], sizes = [32, 32], strides = [1, 1]} : vector<64x32xf32> to vector<32x32xf32>
    %cst_50 = arith.constant dense<0.000000e+00> : vector<48x32xf32>
    %163 = tpu.matmul %161, %162, %cst_50 {dimension_numbers = #tpu.dot_dimension_numbers<[1], [0], [0], [1], [0, 0, 1, 1], [], []>} : vector<48x32xf32>, vector<32x32xf32>, vector<48x32xf32> -> vector<48x32xf32>
    %164 = arith.addf %142, %163 : vector<48x32xf32>
    %165 = arith.addf %112, %164 : vector<48x32xf32>
    %166 = arith.addf %165, %63 : vector<48x32xf32>
    %c489 = arith.constant 489 : index
    %c0_51 = arith.constant 0 : index
    %167 = vector.load %arg1[%c489, %c0_51] : memref<552x192xf32, #tpu.memory_space<vmem>>, vector<1x32xf32>
    %c490 = arith.constant 490 : index
    %c0_52 = arith.constant 0 : index
    %168 = vector.load %arg1[%c490, %c0_52] : memref<552x192xf32, #tpu.memory_space<vmem>>, vector<1x32xf32>
    %cst_53 = arith.constant dense<0.000000e+00> : vector<48xf32>
    %169 = vector.multi_reduction <add>, %166, %cst_53 [1] : vector<48x32xf32> to vector<48xf32>
    %170 = vector.shape_cast %169 : vector<48xf32> to vector<48x1xf32>
    %cst_54 = arith.constant 3.200000e+01 : f32
    %171 = vector.broadcast %cst_54 : f32 to vector<48x1xf32>
    %172 = arith.divf %170, %171 : vector<48x1xf32>
    %173 = arith.mulf %166, %166 : vector<48x32xf32>
    %cst_55 = arith.constant dense<0.000000e+00> : vector<48xf32>
    %174 = vector.multi_reduction <add>, %173, %cst_55 [1] : vector<48x32xf32> to vector<48xf32>
    %175 = vector.shape_cast %174 : vector<48xf32> to vector<48x1xf32>
    %cst_56 = arith.constant 3.200000e+01 : f32
    %176 = vector.broadcast %cst_56 : f32 to vector<48x1xf32>
    %177 = arith.divf %175, %176 : vector<48x1xf32>
    %178 = arith.mulf %172, %172 : vector<48x1xf32>
    %179 = arith.subf %177, %178 : vector<48x1xf32>
    %180 = vector.broadcast %172 : vector<48x1xf32> to vector<48x32xf32>
    %181 = arith.subf %166, %180 : vector<48x32xf32>
    %cst_57 = arith.constant 9.99999974E-6 : f32
    %182 = vector.broadcast %cst_57 : f32 to vector<48x1xf32>
    %183 = arith.addf %179, %182 : vector<48x1xf32>
    %184 = math.rsqrt %183 : vector<48x1xf32>
    %185 = vector.broadcast %184 : vector<48x1xf32> to vector<48x32xf32>
    %186 = arith.mulf %181, %185 : vector<48x32xf32>
    %187 = vector.broadcast %167 : vector<1x32xf32> to vector<48x32xf32>
    %188 = arith.mulf %186, %187 : vector<48x32xf32>
    %189 = vector.broadcast %168 : vector<1x32xf32> to vector<48x32xf32>
    %190 = arith.addf %188, %189 : vector<48x32xf32>
    %c160 = arith.constant 160 : index
    %c0_58 = arith.constant 0 : index
    %191 = vector.load %arg1[%c160, %c0_58] : memref<552x192xf32, #tpu.memory_space<vmem>>, vector<32x64xf32>
    %cst_59 = arith.constant dense<0.000000e+00> : vector<48x64xf32>
    %192 = tpu.matmul %190, %191, %cst_59 {dimension_numbers = #tpu.dot_dimension_numbers<[1], [0], [0], [1], [0, 0, 1, 1], [], []>} : vector<48x32xf32>, vector<32x64xf32>, vector<48x64xf32> -> vector<48x64xf32>
    %c491 = arith.constant 491 : index
    %c0_60 = arith.constant 0 : index
    %193 = vector.load %arg1[%c491, %c0_60] : memref<552x192xf32, #tpu.memory_space<vmem>>, vector<1x64xf32>
    %194 = vector.broadcast %193 : vector<1x64xf32> to vector<48x64xf32>
    %195 = arith.addf %192, %194 : vector<48x64xf32>
    %cst_61 = arith.constant 5.000000e-01 : f32
    %196 = vector.broadcast %cst_61 : f32 to vector<48x64xf32>
    %197 = arith.mulf %196, %195 : vector<48x64xf32>
    %cst_62 = arith.constant 4.471500e-02 : f32
    %198 = vector.broadcast %cst_62 : f32 to vector<48x64xf32>
    %199 = arith.mulf %198, %195 : vector<48x64xf32>
    %200 = arith.mulf %199, %195 : vector<48x64xf32>
    %201 = arith.mulf %200, %195 : vector<48x64xf32>
    %202 = arith.addf %195, %201 : vector<48x64xf32>
    %cst_63 = arith.constant 0.797884583 : f32
    %203 = vector.broadcast %cst_63 : f32 to vector<48x64xf32>
    %204 = arith.mulf %203, %202 : vector<48x64xf32>
    %205 = math.tanh %204 : vector<48x64xf32>
    %cst_64 = arith.constant 1.000000e+00 : f32
    %206 = vector.broadcast %cst_64 : f32 to vector<48x64xf32>
    %207 = arith.addf %206, %205 : vector<48x64xf32>
    %208 = arith.mulf %197, %207 : vector<48x64xf32>
    %c192 = arith.constant 192 : index
    %c0_65 = arith.constant 0 : index
    %209 = vector.load %arg1[%c192, %c0_65] : memref<552x192xf32, #tpu.memory_space<vmem>>, vector<64x32xf32>
    %cst_66 = arith.constant dense<0.000000e+00> : vector<48x32xf32>
    %210 = tpu.matmul %208, %209, %cst_66 {dimension_numbers = #tpu.dot_dimension_numbers<[1], [0], [0], [1], [0, 0, 1, 1], [], []>} : vector<48x64xf32>, vector<64x32xf32>, vector<48x32xf32> -> vector<48x32xf32>
    %c492 = arith.constant 492 : index
    %c0_67 = arith.constant 0 : index
    %211 = vector.load %arg1[%c492, %c0_67] : memref<552x192xf32, #tpu.memory_space<vmem>>, vector<1x32xf32>
    %212 = vector.broadcast %211 : vector<1x32xf32> to vector<48x32xf32>
    %213 = arith.addf %210, %212 : vector<48x32xf32>
    %214 = arith.addf %213, %166 : vector<48x32xf32>
    %c493 = arith.constant 493 : index
    %c0_68 = arith.constant 0 : index
    %215 = vector.load %arg1[%c493, %c0_68] : memref<552x192xf32, #tpu.memory_space<vmem>>, vector<1x32xf32>
    %c494 = arith.constant 494 : index
    %c0_69 = arith.constant 0 : index
    %216 = vector.load %arg1[%c494, %c0_69] : memref<552x192xf32, #tpu.memory_space<vmem>>, vector<1x32xf32>
    %cst_70 = arith.constant dense<0.000000e+00> : vector<48xf32>
    %217 = vector.multi_reduction <add>, %214, %cst_70 [1] : vector<48x32xf32> to vector<48xf32>
    %218 = vector.shape_cast %217 : vector<48xf32> to vector<48x1xf32>
    %cst_71 = arith.constant 3.200000e+01 : f32
    %219 = vector.broadcast %cst_71 : f32 to vector<48x1xf32>
    %220 = arith.divf %218, %219 : vector<48x1xf32>
    %221 = arith.mulf %214, %214 : vector<48x32xf32>
    %cst_72 = arith.constant dense<0.000000e+00> : vector<48xf32>
    %222 = vector.multi_reduction <add>, %221, %cst_72 [1] : vector<48x32xf32> to vector<48xf32>
    %223 = vector.shape_cast %222 : vector<48xf32> to vector<48x1xf32>
    %cst_73 = arith.constant 3.200000e+01 : f32
    %224 = vector.broadcast %cst_73 : f32 to vector<48x1xf32>
    %225 = arith.divf %223, %224 : vector<48x1xf32>
    %226 = arith.mulf %220, %220 : vector<48x1xf32>
    %227 = arith.subf %225, %226 : vector<48x1xf32>
    %228 = vector.broadcast %220 : vector<48x1xf32> to vector<48x32xf32>
    %229 = arith.subf %214, %228 : vector<48x32xf32>
    %cst_74 = arith.constant 9.99999974E-6 : f32
    %230 = vector.broadcast %cst_74 : f32 to vector<48x1xf32>
    %231 = arith.addf %227, %230 : vector<48x1xf32>
    %232 = math.rsqrt %231 : vector<48x1xf32>
    %233 = vector.broadcast %232 : vector<48x1xf32> to vector<48x32xf32>
    %234 = arith.mulf %229, %233 : vector<48x32xf32>
    %235 = vector.broadcast %215 : vector<1x32xf32> to vector<48x32xf32>
    %236 = arith.mulf %234, %235 : vector<48x32xf32>
    %237 = vector.broadcast %216 : vector<1x32xf32> to vector<48x32xf32>
    %238 = arith.addf %236, %237 : vector<48x32xf32>
    %c256 = arith.constant 256 : index
    %c0_75 = arith.constant 0 : index
    %239 = vector.load %arg1[%c256, %c0_75] : memref<552x192xf32, #tpu.memory_space<vmem>>, vector<32x192xf32>
    %cst_76 = arith.constant dense<0.000000e+00> : vector<48x192xf32>
    %240 = tpu.matmul %238, %239, %cst_76 {dimension_numbers = #tpu.dot_dimension_numbers<[1], [0], [0], [1], [0, 0, 1, 1], [], []>} : vector<48x32xf32>, vector<32x192xf32>, vector<48x192xf32> -> vector<48x192xf32>
    %c495 = arith.constant 495 : index
    %c0_77 = arith.constant 0 : index
    %241 = vector.load %arg1[%c495, %c0_77] : memref<552x192xf32, #tpu.memory_space<vmem>>, vector<1x192xf32>
    %242 = vector.broadcast %241 : vector<1x192xf32> to vector<48x192xf32>
    %243 = arith.addf %240, %242 : vector<48x192xf32>
    %c288 = arith.constant 288 : index
    %c0_78 = arith.constant 0 : index
    %244 = vector.load %arg1[%c288, %c0_78] : memref<552x192xf32, #tpu.memory_space<vmem>>, vector<64x32xf32>
    %c496 = arith.constant 496 : index
    %c0_79 = arith.constant 0 : index
    %245 = vector.load %arg1[%c496, %c0_79] : memref<552x192xf32, #tpu.memory_space<vmem>>, vector<1x32xf32>
    %246 = vector.extract_strided_slice %243 {offsets = [0, 0], sizes = [48, 32], strides = [1, 1]} : vector<48x192xf32> to vector<48x32xf32>
    %247 = vector.extract_strided_slice %243 {offsets = [0, 64], sizes = [48, 32], strides = [1, 1]} : vector<48x192xf32> to vector<48x32xf32>
    %248 = vector.extract_strided_slice %243 {offsets = [0, 128], sizes = [48, 32], strides = [1, 1]} : vector<48x192xf32> to vector<48x32xf32>
    %cst_80 = arith.constant dense<0.000000e+00> : vector<48x48xf32>
    %249 = tpu.matmul %246, %247, %cst_80 {dimension_numbers = #tpu.dot_dimension_numbers<[1], [1], [0], [0], [0, 0, 1, 0], [], []>} : vector<48x32xf32>, vector<48x32xf32>, vector<48x48xf32> -> vector<48x48xf32>
    %cst_81 = arith.constant 0.176776692 : f32
    %250 = vector.broadcast %cst_81 : f32 to vector<48x48xf32>
    %251 = arith.mulf %249, %250 : vector<48x48xf32>
    %cst_82 = arith.constant -1.000000e+30 : f32
    %252 = vector.broadcast %cst_82 : f32 to vector<48x48xf32>
    %253 = arith.select %88, %251, %252 : vector<48x48xi1>, vector<48x48xf32>
    %cst_83 = arith.constant dense<0xFF800000> : vector<48xf32>
    %254 = vector.multi_reduction <maximumf>, %253, %cst_83 [1] : vector<48x48xf32> to vector<48xf32>
    %255 = vector.shape_cast %254 : vector<48xf32> to vector<48x1xf32>
    %256 = vector.broadcast %255 : vector<48x1xf32> to vector<48x48xf32>
    %257 = arith.subf %253, %256 : vector<48x48xf32>
    %258 = math.exp %257 : vector<48x48xf32>
    %cst_84 = arith.constant dense<0.000000e+00> : vector<48xf32>
    %259 = vector.multi_reduction <add>, %258, %cst_84 [1] : vector<48x48xf32> to vector<48xf32>
    %260 = vector.shape_cast %259 : vector<48xf32> to vector<48x1xf32>
    %261 = tpu.reciprocal %260 {approx = true} : vector<48x1xf32> -> vector<48x1xf32>
    %262 = vector.broadcast %261 : vector<48x1xf32> to vector<48x48xf32>
    %263 = arith.mulf %258, %262 : vector<48x48xf32>
    %cst_85 = arith.constant dense<0.000000e+00> : vector<48x32xf32>
    %264 = tpu.matmul %263, %248, %cst_85 {dimension_numbers = #tpu.dot_dimension_numbers<[1], [0], [0], [1], [0, 0, 1, 1], [], []>} : vector<48x48xf32>, vector<48x32xf32>, vector<48x32xf32> -> vector<48x32xf32>
    %265 = vector.extract_strided_slice %244 {offsets = [0, 0], sizes = [32, 32], strides = [1, 1]} : vector<64x32xf32> to vector<32x32xf32>
    %cst_86 = arith.constant dense<0.000000e+00> : vector<48x32xf32>
    %266 = tpu.matmul %264, %265, %cst_86 {dimension_numbers = #tpu.dot_dimension_numbers<[1], [0], [0], [1], [0, 0, 1, 1], [], []>} : vector<48x32xf32>, vector<32x32xf32>, vector<48x32xf32> -> vector<48x32xf32>
    %267 = vector.broadcast %245 : vector<1x32xf32> to vector<48x32xf32>
    %268 = arith.addf %267, %266 : vector<48x32xf32>
    %269 = vector.extract_strided_slice %243 {offsets = [0, 32], sizes = [48, 32], strides = [1, 1]} : vector<48x192xf32> to vector<48x32xf32>
    %270 = vector.extract_strided_slice %243 {offsets = [0, 96], sizes = [48, 32], strides = [1, 1]} : vector<48x192xf32> to vector<48x32xf32>
    %271 = vector.extract_strided_slice %243 {offsets = [0, 160], sizes = [48, 32], strides = [1, 1]} : vector<48x192xf32> to vector<48x32xf32>
    %cst_87 = arith.constant dense<0.000000e+00> : vector<48x48xf32>
    %272 = tpu.matmul %269, %270, %cst_87 {dimension_numbers = #tpu.dot_dimension_numbers<[1], [1], [0], [0], [0, 0, 1, 0], [], []>} : vector<48x32xf32>, vector<48x32xf32>, vector<48x48xf32> -> vector<48x48xf32>
    %cst_88 = arith.constant 0.176776692 : f32
    %273 = vector.broadcast %cst_88 : f32 to vector<48x48xf32>
    %274 = arith.mulf %272, %273 : vector<48x48xf32>
    %cst_89 = arith.constant -1.000000e+30 : f32
    %275 = vector.broadcast %cst_89 : f32 to vector<48x48xf32>
    %276 = arith.select %88, %274, %275 : vector<48x48xi1>, vector<48x48xf32>
    %cst_90 = arith.constant dense<0xFF800000> : vector<48xf32>
    %277 = vector.multi_reduction <maximumf>, %276, %cst_90 [1] : vector<48x48xf32> to vector<48xf32>
    %278 = vector.shape_cast %277 : vector<48xf32> to vector<48x1xf32>
    %279 = vector.broadcast %278 : vector<48x1xf32> to vector<48x48xf32>
    %280 = arith.subf %276, %279 : vector<48x48xf32>
    %281 = math.exp %280 : vector<48x48xf32>
    %cst_91 = arith.constant dense<0.000000e+00> : vector<48xf32>
    %282 = vector.multi_reduction <add>, %281, %cst_91 [1] : vector<48x48xf32> to vector<48xf32>
    %283 = vector.shape_cast %282 : vector<48xf32> to vector<48x1xf32>
    %284 = tpu.reciprocal %283 {approx = true} : vector<48x1xf32> -> vector<48x1xf32>
    %285 = vector.broadcast %284 : vector<48x1xf32> to vector<48x48xf32>
    %286 = arith.mulf %281, %285 : vector<48x48xf32>
    %cst_92 = arith.constant dense<0.000000e+00> : vector<48x32xf32>
    %287 = tpu.matmul %286, %271, %cst_92 {dimension_numbers = #tpu.dot_dimension_numbers<[1], [0], [0], [1], [0, 0, 1, 1], [], []>} : vector<48x48xf32>, vector<48x32xf32>, vector<48x32xf32> -> vector<48x32xf32>
    %288 = vector.extract_strided_slice %244 {offsets = [32, 0], sizes = [32, 32], strides = [1, 1]} : vector<64x32xf32> to vector<32x32xf32>
    %cst_93 = arith.constant dense<0.000000e+00> : vector<48x32xf32>
    %289 = tpu.matmul %287, %288, %cst_93 {dimension_numbers = #tpu.dot_dimension_numbers<[1], [0], [0], [1], [0, 0, 1, 1], [], []>} : vector<48x32xf32>, vector<32x32xf32>, vector<48x32xf32> -> vector<48x32xf32>
    %290 = arith.addf %268, %289 : vector<48x32xf32>
    %291 = arith.addf %238, %290 : vector<48x32xf32>
    %292 = arith.addf %291, %214 : vector<48x32xf32>
    %c497 = arith.constant 497 : index
    %c0_94 = arith.constant 0 : index
    %293 = vector.load %arg1[%c497, %c0_94] : memref<552x192xf32, #tpu.memory_space<vmem>>, vector<1x32xf32>
    %c498 = arith.constant 498 : index
    %c0_95 = arith.constant 0 : index
    %294 = vector.load %arg1[%c498, %c0_95] : memref<552x192xf32, #tpu.memory_space<vmem>>, vector<1x32xf32>
    %cst_96 = arith.constant dense<0.000000e+00> : vector<48xf32>
    %295 = vector.multi_reduction <add>, %292, %cst_96 [1] : vector<48x32xf32> to vector<48xf32>
    %296 = vector.shape_cast %295 : vector<48xf32> to vector<48x1xf32>
    %cst_97 = arith.constant 3.200000e+01 : f32
    %297 = vector.broadcast %cst_97 : f32 to vector<48x1xf32>
    %298 = arith.divf %296, %297 : vector<48x1xf32>
    %299 = arith.mulf %292, %292 : vector<48x32xf32>
    %cst_98 = arith.constant dense<0.000000e+00> : vector<48xf32>
    %300 = vector.multi_reduction <add>, %299, %cst_98 [1] : vector<48x32xf32> to vector<48xf32>
    %301 = vector.shape_cast %300 : vector<48xf32> to vector<48x1xf32>
    %cst_99 = arith.constant 3.200000e+01 : f32
    %302 = vector.broadcast %cst_99 : f32 to vector<48x1xf32>
    %303 = arith.divf %301, %302 : vector<48x1xf32>
    %304 = arith.mulf %298, %298 : vector<48x1xf32>
    %305 = arith.subf %303, %304 : vector<48x1xf32>
    %306 = vector.broadcast %298 : vector<48x1xf32> to vector<48x32xf32>
    %307 = arith.subf %292, %306 : vector<48x32xf32>
    %cst_100 = arith.constant 9.99999974E-6 : f32
    %308 = vector.broadcast %cst_100 : f32 to vector<48x1xf32>
    %309 = arith.addf %305, %308 : vector<48x1xf32>
    %310 = math.rsqrt %309 : vector<48x1xf32>
    %311 = vector.broadcast %310 : vector<48x1xf32> to vector<48x32xf32>
    %312 = arith.mulf %307, %311 : vector<48x32xf32>
    %313 = vector.broadcast %293 : vector<1x32xf32> to vector<48x32xf32>
    %314 = arith.mulf %312, %313 : vector<48x32xf32>
    %315 = vector.broadcast %294 : vector<1x32xf32> to vector<48x32xf32>
    %316 = arith.addf %314, %315 : vector<48x32xf32>
    %c352 = arith.constant 352 : index
    %c0_101 = arith.constant 0 : index
    %317 = vector.load %arg1[%c352, %c0_101] : memref<552x192xf32, #tpu.memory_space<vmem>>, vector<32x64xf32>
    %cst_102 = arith.constant dense<0.000000e+00> : vector<48x64xf32>
    %318 = tpu.matmul %316, %317, %cst_102 {dimension_numbers = #tpu.dot_dimension_numbers<[1], [0], [0], [1], [0, 0, 1, 1], [], []>} : vector<48x32xf32>, vector<32x64xf32>, vector<48x64xf32> -> vector<48x64xf32>
    %c499 = arith.constant 499 : index
    %c0_103 = arith.constant 0 : index
    %319 = vector.load %arg1[%c499, %c0_103] : memref<552x192xf32, #tpu.memory_space<vmem>>, vector<1x64xf32>
    %320 = vector.broadcast %319 : vector<1x64xf32> to vector<48x64xf32>
    %321 = arith.addf %318, %320 : vector<48x64xf32>
    %cst_104 = arith.constant 5.000000e-01 : f32
    %322 = vector.broadcast %cst_104 : f32 to vector<48x64xf32>
    %323 = arith.mulf %322, %321 : vector<48x64xf32>
    %cst_105 = arith.constant 4.471500e-02 : f32
    %324 = vector.broadcast %cst_105 : f32 to vector<48x64xf32>
    %325 = arith.mulf %324, %321 : vector<48x64xf32>
    %326 = arith.mulf %325, %321 : vector<48x64xf32>
    %327 = arith.mulf %326, %321 : vector<48x64xf32>
    %328 = arith.addf %321, %327 : vector<48x64xf32>
    %cst_106 = arith.constant 0.797884583 : f32
    %329 = vector.broadcast %cst_106 : f32 to vector<48x64xf32>
    %330 = arith.mulf %329, %328 : vector<48x64xf32>
    %331 = math.tanh %330 : vector<48x64xf32>
    %cst_107 = arith.constant 1.000000e+00 : f32
    %332 = vector.broadcast %cst_107 : f32 to vector<48x64xf32>
    %333 = arith.addf %332, %331 : vector<48x64xf32>
    %334 = arith.mulf %323, %333 : vector<48x64xf32>
    %c384 = arith.constant 384 : index
    %c0_108 = arith.constant 0 : index
    %335 = vector.load %arg1[%c384, %c0_108] : memref<552x192xf32, #tpu.memory_space<vmem>>, vector<64x32xf32>
    %cst_109 = arith.constant dense<0.000000e+00> : vector<48x32xf32>
    %336 = tpu.matmul %334, %335, %cst_109 {dimension_numbers = #tpu.dot_dimension_numbers<[1], [0], [0], [1], [0, 0, 1, 1], [], []>} : vector<48x64xf32>, vector<64x32xf32>, vector<48x32xf32> -> vector<48x32xf32>
    %c500 = arith.constant 500 : index
    %c0_110 = arith.constant 0 : index
    %337 = vector.load %arg1[%c500, %c0_110] : memref<552x192xf32, #tpu.memory_space<vmem>>, vector<1x32xf32>
    %338 = vector.broadcast %337 : vector<1x32xf32> to vector<48x32xf32>
    %339 = arith.addf %336, %338 : vector<48x32xf32>
    %340 = arith.addf %339, %292 : vector<48x32xf32>
    %c501 = arith.constant 501 : index
    %c0_111 = arith.constant 0 : index
    %341 = vector.load %arg1[%c501, %c0_111] : memref<552x192xf32, #tpu.memory_space<vmem>>, vector<1x32xf32>
    %c502 = arith.constant 502 : index
    %c0_112 = arith.constant 0 : index
    %342 = vector.load %arg1[%c502, %c0_112] : memref<552x192xf32, #tpu.memory_space<vmem>>, vector<1x32xf32>
    %cst_113 = arith.constant dense<0.000000e+00> : vector<48xf32>
    %343 = vector.multi_reduction <add>, %340, %cst_113 [1] : vector<48x32xf32> to vector<48xf32>
    %344 = vector.shape_cast %343 : vector<48xf32> to vector<48x1xf32>
    %cst_114 = arith.constant 3.200000e+01 : f32
    %345 = vector.broadcast %cst_114 : f32 to vector<48x1xf32>
    %346 = arith.divf %344, %345 : vector<48x1xf32>
    %347 = arith.mulf %340, %340 : vector<48x32xf32>
    %cst_115 = arith.constant dense<0.000000e+00> : vector<48xf32>
    %348 = vector.multi_reduction <add>, %347, %cst_115 [1] : vector<48x32xf32> to vector<48xf32>
    %349 = vector.shape_cast %348 : vector<48xf32> to vector<48x1xf32>
    %cst_116 = arith.constant 3.200000e+01 : f32
    %350 = vector.broadcast %cst_116 : f32 to vector<48x1xf32>
    %351 = arith.divf %349, %350 : vector<48x1xf32>
    %352 = arith.mulf %346, %346 : vector<48x1xf32>
    %353 = arith.subf %351, %352 : vector<48x1xf32>
    %354 = vector.broadcast %346 : vector<48x1xf32> to vector<48x32xf32>
    %355 = arith.subf %340, %354 : vector<48x32xf32>
    %cst_117 = arith.constant 9.99999974E-6 : f32
    %356 = vector.broadcast %cst_117 : f32 to vector<48x1xf32>
    %357 = arith.addf %353, %356 : vector<48x1xf32>
    %358 = math.rsqrt %357 : vector<48x1xf32>
    %359 = vector.broadcast %358 : vector<48x1xf32> to vector<48x32xf32>
    %360 = arith.mulf %355, %359 : vector<48x32xf32>
    %361 = vector.broadcast %341 : vector<1x32xf32> to vector<48x32xf32>
    %362 = arith.mulf %360, %361 : vector<48x32xf32>
    %363 = vector.broadcast %342 : vector<1x32xf32> to vector<48x32xf32>
    %364 = arith.addf %362, %363 : vector<48x32xf32>
    %c448 = arith.constant 448 : index
    %c0_118 = arith.constant 0 : index
    %365 = vector.load %arg1[%c448, %c0_118] : memref<552x192xf32, #tpu.memory_space<vmem>>, vector<32x128xf32>
    %cst_119 = arith.constant dense<0.000000e+00> : vector<48x128xf32>
    %366 = tpu.matmul %364, %365, %cst_119 {dimension_numbers = #tpu.dot_dimension_numbers<[1], [0], [0], [1], [0, 0, 1, 1], [], []>} : vector<48x32xf32>, vector<32x128xf32>, vector<48x128xf32> -> vector<48x128xf32>
    %c503 = arith.constant 503 : index
    %c0_120 = arith.constant 0 : index
    %367 = vector.load %arg1[%c503, %c0_120] : memref<552x192xf32, #tpu.memory_space<vmem>>, vector<1x128xf32>
    %368 = vector.broadcast %367 : vector<1x128xf32> to vector<48x128xf32>
    %369 = arith.addf %366, %368 : vector<48x128xf32>
    %c0_121 = arith.constant 0 : index
    %c0_122 = arith.constant 0 : index
    %370 = vector.load %arg2[%c0_121, %c0_122] : memref<48x128xf32, #tpu.memory_space<vmem>>, vector<48x128xf32>
    tpu.vector_store %arg2[%c0_121, %c0_122], %369 {strides = array<i32>} : memref<48x128xf32, #tpu.memory_space<vmem>>, vector<48x128xf32>,
    return
  }
}

</mosaic_0001>

<llo_original>
// kernel: vit_forward.1
$region0: #{vit_forward.1}
  #allocation0 [shape = 'u32[]', space=smem, size = 0x4, offset = 0x4, fixed_abs, tag = 'smem constant byte address 0x4 - core index']
  #allocation1 [shape = 'u32[72,128]{1,0:T(1,128)}', space=vmem, size = 0x9000, scoped, tag = 'internal scratch']
  %s0 = inlined_call_operand.vmem [shape: f32[48,64], index: 0, kind: input, shape index: {}]
  %s1 = inlined_call_operand.vmem [shape: f32[552,192], index: 1, kind: input, shape index: {}]
  %s2 = inlined_call_operand.vmem [shape: f32[48,128], index: 2, kind: output, shape index: {}]
  %s3 = sld [smem:[#allocation0]]
  $region18: #{vit_forward.1} parent=0
    _
  %s5 = ssub.s32 1, %s3
  %s6 = scalar_select 0, %s5, %s3
  // Predicated region
  $region2: #{vit_forward.1} parent=0 // pred_check
    _
  $region3: #{vit_forward.1} parent=0 // pred_check_branch
    %8 = sbr.rel (0) target = $region5
  $region4: #{vit_forward.1} parent=0 // pred_region
    _
  $region5: #{vit_forward.1} parent=0 // pred_fallthru
    _
  // Predicated region
  $region6: #{vit_forward.1} parent=0 // pred_check
    _
  $region7: #{vit_forward.1} parent=0 // pred_check_branch
    %10 = sbr.rel (0) target = $region9
  $region8: #{vit_forward.1} parent=0 // pred_region
    _
  $region9: #{vit_forward.1} parent=0 // pred_fallthru
    _
  %v11 = vld [vmem:[%s0] sm:$0xff]
  %v12 = vld [vmem:[%s0 + $0x8] sm:$0xff]
  %v13 = vld [vmem:[%s0 + $0x10] sm:$0xff]
  %v14 = vld [vmem:[%s0 + $0x18] sm:$0xff]
  %v15 = vld [vmem:[%s0 + $0x20] sm:$0xff]
  %v16 = vld [vmem:[%s0 + $0x28] sm:$0xff]
  %v17 = vld [vmem:[%s1 + $0x3c0] ss:$0 sm:$0xff]
  %v18 = vld [vmem:[%s1 + $0x3c1] ss:$0 sm:$0xff]
  %vm19 = vcmask 523264
  %v20 = vsel %vm19, %v11, 0.0
  %21 = vadd.xlane.f32.xlu0 %v20
  %v22 = vpop.xlane.xlu0 %21
  %v23 = vsel %vm19, %v12, 0.0
  %24 = vadd.xlane.f32.xlu0 %v23
  %v25 = vpop.xlane.xlu0 %24
  %v26 = vsel %vm19, %v13, 0.0
  %27 = vadd.xlane.f32.xlu0 %v26
  %v28 = vpop.xlane.xlu0 %27
  %v29 = vsel %vm19, %v14, 0.0
  %30 = vadd.xlane.f32.xlu0 %v29
  %v31 = vpop.xlane.xlu0 %30
  %v32 = vsel %vm19, %v15, 0.0
  %33 = vadd.xlane.f32.xlu0 %v32
  %v34 = vpop.xlane.xlu0 %33
  %v35 = vsel %vm19, %v16, 0.0
  %36 = vadd.xlane.f32.xlu0 %v35
  %v37 = vpop.xlane.xlu0 %36
  %v38 = vrcp.pop 64.0
  %v39 = vmul.f32 64.0, %v38
  %v40 = vsub.f32 1.0, %v39
  %v41 = vmul.f32 %v38, %v40
  %v42 = vadd.f32 %v38, %v41
  %vm43 = vweird.f32 %v38
  %v44 = vsel %vm43, %v38, %v42
  %v45 = vmul.f32 %v22, %v44
  %v46 = vmul.f32 %v25, %v44
  %v47 = vmul.f32 %v28, %v44
  %v48 = vmul.f32 %v31, %v44
  %v49 = vmul.f32 %v34, %v44
  %v50 = vmul.f32 %v37, %v44
  %v51 = vmul.f32 %v11, %v11
  %v52 = vmul.f32 %v12, %v12
  %v53 = vmul.f32 %v13, %v13
  %v54 = vmul.f32 %v14, %v14
  %v55 = vmul.f32 %v15, %v15
  %v56 = vmul.f32 %v16, %v16
  %v57 = vsel %vm19, %v51, 0.0
  %58 = vadd.xlane.f32.xlu0 %v57
  %v59 = vpop.xlane.xlu0 %58
  %v60 = vsel %vm19, %v52, 0.0
  %61 = vadd.xlane.f32.xlu0 %v60
  %v62 = vpop.xlane.xlu0 %61
  %v63 = vsel %vm19, %v53, 0.0
  %64 = vadd.xlane.f32.xlu0 %v63
  %v65 = vpop.xlane.xlu0 %64
  %v66 = vsel %vm19, %v54, 0.0
  %67 = vadd.xlane.f32.xlu0 %v66
  %v68 = vpop.xlane.xlu0 %67
  %v69 = vsel %vm19, %v55, 0.0
  %70 = vadd.xlane.f32.xlu0 %v69
  %v71 = vpop.xlane.xlu0 %70
  %v72 = vsel %vm19, %v56, 0.0
  %73 = vadd.xlane.f32.xlu0 %v72
  %v74 = vpop.xlane.xlu0 %73
  %v75 = vmul.f32 %v59, %v44
  %v76 = vmul.f32 %v62, %v44
  %v77 = vmul.f32 %v65, %v44
  %v78 = vmul.f32 %v68, %v44
  %v79 = vmul.f32 %v71, %v44
  %v80 = vmul.f32 %v74, %v44
  %v81 = vmul.f32 %v45, %v45
  %v82 = vmul.f32 %v46, %v46
  %v83 = vmul.f32 %v47, %v47
  %v84 = vmul.f32 %v48, %v48
  %v85 = vmul.f32 %v49, %v49
  %v86 = vmul.f32 %v50, %v50
  %v87 = vsub.f32 %v75, %v81
  %v88 = vsub.f32 %v76, %v82
  %v89 = vsub.f32 %v77, %v83
  %v90 = vsub.f32 %v78, %v84
  %v91 = vsub.f32 %v79, %v85
  %v92 = vsub.f32 %v80, %v86
  %v93 = vsub.f32 %v11, %v45
  %v94 = vsub.f32 %v12, %v46
  %v95 = vsub.f32 %v13, %v47
  %v96 = vsub.f32 %v14, %v48
  %v97 = vsub.f32 %v15, %v49
  %v98 = vsub.f32 %v16, %v50
  %v99 = vadd.f32 %v87, 1e-05
  %v100 = vadd.f32 %v88, 1e-05
  %v101 = vadd.f32 %v89, 1e-05
  %v102 = vadd.f32 %v90, 1e-05
  %v103 = vadd.f32 %v91, 1e-05
  %v104 = vadd.f32 %v92, 1e-05
  %v105 = vrsqrt.pop %v99
  %v106 = vmul.f32 %v105, %v99
  %v107 = vmul.f32 %v106, %v105
  %v108 = vmul.f32 0.5, %v107
  %v109 = vsub.f32 1.5, %v108
  %v110 = vmul.f32 %v105, %v109
  %vm111 = vweird.f32 %v99
  %vm112 = vweird.f32 %v105
  %vm113 = vmor %vm111, %vm112
  %v114 = vsel %vm113, %v105, %v110
  %v115 = vrsqrt.pop %v100
  %v116 = vmul.f32 %v115, %v100
  %v117 = vmul.f32 %v116, %v115
  %v118 = vmul.f32 0.5, %v117
  %v119 = vsub.f32 1.5, %v118
  %v120 = vmul.f32 %v115, %v119
  %vm121 = vweird.f32 %v100
  %vm122 = vweird.f32 %v115
  %vm123 = vmor %vm121, %vm122
  %v124 = vsel %vm123, %v115, %v120
  %v125 = vrsqrt.pop %v101
  %v126 = vmul.f32 %v125, %v101
  %v127 = vmul.f32 %v126, %v125
  %v128 = vmul.f32 0.5, %v127
  %v129 = vsub.f32 1.5, %v128
  %v130 = vmul.f32 %v125, %v129
  %vm131 = vweird.f32 %v101
  %vm132 = vweird.f32 %v125
  %vm133 = vmor %vm131, %vm132
  %v134 = vsel %vm133, %v125, %v130
  %v135 = vrsqrt.pop %v102
  %v136 = vmul.f32 %v135, %v102
  %v137 = vmul.f32 %v136, %v135
  %v138 = vmul.f32 0.5, %v137
  %v139 = vsub.f32 1.5, %v138
  %v140 = vmul.f32 %v135, %v139
  %vm141 = vweird.f32 %v102
  %vm142 = vweird.f32 %v135
  %vm143 = vmor %vm141, %vm142
  %v144 = vsel %vm143, %v135, %v140
  %v145 = vrsqrt.pop %v103
  %v146 = vmul.f32 %v145, %v103
  %v147 = vmul.f32 %v146, %v145
  %v148 = vmul.f32 0.5, %v147
  %v149 = vsub.f32 1.5, %v148
  %v150 = vmul.f32 %v145, %v149
  %vm151 = vweird.f32 %v103
  %vm152 = vweird.f32 %v145
  %vm153 = vmor %vm151, %vm152
  %v154 = vsel %vm153, %v145, %v150
  %v155 = vrsqrt.pop %v104
  %v156 = vmul.f32 %v155, %v104
  %v157 = vmul.f32 %v156, %v155
  %v158 = vmul.f32 0.5, %v157
  %v159 = vsub.f32 1.5, %v158
  %v160 = vmul.f32 %v155, %v159
  %vm161 = vweird.f32 %v104
  %vm162 = vweird.f32 %v155
  %vm163 = vmor %vm161, %vm162
  %v164 = vsel %vm163, %v155, %v160
  %v165 = vmul.f32 %v93, %v114
  %v166 = vmul.f32 %v94, %v124
  %v167 = vmul.f32 %v95, %v134
  %v168 = vmul.f32 %v96, %v144
  %v169 = vmul.f32 %v97, %v154
  %v170 = vmul.f32 %v98, %v164
  %v171 = vmul.f32 %v165, %v17
  %v172 = vmul.f32 %v166, %v17
  %v173 = vmul.f32 %v167, %v17
  %v174 = vmul.f32 %v168, %v17
  %v175 = vmul.f32 %v169, %v17
  %v176 = vmul.f32 %v170, %v17
  %v177 = vadd.f32 %v171, %v18
  %v178 = vadd.f32 %v172, %v18
  %v179 = vadd.f32 %v173, %v18
  %v180 = vadd.f32 %v174, %v18
  %v181 = vadd.f32 %v175, %v18
  %v182 = vadd.f32 %v176, %v18
  %v183 = vld [vmem:[%s1] sm:$0xff]
  %v184 = vld [vmem:[%s1 + $0x10] sm:$0xff]
  %v185 = vld [vmem:[%s1 + $0x20] sm:$0xff]
  %v186 = vld [vmem:[%s1 + $0x30] sm:$0xff]
  %v187 = vld [vmem:[%s1 + $0x40] sm:$0xff]
  %v188 = vld [vmem:[%s1 + $0x50] sm:$0xff]
  %v189 = vld [vmem:[%s1 + $0x60] sm:$0xff]
  %v190 = vld [vmem:[%s1 + $0x70] sm:$0xff]
  %v191 = vld [vmem:[%s1 + $0x3c2] ss:$0 sm:$0xff]
  %v193 = vsel %vm19, %v177, 0
  %v196 = vsel %vm19, %v178, 0
  %v199 = vsel %vm19, %v179, 0
  %v202 = vsel %vm19, %v180, 0
  %v205 = vsel %vm19, %v181, 0
  %v208 = vsel %vm19, %v182, 0
  %210 = vmatpush.msra.mxu0 0.0
  %211 = vmatpush.msra.mxu0 0.0
  %212 = vmatpush.msra.mxu0 0.0
  %213 = vmatpush.msra.mxu0 0.0
  %214 = vmatpush.msra.mxu0 0.0
  %215 = vmatpush.msra.mxu0 0.0
  %216 = vmatpush.msra.mxu0 0.0
  %217 = vmatpush.msra.mxu0 0.0
  %218 = vmatpush.msra.mxu0 %v190
  %219 = vmatpush.msra.mxu0 %v189
  %220 = vmatpush.msra.mxu0 %v188
  %221 = vmatpush.msra.mxu0 %v187
  %222 = vmatpush.msra.mxu0 %v186
  %223 = vmatpush.msra.mxu0 %v185
  %224 = vmatpush.msra.mxu0 %v184
  %225 = vmatpush.msra.mxu0 %v183
  %226 = vmatmul.f32.gmra.mxu0 %v193
  %v227 = vpop.f32.mrf.mxu0
  %v228 = vadd.f32 %v191, %v227
  %229 = vmatmul.f32.gmra.mxu0 %v196
  %v230 = vpop.f32.mrf.mxu0
  %v231 = vadd.f32 %v191, %v230
  %232 = vmatmul.f32.gmra.mxu0 %v199
  %v233 = vpop.f32.mrf.mxu0
  %v234 = vadd.f32 %v191, %v233
  %235 = vmatmul.f32.gmra.mxu0 %v202
  %v236 = vpop.f32.mrf.mxu0
  %v237 = vadd.f32 %v191, %v236
  %238 = vmatmul.f32.gmra.mxu0 %v205
  %v239 = vpop.f32.mrf.mxu0
  %v240 = vadd.f32 %v191, %v239
  %241 = vmatmul.f32.gmra.mxu0 %v208
  %v242 = vpop.f32.mrf.mxu0
  %v243 = vadd.f32 %v191, %v242
  %244 = vdwg.mxu0
  %v245 = vld [vmem:[%s1 + $0x3c3] ss:$0 sm:$0xff]
  %v246 = vld [vmem:[%s1 + $0x3c4] ss:$0 sm:$0xff]
  %vm247 = vcmask 261120
  %v248 = vsel %vm247, %v228, 0.0
  %249 = vadd.xlane.f32.xlu0 %v248
  %v250 = vpop.xlane.xlu0 %249
  %v251 = vsel %vm247, %v231, 0.0
  %252 = vadd.xlane.f32.xlu0 %v251
  %v253 = vpop.xlane.xlu0 %252
  %v254 = vsel %vm247, %v234, 0.0
  %255 = vadd.xlane.f32.xlu0 %v254
  %v256 = vpop.xlane.xlu0 %255
  %v257 = vsel %vm247, %v237, 0.0
  %258 = vadd.xlane.f32.xlu0 %v257
  %v259 = vpop.xlane.xlu0 %258
  %v260 = vsel %vm247, %v240, 0.0
  %261 = vadd.xlane.f32.xlu0 %v260
  %v262 = vpop.xlane.xlu0 %261
  %v263 = vsel %vm247, %v243, 0.0
  %264 = vadd.xlane.f32.xlu0 %v263
  %v265 = vpop.xlane.xlu0 %264
  %v266 = vrcp.pop 32.0
  %v267 = vmul.f32 32.0, %v266
  %v268 = vsub.f32 1.0, %v267
  %v269 = vmul.f32 %v266, %v268
  %v270 = vadd.f32 %v266, %v269
  %vm271 = vweird.f32 %v266
  %v272 = vsel %vm271, %v266, %v270
  %v273 = vmul.f32 %v250, %v272
  %v274 = vmul.f32 %v253, %v272
  %v275 = vmul.f32 %v256, %v272
  %v276 = vmul.f32 %v259, %v272
  %v277 = vmul.f32 %v262, %v272
  %v278 = vmul.f32 %v265, %v272
  %v279 = vmul.f32 %v228, %v228
  %v280 = vmul.f32 %v231, %v231
  %v281 = vmul.f32 %v234, %v234
  %v282 = vmul.f32 %v237, %v237
  %v283 = vmul.f32 %v240, %v240
  %v284 = vmul.f32 %v243, %v243
  %v285 = vsel %vm247, %v279, 0.0
  %286 = vadd.xlane.f32.xlu0 %v285
  %v287 = vpop.xlane.xlu0 %286
  %v288 = vsel %vm247, %v280, 0.0
  %289 = vadd.xlane.f32.xlu0 %v288
  %v290 = vpop.xlane.xlu0 %289
  %v291 = vsel %vm247, %v281, 0.0
  %292 = vadd.xlane.f32.xlu0 %v291
  %v293 = vpop.xlane.xlu0 %292
  %v294 = vsel %vm247, %v282, 0.0
  %295 = vadd.xlane.f32.xlu0 %v294
  %v296 = vpop.xlane.xlu0 %295
  %v297 = vsel %vm247, %v283, 0.0
  %298 = vadd.xlane.f32.xlu0 %v297
  %v299 = vpop.xlane.xlu0 %298
  %v300 = vsel %vm247, %v284, 0.0
  %301 = vadd.xlane.f32.xlu0 %v300
  %v302 = vpop.xlane.xlu0 %301
  %v303 = vmul.f32 %v287, %v272
  %v304 = vmul.f32 %v290, %v272
  %v305 = vmul.f32 %v293, %v272
  %v306 = vmul.f32 %v296, %v272
  %v307 = vmul.f32 %v299, %v272
  %v308 = vmul.f32 %v302, %v272
  %v309 = vmul.f32 %v273, %v273
  %v310 = vmul.f32 %v274, %v274
  %v311 = vmul.f32 %v275, %v275
  %v312 = vmul.f32 %v276, %v276
  %v313 = vmul.f32 %v277, %v277
  %v314 = vmul.f32 %v278, %v278
  %v315 = vsub.f32 %v303, %v309
  %v316 = vsub.f32 %v304, %v310
  %v317 = vsub.f32 %v305, %v311
  %v318 = vsub.f32 %v306, %v312
  %v319 = vsub.f32 %v307, %v313
  %v320 = vsub.f32 %v308, %v314
  %v321 = vsub.f32 %v228, %v273
  %v322 = vsub.f32 %v231, %v274
  %v323 = vsub.f32 %v234, %v275
  %v324 = vsub.f32 %v237, %v276
  %v325 = vsub.f32 %v240, %v277
  %v326 = vsub.f32 %v243, %v278
  %v327 = vadd.f32 %v315, 1e-05
  %v328 = vadd.f32 %v316, 1e-05
  %v329 = vadd.f32 %v317, 1e-05
  %v330 = vadd.f32 %v318, 1e-05
  %v331 = vadd.f32 %v319, 1e-05
  %v332 = vadd.f32 %v320, 1e-05
  %v333 = vrsqrt.pop %v327
  %v334 = vmul.f32 %v333, %v327
  %v335 = vmul.f32 %v334, %v333
  %v336 = vmul.f32 0.5, %v335
  %v337 = vsub.f32 1.5, %v336
  %v338 = vmul.f32 %v333, %v337
  %vm339 = vweird.f32 %v327
  %vm340 = vweird.f32 %v333
  %vm341 = vmor %vm339, %vm340
  %v342 = vsel %vm341, %v333, %v338
  %v343 = vrsqrt.pop %v328
  %v344 = vmul.f32 %v343, %v328
  %v345 = vmul.f32 %v344, %v343
  %v346 = vmul.f32 0.5, %v345
  %v347 = vsub.f32 1.5, %v346
  %v348 = vmul.f32 %v343, %v347
  %vm349 = vweird.f32 %v328
  %vm350 = vweird.f32 %v343
  %vm351 = vmor %vm349, %vm350
  %v352 = vsel %vm351, %v343, %v348
  %v353 = vrsqrt.pop %v329
  %v354 = vmul.f32 %v353, %v329
  %v355 = vmul.f32 %v354, %v353
  %v356 = vmul.f32 0.5, %v355
  %v357 = vsub.f32 1.5, %v356
  %v358 = vmul.f32 %v353, %v357
  %vm359 = vweird.f32 %v329
  %vm360 = vweird.f32 %v353
  %vm361 = vmor %vm359, %vm360
  %v362 = vsel %vm361, %v353, %v358
  %v363 = vrsqrt.pop %v330
  %v364 = vmul.f32 %v363, %v330
  %v365 = vmul.f32 %v364, %v363
  %v366 = vmul.f32 0.5, %v365
  %v367 = vsub.f32 1.5, %v366
  %v368 = vmul.f32 %v363, %v367
  %vm369 = vweird.f32 %v330
  %vm370 = vweird.f32 %v363
  %vm371 = vmor %vm369, %vm370
  %v372 = vsel %vm371, %v363, %v368
  %v373 = vrsqrt.pop %v331
  %v374 = vmul.f32 %v373, %v331
  %v375 = vmul.f32 %v374, %v373
  %v376 = vmul.f32 0.5, %v375
  %v377 = vsub.f32 1.5, %v376
  %v378 = vmul.f32 %v373, %v377
  %vm379 = vweird.f32 %v331
  %vm380 = vweird.f32 %v373
  %vm381 = vmor %vm379, %vm380
  %v382 = vsel %vm381, %v373, %v378
  %v383 = vrsqrt.pop %v332
  %v384 = vmul.f32 %v383, %v332
  %v385 = vmul.f32 %v384, %v383
  %v386 = vmul.f32 0.5, %v385
  %v387 = vsub.f32 1.5, %v386
  %v388 = vmul.f32 %v383, %v387
  %vm389 = vweird.f32 %v332
  %vm390 = vweird.f32 %v383
  %vm391 = vmor %vm389, %vm390
  %v392 = vsel %vm391, %v383, %v388
  %v393 = vmul.f32 %v321, %v342
  %v394 = vmul.f32 %v322, %v352
  %v395 = vmul.f32 %v323, %v362
  %v396 = vmul.f32 %v324, %v372
  %v397 = vmul.f32 %v325, %v382
  %v398 = vmul.f32 %v326, %v392
  %v399 = vmul.f32 %v393, %v245
  %v400 = vmul.f32 %v394, %v245
  %v401 = vmul.f32 %v395, %v245
  %v402 = vmul.f32 %v396, %v245
  %v403 = vmul.f32 %v397, %v245
  %v404 = vmul.f32 %v398, %v245
  %v405 = vadd.f32 %v399, %v246
  %v406 = vadd.f32 %v400, %v246
  %v407 = vadd.f32 %v401, %v246
  %v408 = vadd.f32 %v402, %v246
  %v409 = vadd.f32 %v403, %v246
  %v410 = vadd.f32 %v404, %v246
  %v411 = vlaneseq
  %v412 = vshrl.u32 %v411, 7
  %v413 = vadd.s32 %v412, 8
  %v414 = vadd.s32 %v412, 16
  %v415 = vadd.s32 %v412, 24
  %v416 = vadd.s32 %v412, 32
  %v417 = vadd.s32 %v412, 40
  %vm418 = vcmp.ne.s32.totalorder %v412, 0
  %vm419 = vcmp.ne.s32.totalorder %v413, 0
  %vm420 = vcmp.ne.s32.totalorder %v414, 0
  %vm421 = vcmp.ne.s32.totalorder %v415, 0
  %vm422 = vcmp.ne.s32.totalorder %v416, 0
  %vm423 = vcmp.ne.s32.totalorder %v417, 0
  %vm424 = vcmp.ne.s32.totalorder %v412, 24
  %vm425 = vcmp.ne.s32.totalorder %v413, 24
  %vm426 = vcmp.ne.s32.totalorder %v414, 24
  %vm427 = vcmp.ne.s32.totalorder %v415, 24
  %vm428 = vcmp.ne.s32.totalorder %v416, 24
  %vm429 = vcmp.ne.s32.totalorder %v417, 24
  %vm430 = vmand %vm418, %vm424
  %vm431 = vmand %vm419, %vm425
  %vm432 = vmand %vm420, %vm426
  %vm433 = vmand %vm421, %vm427
  %vm434 = vmand %vm422, %vm428
  %vm435 = vmand %vm423, %vm429
  %v436 = vsel %vm430, %v405, 0.0
  %v437 = vsel %vm431, %v406, 0.0
  %v438 = vsel %vm432, %v407, 0.0
  %v439 = vsel %vm433, %v408, 0.0
  %v440 = vsel %vm434, %v409, 0.0
  %v441 = vsel %vm435, %v410, 0.0
  %v442 = vld [vmem:[%s1 + $0x3f0] sm:$0xff]
  %v443 = vld [vmem:[%s1 + $0x400] sm:$0xff]
  %v444 = vld [vmem:[%s1 + $0x410] sm:$0xff]
  %v445 = vld [vmem:[%s1 + $0x420] sm:$0xff]
  %v446 = vld [vmem:[%s1 + $0x430] sm:$0xff]
  %v447 = vld [vmem:[%s1 + $0x440] sm:$0xff]
  %v448 = vadd.f32 %v436, %v442
  %v449 = vadd.f32 %v437, %v443
  %v450 = vadd.f32 %v438, %v444
  %v451 = vadd.f32 %v439, %v445
  %v452 = vadd.f32 %v440, %v446
  %v453 = vadd.f32 %v441, %v447
  %v454 = vlaneseq
  %v455 = vand.u32 %v454, 127
  %vm456 = vcmp.ge.s32.totalorder %v412, 0
  %vm457 = vcmp.ge.s32.totalorder %v413, 0
  %vm458 = vcmp.ge.s32.totalorder %v414, 0
  %vm459 = vcmp.ge.s32.totalorder %v415, 0
  %vm460 = vcmp.ge.s32.totalorder %v416, 0
  %vm461 = vcmp.ge.s32.totalorder %v417, 0
  %vm462 = vcmp.lt.s32.totalorder %v412, 24
  %vm463 = vcmp.lt.s32.totalorder %v413, 24
  %vm464 = vcmp.lt.s32.totalorder %v414, 24
  %vm465 = vcmp.lt.s32.totalorder %v415, 24
  %vm466 = vcmp.lt.s32.totalorder %v416, 24
  %vm467 = vcmp.lt.s32.totalorder %v417, 24
  %vm468 = vmand %vm456, %vm462
  %vm469 = vmand %vm457, %vm463
  %vm470 = vmand %vm458, %vm464
  %vm471 = vmand %vm459, %vm465
  %vm472 = vmand %vm460, %vm466
  %vm473 = vmand %vm461, %vm467
  %vm474 = vcmp.ge.s32.totalorder %v455, 0
  %vm475 = vcmp.lt.s32.totalorder %v455, 17
  %vm476 = vmand %vm474, %vm475
  %vm477 = vmand %vm468, %vm476
  %vm478 = vmand %vm469, %vm476
  %vm479 = vmand %vm470, %vm476
  %vm480 = vmand %vm471, %vm476
  %vm481 = vmand %vm472, %vm476
  %vm482 = vmand %vm473, %vm476
  %vm483 = vcmp.ge.s32.totalorder %v412, 24
  %vm484 = vcmp.ge.s32.totalorder %v413, 24
  %vm485 = vcmp.ge.s32.totalorder %v414, 24
  %vm486 = vcmp.ge.s32.totalorder %v415, 24
  %vm487 = vcmp.ge.s32.totalorder %v416, 24
  %vm488 = vcmp.ge.s32.totalorder %v417, 24
  %vm489 = vcmp.lt.s32.totalorder %v412, 48
  %vm490 = vcmp.lt.s32.totalorder %v413, 48
  %vm491 = vcmp.lt.s32.totalorder %v414, 48
  %vm492 = vcmp.lt.s32.totalorder %v415, 48
  %vm493 = vcmp.lt.s32.totalorder %v416, 48
  %vm494 = vcmp.lt.s32.totalorder %v417, 48
  %vm495 = vmand %vm483, %vm489
  %vm496 = vmand %vm484, %vm490
  %vm497 = vmand %vm485, %vm491
  %vm498 = vmand %vm486, %vm492
  %vm499 = vmand %vm487, %vm493
  %vm500 = vmand %vm488, %vm494
  %vm501 = vcmp.ge.s32.totalorder %v455, 24
  %vm502 = vcmp.lt.s32.totalorder %v455, 41
  %vm503 = vmand %vm501, %vm502
  %vm504 = vmand %vm495, %vm503
  %vm505 = vmand %vm496, %vm503
  %vm506 = vmand %vm497, %vm503
  %vm507 = vmand %vm498, %vm503
  %vm508 = vmand %vm499, %vm503
  %vm509 = vmand %vm500, %vm503
  %vm510 = vmor %vm477, %vm504
  %vm511 = vmor %vm478, %vm505
  %vm512 = vmor %vm479, %vm506
  %vm513 = vmor %vm480, %vm507
  %vm514 = vmor %vm481, %vm508
  %vm515 = vmor %vm482, %vm509
  %v516 = vld [vmem:[%s1 + $0x3c5] ss:$0 sm:$0xff]
  %v517 = vld [vmem:[%s1 + $0x3c6] ss:$0 sm:$0xff]
  %v518 = vsel %vm247, %v448, 0.0
  %519 = vadd.xlane.f32.xlu0 %v518
  %v520 = vpop.xlane.xlu0 %519
  %v521 = vsel %vm247, %v449, 0.0
  %522 = vadd.xlane.f32.xlu0 %v521
  %v523 = vpop.xlane.xlu0 %522
  %v524 = vsel %vm247, %v450, 0.0
  %525 = vadd.xlane.f32.xlu0 %v524
  %v526 = vpop.xlane.xlu0 %525
  %v527 = vsel %vm247, %v451, 0.0
  %528 = vadd.xlane.f32.xlu0 %v527
  %v529 = vpop.xlane.xlu0 %528
  %v530 = vsel %vm247, %v452, 0.0
  %531 = vadd.xlane.f32.xlu0 %v530
  %v532 = vpop.xlane.xlu0 %531
  %v533 = vsel %vm247, %v453, 0.0
  %534 = vadd.xlane.f32.xlu0 %v533
  %v535 = vpop.xlane.xlu0 %534
  %v536 = vmul.f32 %v520, %v272
  %v537 = vmul.f32 %v523, %v272
  %v538 = vmul.f32 %v526, %v272
  %v539 = vmul.f32 %v529, %v272
  %v540 = vmul.f32 %v532, %v272
  %v541 = vmul.f32 %v535, %v272
  %v542 = vmul.f32 %v448, %v448
  %v543 = vmul.f32 %v449, %v449
  %v544 = vmul.f32 %v450, %v450
  %v545 = vmul.f32 %v451, %v451
  %v546 = vmul.f32 %v452, %v452
  %v547 = vmul.f32 %v453, %v453
  %v548 = vsel %vm247, %v542, 0.0
  %549 = vadd.xlane.f32.xlu0 %v548
  %v550 = vpop.xlane.xlu0 %549
  %v551 = vsel %vm247, %v543, 0.0
  %552 = vadd.xlane.f32.xlu0 %v551
  %v553 = vpop.xlane.xlu0 %552
  %v554 = vsel %vm247, %v544, 0.0
  %555 = vadd.xlane.f32.xlu0 %v554
  %v556 = vpop.xlane.xlu0 %555
  %v557 = vsel %vm247, %v545, 0.0
  %558 = vadd.xlane.f32.xlu0 %v557
  %v559 = vpop.xlane.xlu0 %558
  %v560 = vsel %vm247, %v546, 0.0
  %561 = vadd.xlane.f32.xlu0 %v560
  %v562 = vpop.xlane.xlu0 %561
  %v563 = vsel %vm247, %v547, 0.0
  %564 = vadd.xlane.f32.xlu0 %v563
  %v565 = vpop.xlane.xlu0 %564
  %v566 = vmul.f32 %v550, %v272
  %v567 = vmul.f32 %v553, %v272
  %v568 = vmul.f32 %v556, %v272
  %v569 = vmul.f32 %v559, %v272
  %v570 = vmul.f32 %v562, %v272
  %v571 = vmul.f32 %v565, %v272
  %v572 = vmul.f32 %v536, %v536
  %v573 = vmul.f32 %v537, %v537
  %v574 = vmul.f32 %v538, %v538
  %v575 = vmul.f32 %v539, %v539
  %v576 = vmul.f32 %v540, %v540
  %v577 = vmul.f32 %v541, %v541
  %v578 = vsub.f32 %v566, %v572
  %v579 = vsub.f32 %v567, %v573
  %v580 = vsub.f32 %v568, %v574
  %v581 = vsub.f32 %v569, %v575
  %v582 = vsub.f32 %v570, %v576
  %v583 = vsub.f32 %v571, %v577
  %v584 = vsub.f32 %v448, %v536
  %v585 = vsub.f32 %v449, %v537
  %v586 = vsub.f32 %v450, %v538
  %v587 = vsub.f32 %v451, %v539
  %v588 = vsub.f32 %v452, %v540
  %v589 = vsub.f32 %v453, %v541
  %v590 = vadd.f32 %v578, 1e-05
  %v591 = vadd.f32 %v579, 1e-05
  %v592 = vadd.f32 %v580, 1e-05
  %v593 = vadd.f32 %v581, 1e-05
  %v594 = vadd.f32 %v582, 1e-05
  %v595 = vadd.f32 %v583, 1e-05
  %v596 = vrsqrt.pop %v590
  %v597 = vmul.f32 %v596, %v590
  %v598 = vmul.f32 %v597, %v596
  %v599 = vmul.f32 0.5, %v598
  %v600 = vsub.f32 1.5, %v599
  %v601 = vmul.f32 %v596, %v600
  %vm602 = vweird.f32 %v590
  %vm603 = vweird.f32 %v596
  %vm604 = vmor %vm602, %vm603
  %v605 = vsel %vm604, %v596, %v601
  %v606 = vrsqrt.pop %v591
  %v607 = vmul.f32 %v606, %v591
  %v608 = vmul.f32 %v607, %v606
  %v609 = vmul.f32 0.5, %v608
  %v610 = vsub.f32 1.5, %v609
  %v611 = vmul.f32 %v606, %v610
  %vm612 = vweird.f32 %v591
  %vm613 = vweird.f32 %v606
  %vm614 = vmor %vm612, %vm613
  %v615 = vsel %vm614, %v606, %v611
  %v616 = vrsqrt.pop %v592
  %v617 = vmul.f32 %v616, %v592
  %v618 = vmul.f32 %v617, %v616
  %v619 = vmul.f32 0.5, %v618
  %v620 = vsub.f32 1.5, %v619
  %v621 = vmul.f32 %v616, %v620
  %vm622 = vweird.f32 %v592
  %vm623 = vweird.f32 %v616
  %vm624 = vmor %vm622, %vm623
  %v625 = vsel %vm624, %v616, %v621
  %v626 = vrsqrt.pop %v593
  %v627 = vmul.f32 %v626, %v593
  %v628 = vmul.f32 %v627, %v626
  %v629 = vmul.f32 0.5, %v628
  %v630 = vsub.f32 1.5, %v629
  %v631 = vmul.f32 %v626, %v630
  %vm632 = vweird.f32 %v593
  %vm633 = vweird.f32 %v626
  %vm634 = vmor %vm632, %vm633
  %v635 = vsel %vm634, %v626, %v631
  %v636 = vrsqrt.pop %v594
  %v637 = vmul.f32 %v636, %v594
  %v638 = vmul.f32 %v637, %v636
  %v639 = vmul.f32 0.5, %v638
  %v640 = vsub.f32 1.5, %v639
  %v641 = vmul.f32 %v636, %v640
  %vm642 = vweird.f32 %v594
  %vm643 = vweird.f32 %v636
  %vm644 = vmor %vm642, %vm643
  %v645 = vsel %vm644, %v636, %v641
  %v646 = vrsqrt.pop %v595
  %v647 = vmul.f32 %v646, %v595
  %v648 = vmul.f32 %v647, %v646
  %v649 = vmul.f32 0.5, %v648
  %v650 = vsub.f32 1.5, %v649
  %v651 = vmul.f32 %v646, %v650
  %vm652 = vweird.f32 %v595
  %vm653 = vweird.f32 %v646
  %vm654 = vmor %vm652, %vm653
  %v655 = vsel %vm654, %v646, %v651
  %v656 = vmul.f32 %v584, %v605
  %v657 = vmul.f32 %v585, %v615
  %v658 = vmul.f32 %v586, %v625
  %v659 = vmul.f32 %v587, %v635
  %v660 = vmul.f32 %v588, %v645
  %v661 = vmul.f32 %v589, %v655
  %v662 = vmul.f32 %v656, %v516
  %v663 = vmul.f32 %v657, %v516
  %v664 = vmul.f32 %v658, %v516
  %v665 = vmul.f32 %v659, %v516
  %v666 = vmul.f32 %v660, %v516
  %v667 = vmul.f32 %v661, %v516
  %v668 = vadd.f32 %v662, %v517
  %v669 = vadd.f32 %v663, %v517
  %v670 = vadd.f32 %v664, %v517
  %v671 = vadd.f32 %v665, %v517
  %v672 = vadd.f32 %v666, %v517
  %v673 = vadd.f32 %v667, %v517
  %v674 = vld [vmem:[%s1 + $0x80] sm:$0xff]
  %v675 = vld [vmem:[%s1 + $0x88] sm:$0xff]
  %v676 = vld [vmem:[%s1 + $0x90] sm:$0xff]
  %v677 = vld [vmem:[%s1 + $0x98] sm:$0xff]
  %v678 = vld [vmem:[%s1 + $0xa0] sm:$0xff]
  %v679 = vld [vmem:[%s1 + $0xa8] sm:$0xff]
  %v680 = vld [vmem:[%s1 + $0xb0] sm:$0xff]
  %v681 = vld [vmem:[%s1 + $0xb8] sm:$0xff]
  %s682 = scalar_lea.vmem %s1, 967
  %v683 = vld [vmem:[%s682] ss:$8 sm:$0x3]
  %v685 = vperm.slane %v683, 0
  %v686 = vperm.slane %v683, 1
  %v690 = vsel %vm247, %v668, 0
  %v693 = vsel %vm247, %v669, 0
  %v696 = vsel %vm247, %v670, 0
  %v699 = vsel %vm247, %v671, 0
  %v702 = vsel %vm247, %v672, 0
  %v705 = vsel %vm247, %v673, 0
  %707 = vmatpush.msra.mxu0 0.0
  %708 = vmatpush.msra.mxu0 0.0
  %709 = vmatpush.msra.mxu0 0.0
  %710 = vmatpush.msra.mxu0 0.0
  %711 = vmatpush.msra.mxu0 0.0
  %712 = vmatpush.msra.mxu0 0.0
  %713 = vmatpush.msra.mxu0 0.0
  %714 = vmatpush.msra.mxu0 0.0
  %715 = vmatpush.msra.mxu0 0.0
  %716 = vmatpush.msra.mxu0 0.0
  %717 = vmatpush.msra.mxu0 0.0
  %718 = vmatpush.msra.mxu0 0.0
  %719 = vmatpush.msra.mxu0 %v680
  %720 = vmatpush.msra.mxu0 %v678
  %721 = vmatpush.msra.mxu0 %v676
  %722 = vmatpush.msra.mxu0 %v674
  %723 = vmatmul.f32.gmra.mxu0 %v690
  %v724 = vpop.f32.mrf.mxu0
  %v725 = vadd.f32 %v685, %v724
  %726 = vmatmul.f32.gmra.mxu0 %v693
  %v727 = vpop.f32.mrf.mxu0
  %v728 = vadd.f32 %v685, %v727
  %729 = vmatmul.f32.gmra.mxu0 %v696
  %v730 = vpop.f32.mrf.mxu0
  %v731 = vadd.f32 %v685, %v730
  %732 = vmatmul.f32.gmra.mxu0 %v699
  %v733 = vpop.f32.mrf.mxu0
  %v734 = vadd.f32 %v685, %v733
  %735 = vmatmul.f32.gmra.mxu0 %v702
  %v736 = vpop.f32.mrf.mxu0
  %v737 = vadd.f32 %v685, %v736
  %738 = vmatmul.f32.gmra.mxu0 %v705
  %v739 = vpop.f32.mrf.mxu0
  %v740 = vadd.f32 %v685, %v739
  %741 = vdwg.mxu0
  %742 = vmatpush.msra.mxu0 0.0
  %743 = vmatpush.msra.mxu0 0.0
  %744 = vmatpush.msra.mxu0 0.0
  %745 = vmatpush.msra.mxu0 0.0
  %746 = vmatpush.msra.mxu0 0.0
  %747 = vmatpush.msra.mxu0 0.0
  %748 = vmatpush.msra.mxu0 0.0
  %749 = vmatpush.msra.mxu0 0.0
  %750 = vmatpush.msra.mxu0 0.0
  %751 = vmatpush.msra.mxu0 0.0
  %752 = vmatpush.msra.mxu0 0.0
  %753 = vmatpush.msra.mxu0 0.0
  %754 = vmatpush.msra.mxu0 %v681
  %755 = vmatpush.msra.mxu0 %v679
  %756 = vmatpush.msra.mxu0 %v677
  %757 = vmatpush.msra.mxu0 %v675
  %758 = vmatmul.f32.gmra.mxu0 %v690
  %v759 = vpop.f32.mrf.mxu0
  %v760 = vadd.f32 %v686, %v759
  %761 = vmatmul.f32.gmra.mxu0 %v693
  %v762 = vpop.f32.mrf.mxu0
  %v763 = vadd.f32 %v686, %v762
  %764 = vmatmul.f32.gmra.mxu0 %v696
  %v765 = vpop.f32.mrf.mxu0
  %v766 = vadd.f32 %v686, %v765
  %767 = vmatmul.f32.gmra.mxu0 %v699
  %v768 = vpop.f32.mrf.mxu0
  %v769 = vadd.f32 %v686, %v768
  %770 = vmatmul.f32.gmra.mxu0 %v702
  %v771 = vpop.f32.mrf.mxu0
  %v772 = vadd.f32 %v686, %v771
  %773 = vmatmul.f32.gmra.mxu0 %v705
  %v774 = vpop.f32.mrf.mxu0
  %v775 = vadd.f32 %v686, %v774
  %776 = vdwg.mxu0
  %v777 = vld [vmem:[%s1 + $0xc0] sm:$0xff]
  %v778 = vld [vmem:[%s1 + $0xd0] sm:$0xff]
  %v779 = vld [vmem:[%s1 + $0xe0] sm:$0xff]
  %v780 = vld [vmem:[%s1 + $0xf0] sm:$0xff]
  %v781 = vld [vmem:[%s1 + $0x100] sm:$0xff]
  %v782 = vld [vmem:[%s1 + $0x110] sm:$0xff]
  %v783 = vld [vmem:[%s1 + $0x120] sm:$0xff]
  %v784 = vld [vmem:[%s1 + $0x130] sm:$0xff]
  %v785 = vld [vmem:[%s1 + $0x3d0] ss:$0 sm:$0xff]
  %792 = vrot.lane.b32.xlu0 %v725, 64
  %v793 = vpop.permute.xlu0 %792
  %794 = vrot.lane.b32.xlu0 %v728, 64
  %v795 = vpop.permute.xlu0 %794
  %796 = vrot.lane.b32.xlu0 %v731, 64
  %v797 = vpop.permute.xlu0 %796
  %798 = vrot.lane.b32.xlu0 %v734, 64
  %v799 = vpop.permute.xlu0 %798
  %800 = vrot.lane.b32.xlu0 %v737, 64
  %v801 = vpop.permute.xlu0 %800
  %802 = vrot.lane.b32.xlu0 %v740, 64
  %v803 = vpop.permute.xlu0 %802
  %v804 = vsel %vm247, %v725, 0
  %v806 = vsel %vm247, %v728, 0
  %v808 = vsel %vm247, %v731, 0
  %v810 = vsel %vm247, %v734, 0
  %v812 = vsel %vm247, %v737, 0
  %v814 = vsel %vm247, %v740, 0
  %v816 = vsel %vm247, %v793, 0
  %v818 = vsel %vm247, %v795, 0
  %v820 = vsel %vm247, %v797, 0
  %v822 = vsel %vm247, %v799, 0
  %v824 = vsel %vm247, %v801, 0
  %v826 = vsel %vm247, %v803, 0
  %828 = vmatpush.xpose.msra.mxu0 0.0
  %829 = vmatpush.xpose.msra.mxu0 0.0
  %830 = vmatpush.xpose.msra.mxu0 0.0
  %831 = vmatpush.xpose.msra.mxu0 0.0
  %832 = vmatpush.xpose.msra.mxu0 0.0
  %833 = vmatpush.xpose.msra.mxu0 0.0
  %834 = vmatpush.xpose.msra.mxu0 0.0
  %835 = vmatpush.xpose.msra.mxu0 0.0
  %836 = vmatpush.xpose.msra.mxu0 0.0
  %837 = vmatpush.xpose.msra.mxu0 0.0
  %838 = vmatpush.xpose.msra.mxu0 %v826
  %839 = vmatpush.xpose.msra.mxu0 %v824
  %840 = vmatpush.xpose.msra.mxu0 %v822
  %841 = vmatpush.xpose.msra.mxu0 %v820
  %842 = vmatpush.xpose.msra.mxu0 %v818
  %843 = vmatpush.xpose.msra.mxu0 %v816
  %844 = vmatmul.f32.gmra.mxu0 %v804
  %v845 = vpop.f32.mrf.mxu0
  %v846 = vadd.f32 0.0, %v845
  %847 = vmatmul.f32.gmra.mxu0 %v806
  %v848 = vpop.f32.mrf.mxu0
  %v849 = vadd.f32 0.0, %v848
  %850 = vmatmul.f32.gmra.mxu0 %v808
  %v851 = vpop.f32.mrf.mxu0
  %v852 = vadd.f32 0.0, %v851
  %853 = vmatmul.f32.gmra.mxu0 %v810
  %v854 = vpop.f32.mrf.mxu0
  %v855 = vadd.f32 0.0, %v854
  %856 = vmatmul.f32.gmra.mxu0 %v812
  %v857 = vpop.f32.mrf.mxu0
  %v858 = vadd.f32 0.0, %v857
  %859 = vmatmul.f32.gmra.mxu0 %v814
  %v860 = vpop.f32.mrf.mxu0
  %v861 = vadd.f32 0.0, %v860
  %862 = vdwg.mxu0
  %v863 = vmul.f32 %v846, 0.17677669
  %v864 = vmul.f32 %v849, 0.17677669
  %v865 = vmul.f32 %v852, 0.17677669
  %v866 = vmul.f32 %v855, 0.17677669
  %v867 = vmul.f32 %v858, 0.17677669
  %v868 = vmul.f32 %v861, 0.17677669
  %v869 = vsel %vm510, %v863, -1e+30
  %v870 = vsel %vm511, %v864, -1e+30
  %v871 = vsel %vm512, %v865, -1e+30
  %v872 = vsel %vm513, %v866, -1e+30
  %v873 = vsel %vm514, %v867, -1e+30
  %v874 = vsel %vm515, %v868, -1e+30
  %vm875 = vcmask 392192
  %v876 = vsel %vm875, %v869, -inf
  %877 = vmax.xlane.f32.xlu0 %v876
  %v878 = vpop.xlane.xlu0 %877
  %v879 = vsel %vm875, %v870, -inf
  %880 = vmax.xlane.f32.xlu0 %v879
  %v881 = vpop.xlane.xlu0 %880
  %v882 = vsel %vm875, %v871, -inf
  %883 = vmax.xlane.f32.xlu0 %v882
  %v884 = vpop.xlane.xlu0 %883
  %v885 = vsel %vm875, %v872, -inf
  %886 = vmax.xlane.f32.xlu0 %v885
  %v887 = vpop.xlane.xlu0 %886
  %v888 = vsel %vm875, %v873, -inf
  %889 = vmax.xlane.f32.xlu0 %v888
  %v890 = vpop.xlane.xlu0 %889
  %v891 = vsel %vm875, %v874, -inf
  %892 = vmax.xlane.f32.xlu0 %v891
  %v893 = vpop.xlane.xlu0 %892
  %v894 = vsub.f32 %v869, %v878
  %v895 = vsub.f32 %v870, %v881
  %v896 = vsub.f32 %v871, %v884
  %v897 = vsub.f32 %v872, %v887
  %v898 = vsub.f32 %v873, %v890
  %v899 = vsub.f32 %v874, %v893
  %v900 = vmul.f32 %v894, 1.442695
  %v901 = vpow.pop %v900
  %v902 = vmul.f32 %v895, 1.442695
  %v903 = vpow.pop %v902
  %v904 = vmul.f32 %v896, 1.442695
  %v905 = vpow.pop %v904
  %v906 = vmul.f32 %v897, 1.442695
  %v907 = vpow.pop %v906
  %v908 = vmul.f32 %v898, 1.442695
  %v909 = vpow.pop %v908
  %v910 = vmul.f32 %v899, 1.442695
  %v911 = vpow.pop %v910
  %v912 = vsel %vm875, %v901, 0.0
  %913 = vadd.xlane.f32.xlu0 %v912
  %v914 = vpop.xlane.xlu0 %913
  %v915 = vsel %vm875, %v903, 0.0
  %916 = vadd.xlane.f32.xlu0 %v915
  %v917 = vpop.xlane.xlu0 %916
  %v918 = vsel %vm875, %v905, 0.0
  %919 = vadd.xlane.f32.xlu0 %v918
  %v920 = vpop.xlane.xlu0 %919
  %v921 = vsel %vm875, %v907, 0.0
  %922 = vadd.xlane.f32.xlu0 %v921
  %v923 = vpop.xlane.xlu0 %922
  %v924 = vsel %vm875, %v909, 0.0
  %925 = vadd.xlane.f32.xlu0 %v924
  %v926 = vpop.xlane.xlu0 %925
  %v927 = vsel %vm875, %v911, 0.0
  %928 = vadd.xlane.f32.xlu0 %v927
  %v929 = vpop.xlane.xlu0 %928
  %v930 = vrcp.pop %v914
  %v931 = vrcp.pop %v917
  %v932 = vrcp.pop %v920
  %v933 = vrcp.pop %v923
  %v934 = vrcp.pop %v926
  %v935 = vrcp.pop %v929
  %v936 = vmul.f32 %v901, %v930
  %v937 = vmul.f32 %v903, %v931
  %v938 = vmul.f32 %v905, %v932
  %v939 = vmul.f32 %v907, %v933
  %v940 = vmul.f32 %v909, %v934
  %v941 = vmul.f32 %v911, %v935
  %v943 = vsel %vm875, %v936, 0
  %v946 = vsel %vm875, %v937, 0
  %v949 = vsel %vm875, %v938, 0
  %v952 = vsel %vm875, %v939, 0
  %v955 = vsel %vm875, %v940, 0
  %v958 = vsel %vm875, %v941, 0
  %960 = vmatpush.msra.mxu0 0.0
  %961 = vmatpush.msra.mxu0 0.0
  %962 = vmatpush.msra.mxu0 0.0
  %963 = vmatpush.msra.mxu0 0.0
  %964 = vmatpush.msra.mxu0 0.0
  %965 = vmatpush.msra.mxu0 0.0
  %966 = vmatpush.msra.mxu0 0.0
  %967 = vmatpush.msra.mxu0 0.0
  %968 = vmatpush.msra.mxu0 0.0
  %969 = vmatpush.msra.mxu0 0.0
  %970 = vmatpush.msra.mxu0 %v775
  %971 = vmatpush.msra.mxu0 %v772
  %972 = vmatpush.msra.mxu0 %v769
  %973 = vmatpush.msra.mxu0 %v766
  %974 = vmatpush.msra.mxu0 %v763
  %975 = vmatpush.msra.mxu0 %v760
  %976 = vmatmul.f32.gmra.mxu0 %v943
  %v977 = vpop.f32.mrf.mxu0
  %v978 = vadd.f32 0.0, %v977
  %979 = vmatmul.f32.gmra.mxu0 %v946
  %v980 = vpop.f32.mrf.mxu0
  %v981 = vadd.f32 0.0, %v980
  %982 = vmatmul.f32.gmra.mxu0 %v949
  %v983 = vpop.f32.mrf.mxu0
  %v984 = vadd.f32 0.0, %v983
  %985 = vmatmul.f32.gmra.mxu0 %v952
  %v986 = vpop.f32.mrf.mxu0
  %v987 = vadd.f32 0.0, %v986
  %988 = vmatmul.f32.gmra.mxu0 %v955
  %v989 = vpop.f32.mrf.mxu0
  %v990 = vadd.f32 0.0, %v989
  %991 = vmatmul.f32.gmra.mxu0 %v958
  %v992 = vpop.f32.mrf.mxu0
  %v993 = vadd.f32 0.0, %v992
  %994 = vdwg.mxu0
  %v996 = vsel %vm247, %v978, 0
  %v999 = vsel %vm247, %v981, 0
  %v1002 = vsel %vm247, %v984, 0
  %v1005 = vsel %vm247, %v987, 0
  %v1008 = vsel %vm247, %v990, 0
  %v1011 = vsel %vm247, %v993, 0
  %1013 = vmatpush.msra.mxu0 0.0
  %1014 = vmatpush.msra.mxu0 0.0
  %1015 = vmatpush.msra.mxu0 0.0
  %1016 = vmatpush.msra.mxu0 0.0
  %1017 = vmatpush.msra.mxu0 0.0
  %1018 = vmatpush.msra.mxu0 0.0
  %1019 = vmatpush.msra.mxu0 0.0
  %1020 = vmatpush.msra.mxu0 0.0
  %1021 = vmatpush.msra.mxu0 0.0
  %1022 = vmatpush.msra.mxu0 0.0
  %1023 = vmatpush.msra.mxu0 0.0
  %1024 = vmatpush.msra.mxu0 0.0
  %1025 = vmatpush.msra.mxu0 %v780
  %1026 = vmatpush.msra.mxu0 %v779
  %1027 = vmatpush.msra.mxu0 %v778
  %1028 = vmatpush.msra.mxu0 %v777
  %1029 = vmatmul.f32.gmra.mxu0 %v996
  %v1030 = vpop.f32.mrf.mxu0
  %v1031 = vadd.f32 0.0, %v1030
  %1032 = vmatmul.f32.gmra.mxu0 %v999
  %v1033 = vpop.f32.mrf.mxu0
  %v1034 = vadd.f32 0.0, %v1033
  %1035 = vmatmul.f32.gmra.mxu0 %v1002
  %v1036 = vpop.f32.mrf.mxu0
  %v1037 = vadd.f32 0.0, %v1036
  %1038 = vmatmul.f32.gmra.mxu0 %v1005
  %v1039 = vpop.f32.mrf.mxu0
  %v1040 = vadd.f32 0.0, %v1039
  %1041 = vmatmul.f32.gmra.mxu0 %v1008
  %v1042 = vpop.f32.mrf.mxu0
  %v1043 = vadd.f32 0.0, %v1042
  %1044 = vmatmul.f32.gmra.mxu0 %v1011
  %v1045 = vpop.f32.mrf.mxu0
  %v1046 = vadd.f32 0.0, %v1045
  %1047 = vdwg.mxu0
  %v1048 = vadd.f32 %v785, %v1031
  %v1049 = vadd.f32 %v785, %v1034
  %v1050 = vadd.f32 %v785, %v1037
  %v1051 = vadd.f32 %v785, %v1040
  %v1052 = vadd.f32 %v785, %v1043
  %v1053 = vadd.f32 %v785, %v1046
  %1054 = vrot.lane.b32.xlu0 %v725, 96
  %v1055 = vpop.permute.xlu0 %1054
  %1056 = vrot.lane.b32.xlu0 %v728, 96
  %v1057 = vpop.permute.xlu0 %1056
  %1058 = vrot.lane.b32.xlu0 %v731, 96
  %v1059 = vpop.permute.xlu0 %1058
  %1060 = vrot.lane.b32.xlu0 %v734, 96
  %v1061 = vpop.permute.xlu0 %1060
  %1062 = vrot.lane.b32.xlu0 %v737, 96
  %v1063 = vpop.permute.xlu0 %1062
  %1064 = vrot.lane.b32.xlu0 %v740, 96
  %v1065 = vpop.permute.xlu0 %1064
  %1066 = vrot.lane.b32.xlu0 %v725, 32
  %v1067 = vpop.permute.xlu0 %1066
  %1068 = vrot.lane.b32.xlu0 %v728, 32
  %v1069 = vpop.permute.xlu0 %1068
  %1070 = vrot.lane.b32.xlu0 %v731, 32
  %v1071 = vpop.permute.xlu0 %1070
  %1072 = vrot.lane.b32.xlu0 %v734, 32
  %v1073 = vpop.permute.xlu0 %1072
  %1074 = vrot.lane.b32.xlu0 %v737, 32
  %v1075 = vpop.permute.xlu0 %1074
  %1076 = vrot.lane.b32.xlu0 %v740, 32
  %v1077 = vpop.permute.xlu0 %1076
  %v1078 = vsel %vm247, %v1055, 0
  %v1080 = vsel %vm247, %v1057, 0
  %v1082 = vsel %vm247, %v1059, 0
  %v1084 = vsel %vm247, %v1061, 0
  %v1086 = vsel %vm247, %v1063, 0
  %v1088 = vsel %vm247, %v1065, 0
  %v1090 = vsel %vm247, %v1067, 0
  %v1092 = vsel %vm247, %v1069, 0
  %v1094 = vsel %vm247, %v1071, 0
  %v1096 = vsel %vm247, %v1073, 0
  %v1098 = vsel %vm247, %v1075, 0
  %v1100 = vsel %vm247, %v1077, 0
  %1102 = vmatpush.xpose.msra.mxu0 0.0
  %1103 = vmatpush.xpose.msra.mxu0 0.0
  %1104 = vmatpush.xpose.msra.mxu0 0.0
  %1105 = vmatpush.xpose.msra.mxu0 0.0
  %1106 = vmatpush.xpose.msra.mxu0 0.0
  %1107 = vmatpush.xpose.msra.mxu0 0.0
  %1108 = vmatpush.xpose.msra.mxu0 0.0
  %1109 = vmatpush.xpose.msra.mxu0 0.0
  %1110 = vmatpush.xpose.msra.mxu0 0.0
  %1111 = vmatpush.xpose.msra.mxu0 0.0
  %1112 = vmatpush.xpose.msra.mxu0 %v1100
  %1113 = vmatpush.xpose.msra.mxu0 %v1098
  %1114 = vmatpush.xpose.msra.mxu0 %v1096
  %1115 = vmatpush.xpose.msra.mxu0 %v1094
  %1116 = vmatpush.xpose.msra.mxu0 %v1092
  %1117 = vmatpush.xpose.msra.mxu0 %v1090
  %1118 = vmatmul.f32.gmra.mxu0 %v1078
  %v1119 = vpop.f32.mrf.mxu0
  %v1120 = vadd.f32 0.0, %v1119
  %1121 = vmatmul.f32.gmra.mxu0 %v1080
  %v1122 = vpop.f32.mrf.mxu0
  %v1123 = vadd.f32 0.0, %v1122
  %1124 = vmatmul.f32.gmra.mxu0 %v1082
  %v1125 = vpop.f32.mrf.mxu0
  %v1126 = vadd.f32 0.0, %v1125
  %1127 = vmatmul.f32.gmra.mxu0 %v1084
  %v1128 = vpop.f32.mrf.mxu0
  %v1129 = vadd.f32 0.0, %v1128
  %1130 = vmatmul.f32.gmra.mxu0 %v1086
  %v1131 = vpop.f32.mrf.mxu0
  %v1132 = vadd.f32 0.0, %v1131
  %1133 = vmatmul.f32.gmra.mxu0 %v1088
  %v1134 = vpop.f32.mrf.mxu0
  %v1135 = vadd.f32 0.0, %v1134
  %1136 = vdwg.mxu0
  %v1137 = vmul.f32 %v1120, 0.17677669
  %v1138 = vmul.f32 %v1123, 0.17677669
  %v1139 = vmul.f32 %v1126, 0.17677669
  %v1140 = vmul.f32 %v1129, 0.17677669
  %v1141 = vmul.f32 %v1132, 0.17677669
  %v1142 = vmul.f32 %v1135, 0.17677669
  %v1143 = vsel %vm510, %v1137, -1e+30
  %v1144 = vsel %vm511, %v1138, -1e+30
  %v1145 = vsel %vm512, %v1139, -1e+30
  %v1146 = vsel %vm513, %v1140, -1e+30
  %v1147 = vsel %vm514, %v1141, -1e+30
  %v1148 = vsel %vm515, %v1142, -1e+30
  %v1149 = vsel %vm875, %v1143, -inf
  %1150 = vmax.xlane.f32.xlu0 %v1149
  %v1151 = vpop.xlane.xlu0 %1150
  %v1152 = vsel %vm875, %v1144, -inf
  %1153 = vmax.xlane.f32.xlu0 %v1152
  %v1154 = vpop.xlane.xlu0 %1153
  %v1155 = vsel %vm875, %v1145, -inf
  %1156 = vmax.xlane.f32.xlu0 %v1155
  %v1157 = vpop.xlane.xlu0 %1156
  %v1158 = vsel %vm875, %v1146, -inf
  %1159 = vmax.xlane.f32.xlu0 %v1158
  %v1160 = vpop.xlane.xlu0 %1159
  %v1161 = vsel %vm875, %v1147, -inf
  %1162 = vmax.xlane.f32.xlu0 %v1161
  %v1163 = vpop.xlane.xlu0 %1162
  %v1164 = vsel %vm875, %v1148, -inf
  %1165 = vmax.xlane.f32.xlu0 %v1164
  %v1166 = vpop.xlane.xlu0 %1165
  %v1167 = vsub.f32 %v1143, %v1151
  %v1168 = vsub.f32 %v1144, %v1154
  %v1169 = vsub.f32 %v1145, %v1157
  %v1170 = vsub.f32 %v1146, %v1160
  %v1171 = vsub.f32 %v1147, %v1163
  %v1172 = vsub.f32 %v1148, %v1166
  %v1173 = vmul.f32 %v1167, 1.442695
  %v1174 = vpow.pop %v1173
  %v1175 = vmul.f32 %v1168, 1.442695
  %v1176 = vpow.pop %v1175
  %v1177 = vmul.f32 %v1169, 1.442695
  %v1178 = vpow.pop %v1177
  %v1179 = vmul.f32 %v1170, 1.442695
  %v1180 = vpow.pop %v1179
  %v1181 = vmul.f32 %v1171, 1.442695
  %v1182 = vpow.pop %v1181
  %v1183 = vmul.f32 %v1172, 1.442695
  %v1184 = vpow.pop %v1183
  %v1185 = vsel %vm875, %v1174, 0.0
  %1186 = vadd.xlane.f32.xlu0 %v1185
  %v1187 = vpop.xlane.xlu0 %1186
  %v1188 = vsel %vm875, %v1176, 0.0
  %1189 = vadd.xlane.f32.xlu0 %v1188
  %v1190 = vpop.xlane.xlu0 %1189
  %v1191 = vsel %vm875, %v1178, 0.0
  %1192 = vadd.xlane.f32.xlu0 %v1191
  %v1193 = vpop.xlane.xlu0 %1192
  %v1194 = vsel %vm875, %v1180, 0.0
  %1195 = vadd.xlane.f32.xlu0 %v1194
  %v1196 = vpop.xlane.xlu0 %1195
  %v1197 = vsel %vm875, %v1182, 0.0
  %1198 = vadd.xlane.f32.xlu0 %v1197
  %v1199 = vpop.xlane.xlu0 %1198
  %v1200 = vsel %vm875, %v1184, 0.0
  %1201 = vadd.xlane.f32.xlu0 %v1200
  %v1202 = vpop.xlane.xlu0 %1201
  %v1203 = vrcp.pop %v1187
  %v1204 = vrcp.pop %v1190
  %v1205 = vrcp.pop %v1193
  %v1206 = vrcp.pop %v1196
  %v1207 = vrcp.pop %v1199
  %v1208 = vrcp.pop %v1202
  %v1209 = vmul.f32 %v1174, %v1203
  %v1210 = vmul.f32 %v1176, %v1204
  %v1211 = vmul.f32 %v1178, %v1205
  %v1212 = vmul.f32 %v1180, %v1206
  %v1213 = vmul.f32 %v1182, %v1207
  %v1214 = vmul.f32 %v1184, %v1208
  %1221 = vrot.lane.b32.xlu0 %v760, 96
  %v1222 = vpop.permute.xlu0 %1221
  %1223 = vrot.lane.b32.xlu0 %v763, 96
  %v1224 = vpop.permute.xlu0 %1223
  %1225 = vrot.lane.b32.xlu0 %v766, 96
  %v1226 = vpop.permute.xlu0 %1225
  %1227 = vrot.lane.b32.xlu0 %v769, 96
  %v1228 = vpop.permute.xlu0 %1227
  %1229 = vrot.lane.b32.xlu0 %v772, 96
  %v1230 = vpop.permute.xlu0 %1229
  %1231 = vrot.lane.b32.xlu0 %v775, 96
  %v1232 = vpop.permute.xlu0 %1231
  %v1240 = vsel %vm875, %v1209, 0
  %v1243 = vsel %vm875, %v1210, 0
  %v1246 = vsel %vm875, %v1211, 0
  %v1249 = vsel %vm875, %v1212, 0
  %v1252 = vsel %vm875, %v1213, 0
  %v1255 = vsel %vm875, %v1214, 0
  %1257 = vmatpush.msra.mxu0 0.0
  %1258 = vmatpush.msra.mxu0 0.0
  %1259 = vmatpush.msra.mxu0 0.0
  %1260 = vmatpush.msra.mxu0 0.0
  %1261 = vmatpush.msra.mxu0 0.0
  %1262 = vmatpush.msra.mxu0 0.0
  %1263 = vmatpush.msra.mxu0 0.0
  %1264 = vmatpush.msra.mxu0 0.0
  %1265 = vmatpush.msra.mxu0 0.0
  %1266 = vmatpush.msra.mxu0 0.0
  %1267 = vmatpush.msra.mxu0 %v1232
  %1268 = vmatpush.msra.mxu0 %v1230
  %1269 = vmatpush.msra.mxu0 %v1228
  %1270 = vmatpush.msra.mxu0 %v1226
  %1271 = vmatpush.msra.mxu0 %v1224
  %1272 = vmatpush.msra.mxu0 %v1222
  %1273 = vmatmul.f32.gmra.mxu0 %v1240
  %v1274 = vpop.f32.mrf.mxu0
  %v1275 = vadd.f32 0.0, %v1274
  %1276 = vmatmul.f32.gmra.mxu0 %v1243
  %v1277 = vpop.f32.mrf.mxu0
  %v1278 = vadd.f32 0.0, %v1277
  %1279 = vmatmul.f32.gmra.mxu0 %v1246
  %v1280 = vpop.f32.mrf.mxu0
  %v1281 = vadd.f32 0.0, %v1280
  %1282 = vmatmul.f32.gmra.mxu0 %v1249
  %v1283 = vpop.f32.mrf.mxu0
  %v1284 = vadd.f32 0.0, %v1283
  %1285 = vmatmul.f32.gmra.mxu0 %v1252
  %v1286 = vpop.f32.mrf.mxu0
  %v1287 = vadd.f32 0.0, %v1286
  %1288 = vmatmul.f32.gmra.mxu0 %v1255
  %v1289 = vpop.f32.mrf.mxu0
  %v1290 = vadd.f32 0.0, %v1289
  %1291 = vdwg.mxu0
  %v1293 = vsel %vm247, %v1275, 0
  %v1296 = vsel %vm247, %v1278, 0
  %v1299 = vsel %vm247, %v1281, 0
  %v1302 = vsel %vm247, %v1284, 0
  %v1305 = vsel %vm247, %v1287, 0
  %v1308 = vsel %vm247, %v1290, 0
  %1310 = vmatpush.msra.mxu0 0.0
  %1311 = vmatpush.msra.mxu0 0.0
  %1312 = vmatpush.msra.mxu0 0.0
  %1313 = vmatpush.msra.mxu0 0.0
  %1314 = vmatpush.msra.mxu0 0.0
  %1315 = vmatpush.msra.mxu0 0.0
  %1316 = vmatpush.msra.mxu0 0.0
  %1317 = vmatpush.msra.mxu0 0.0
  %1318 = vmatpush.msra.mxu0 0.0
  %1319 = vmatpush.msra.mxu0 0.0
  %1320 = vmatpush.msra.mxu0 0.0
  %1321 = vmatpush.msra.mxu0 0.0
  %1322 = vmatpush.msra.mxu0 %v784
  %1323 = vmatpush.msra.mxu0 %v783
  %1324 = vmatpush.msra.mxu0 %v782
  %1325 = vmatpush.msra.mxu0 %v781
  %1326 = vmatmul.f32.gmra.mxu0 %v1293
  %v1327 = vpop.f32.mrf.mxu0
  %v1328 = vadd.f32 0.0, %v1327
  %1329 = vmatmul.f32.gmra.mxu0 %v1296
  %v1330 = vpop.f32.mrf.mxu0
  %v1331 = vadd.f32 0.0, %v1330
  %1332 = vmatmul.f32.gmra.mxu0 %v1299
  %v1333 = vpop.f32.mrf.mxu0
  %v1334 = vadd.f32 0.0, %v1333
  %1335 = vmatmul.f32.gmra.mxu0 %v1302
  %v1336 = vpop.f32.mrf.mxu0
  %v1337 = vadd.f32 0.0, %v1336
  %1338 = vmatmul.f32.gmra.mxu0 %v1305
  %v1339 = vpop.f32.mrf.mxu0
  %v1340 = vadd.f32 0.0, %v1339
  %1341 = vmatmul.f32.gmra.mxu0 %v1308
  %v1342 = vpop.f32.mrf.mxu0
  %v1343 = vadd.f32 0.0, %v1342
  %1344 = vdwg.mxu0
  %v1345 = vadd.f32 %v1048, %v1328
  %v1346 = vadd.f32 %v1049, %v1331
  %v1347 = vadd.f32 %v1050, %v1334
  %v1348 = vadd.f32 %v1051, %v1337
  %v1349 = vadd.f32 %v1052, %v1340
  %v1350 = vadd.f32 %v1053, %v1343
  %v1351 = vadd.f32 %v668, %v1345
  %v1352 = vadd.f32 %v669, %v1346
  %v1353 = vadd.f32 %v670, %v1347
  %v1354 = vadd.f32 %v671, %v1348
  %v1355 = vadd.f32 %v672, %v1349
  %v1356 = vadd.f32 %v673, %v1350
  %v1357 = vadd.f32 %v1351, %v448
  %v1358 = vadd.f32 %v1352, %v449
  %v1359 = vadd.f32 %v1353, %v450
  %v1360 = vadd.f32 %v1354, %v451
  %v1361 = vadd.f32 %v1355, %v452
  %v1362 = vadd.f32 %v1356, %v453
  %v1363 = vld [vmem:[%s1 + $0x3d1] ss:$0 sm:$0xff]
  %v1364 = vld [vmem:[%s1 + $0x3d2] ss:$0 sm:$0xff]
  %v1365 = vsel %vm247, %v1357, 0.0
  %1366 = vadd.xlane.f32.xlu0 %v1365
  %v1367 = vpop.xlane.xlu0 %1366
  %v1368 = vsel %vm247, %v1358, 0.0
  %1369 = vadd.xlane.f32.xlu0 %v1368
  %v1370 = vpop.xlane.xlu0 %1369
  %v1371 = vsel %vm247, %v1359, 0.0
  %1372 = vadd.xlane.f32.xlu0 %v1371
  %v1373 = vpop.xlane.xlu0 %1372
  %v1374 = vsel %vm247, %v1360, 0.0
  %1375 = vadd.xlane.f32.xlu0 %v1374
  %v1376 = vpop.xlane.xlu0 %1375
  %v1377 = vsel %vm247, %v1361, 0.0
  %1378 = vadd.xlane.f32.xlu0 %v1377
  %v1379 = vpop.xlane.xlu0 %1378
  %v1380 = vsel %vm247, %v1362, 0.0
  %1381 = vadd.xlane.f32.xlu0 %v1380
  %v1382 = vpop.xlane.xlu0 %1381
  %v1383 = vmul.f32 %v1367, %v272
  %v1384 = vmul.f32 %v1370, %v272
  %v1385 = vmul.f32 %v1373, %v272
  %v1386 = vmul.f32 %v1376, %v272
  %v1387 = vmul.f32 %v1379, %v272
  %v1388 = vmul.f32 %v1382, %v272
  %v1389 = vmul.f32 %v1357, %v1357
  %v1390 = vmul.f32 %v1358, %v1358
  %v1391 = vmul.f32 %v1359, %v1359
  %v1392 = vmul.f32 %v1360, %v1360
  %v1393 = vmul.f32 %v1361, %v1361
  %v1394 = vmul.f32 %v1362, %v1362
  %v1395 = vsel %vm247, %v1389, 0.0
  %1396 = vadd.xlane.f32.xlu0 %v1395
  %v1397 = vpop.xlane.xlu0 %1396
  %v1398 = vsel %vm247, %v1390, 0.0
  %1399 = vadd.xlane.f32.xlu0 %v1398
  %v1400 = vpop.xlane.xlu0 %1399
  %v1401 = vsel %vm247, %v1391, 0.0
  %1402 = vadd.xlane.f32.xlu0 %v1401
  %v1403 = vpop.xlane.xlu0 %1402
  %v1404 = vsel %vm247, %v1392, 0.0
  %1405 = vadd.xlane.f32.xlu0 %v1404
  %v1406 = vpop.xlane.xlu0 %1405
  %v1407 = vsel %vm247, %v1393, 0.0
  %1408 = vadd.xlane.f32.xlu0 %v1407
  %v1409 = vpop.xlane.xlu0 %1408
  %v1410 = vsel %vm247, %v1394, 0.0
  %1411 = vadd.xlane.f32.xlu0 %v1410
  %v1412 = vpop.xlane.xlu0 %1411
  %v1413 = vmul.f32 %v1397, %v272
  %v1414 = vmul.f32 %v1400, %v272
  %v1415 = vmul.f32 %v1403, %v272
  %v1416 = vmul.f32 %v1406, %v272
  %v1417 = vmul.f32 %v1409, %v272
  %v1418 = vmul.f32 %v1412, %v272
  %v1419 = vmul.f32 %v1383, %v1383
  %v1420 = vmul.f32 %v1384, %v1384
  %v1421 = vmul.f32 %v1385, %v1385
  %v1422 = vmul.f32 %v1386, %v1386
  %v1423 = vmul.f32 %v1387, %v1387
  %v1424 = vmul.f32 %v1388, %v1388
  %v1425 = vsub.f32 %v1413, %v1419
  %v1426 = vsub.f32 %v1414, %v1420
  %v1427 = vsub.f32 %v1415, %v1421
  %v1428 = vsub.f32 %v1416, %v1422
  %v1429 = vsub.f32 %v1417, %v1423
  %v1430 = vsub.f32 %v1418, %v1424
  %v1431 = vsub.f32 %v1357, %v1383
  %v1432 = vsub.f32 %v1358, %v1384
  %v1433 = vsub.f32 %v1359, %v1385
  %v1434 = vsub.f32 %v1360, %v1386
  %v1435 = vsub.f32 %v1361, %v1387
  %v1436 = vsub.f32 %v1362, %v1388
  %v1437 = vadd.f32 %v1425, 1e-05
  %v1438 = vadd.f32 %v1426, 1e-05
  %v1439 = vadd.f32 %v1427, 1e-05
  %v1440 = vadd.f32 %v1428, 1e-05
  %v1441 = vadd.f32 %v1429, 1e-05
  %v1442 = vadd.f32 %v1430, 1e-05
  %v1443 = vrsqrt.pop %v1437
  %v1444 = vmul.f32 %v1443, %v1437
  %v1445 = vmul.f32 %v1444, %v1443
  %v1446 = vmul.f32 0.5, %v1445
  %v1447 = vsub.f32 1.5, %v1446
  %v1448 = vmul.f32 %v1443, %v1447
  %vm1449 = vweird.f32 %v1437
  %vm1450 = vweird.f32 %v1443
  %vm1451 = vmor %vm1449, %vm1450
  %v1452 = vsel %vm1451, %v1443, %v1448
  %v1453 = vrsqrt.pop %v1438
  %v1454 = vmul.f32 %v1453, %v1438
  %v1455 = vmul.f32 %v1454, %v1453
  %v1456 = vmul.f32 0.5, %v1455
  %v1457 = vsub.f32 1.5, %v1456
  %v1458 = vmul.f32 %v1453, %v1457
  %vm1459 = vweird.f32 %v1438
  %vm1460 = vweird.f32 %v1453
  %vm1461 = vmor %vm1459, %vm1460
  %v1462 = vsel %vm1461, %v1453, %v1458
  %v1463 = vrsqrt.pop %v1439
  %v1464 = vmul.f32 %v1463, %v1439
  %v1465 = vmul.f32 %v1464, %v1463
  %v1466 = vmul.f32 0.5, %v1465
  %v1467 = vsub.f32 1.5, %v1466
  %v1468 = vmul.f32 %v1463, %v1467
  %vm1469 = vweird.f32 %v1439
  %vm1470 = vweird.f32 %v1463
  %vm1471 = vmor %vm1469, %vm1470
  %v1472 = vsel %vm1471, %v1463, %v1468
  %v1473 = vrsqrt.pop %v1440
  %v1474 = vmul.f32 %v1473, %v1440
  %v1475 = vmul.f32 %v1474, %v1473
  %v1476 = vmul.f32 0.5, %v1475
  %v1477 = vsub.f32 1.5, %v1476
  %v1478 = vmul.f32 %v1473, %v1477
  %vm1479 = vweird.f32 %v1440
  %vm1480 = vweird.f32 %v1473
  %vm1481 = vmor %vm1479, %vm1480
  %v1482 = vsel %vm1481, %v1473, %v1478
  %v1483 = vrsqrt.pop %v1441
  %v1484 = vmul.f32 %v1483, %v1441
  %v1485 = vmul.f32 %v1484, %v1483
  %v1486 = vmul.f32 0.5, %v1485
  %v1487 = vsub.f32 1.5, %v1486
  %v1488 = vmul.f32 %v1483, %v1487
  %vm1489 = vweird.f32 %v1441
  %vm1490 = vweird.f32 %v1483
  %vm1491 = vmor %vm1489, %vm1490
  %v1492 = vsel %vm1491, %v1483, %v1488
  %v1493 = vrsqrt.pop %v1442
  %v1494 = vmul.f32 %v1493, %v1442
  %v1495 = vmul.f32 %v1494, %v1493
  %v1496 = vmul.f32 0.5, %v1495
  %v1497 = vsub.f32 1.5, %v1496
  %v1498 = vmul.f32 %v1493, %v1497
  %vm1499 = vweird.f32 %v1442
  %vm1500 = vweird.f32 %v1493
  %vm1501 = vmor %vm1499, %vm1500
  %v1502 = vsel %vm1501, %v1493, %v1498
  %v1503 = vmul.f32 %v1431, %v1452
  %v1504 = vmul.f32 %v1432, %v1462
  %v1505 = vmul.f32 %v1433, %v1472
  %v1506 = vmul.f32 %v1434, %v1482
  %v1507 = vmul.f32 %v1435, %v1492
  %v1508 = vmul.f32 %v1436, %v1502
  %v1509 = vmul.f32 %v1503, %v1363
  %v1510 = vmul.f32 %v1504, %v1363
  %v1511 = vmul.f32 %v1505, %v1363
  %v1512 = vmul.f32 %v1506, %v1363
  %v1513 = vmul.f32 %v1507, %v1363
  %v1514 = vmul.f32 %v1508, %v1363
  %v1515 = vadd.f32 %v1509, %v1364
  %v1516 = vadd.f32 %v1510, %v1364
  %v1517 = vadd.f32 %v1511, %v1364
  %v1518 = vadd.f32 %v1512, %v1364
  %v1519 = vadd.f32 %v1513, %v1364
  %v1520 = vadd.f32 %v1514, %v1364
  %v1521 = vld [vmem:[%s1 + $0x140] sm:$0xff]
  %v1522 = vld [vmem:[%s1 + $0x150] sm:$0xff]
  %v1523 = vld [vmem:[%s1 + $0x160] sm:$0xff]
  %v1524 = vld [vmem:[%s1 + $0x170] sm:$0xff]
  %v1525 = vld [vmem:[%s1 + $0x3d3] ss:$0 sm:$0xff]
  %v1527 = vsel %vm247, %v1515, 0
  %v1530 = vsel %vm247, %v1516, 0
  %v1533 = vsel %vm247, %v1517, 0
  %v1536 = vsel %vm247, %v1518, 0
  %v1539 = vsel %vm247, %v1519, 0
  %v1542 = vsel %vm247, %v1520, 0
  %1544 = vmatpush.msra.mxu0 0.0
  %1545 = vmatpush.msra.mxu0 0.0
  %1546 = vmatpush.msra.mxu0 0.0
  %1547 = vmatpush.msra.mxu0 0.0
  %1548 = vmatpush.msra.mxu0 0.0
  %1549 = vmatpush.msra.mxu0 0.0
  %1550 = vmatpush.msra.mxu0 0.0
  %1551 = vmatpush.msra.mxu0 0.0
  %1552 = vmatpush.msra.mxu0 0.0
  %1553 = vmatpush.msra.mxu0 0.0
  %1554 = vmatpush.msra.mxu0 0.0
  %1555 = vmatpush.msra.mxu0 0.0
  %1556 = vmatpush.msra.mxu0 %v1524
  %1557 = vmatpush.msra.mxu0 %v1523
  %1558 = vmatpush.msra.mxu0 %v1522
  %1559 = vmatpush.msra.mxu0 %v1521
  %1560 = vmatmul.f32.gmra.mxu0 %v1527
  %v1561 = vpop.f32.mrf.mxu0
  %v1562 = vadd.f32 %v1525, %v1561
  %1563 = vmatmul.f32.gmra.mxu0 %v1530
  %v1564 = vpop.f32.mrf.mxu0
  %v1565 = vadd.f32 %v1525, %v1564
  %1566 = vmatmul.f32.gmra.mxu0 %v1533
  %v1567 = vpop.f32.mrf.mxu0
  %v1568 = vadd.f32 %v1525, %v1567
  %1569 = vmatmul.f32.gmra.mxu0 %v1536
  %v1570 = vpop.f32.mrf.mxu0
  %v1571 = vadd.f32 %v1525, %v1570
  %1572 = vmatmul.f32.gmra.mxu0 %v1539
  %v1573 = vpop.f32.mrf.mxu0
  %v1574 = vadd.f32 %v1525, %v1573
  %1575 = vmatmul.f32.gmra.mxu0 %v1542
  %v1576 = vpop.f32.mrf.mxu0
  %v1577 = vadd.f32 %v1525, %v1576
  %1578 = vdwg.mxu0
  %v1579 = vmul.f32 %v1562, 0.5
  %v1580 = vmul.f32 %v1565, 0.5
  %v1581 = vmul.f32 %v1568, 0.5
  %v1582 = vmul.f32 %v1571, 0.5
  %v1583 = vmul.f32 %v1574, 0.5
  %v1584 = vmul.f32 %v1577, 0.5
  %v1585 = vmul.f32 %v1562, 0.044715
  %v1586 = vmul.f32 %v1565, 0.044715
  %v1587 = vmul.f32 %v1568, 0.044715
  %v1588 = vmul.f32 %v1571, 0.044715
  %v1589 = vmul.f32 %v1574, 0.044715
  %v1590 = vmul.f32 %v1577, 0.044715
  %v1591 = vmul.f32 %v1585, %v1562
  %v1592 = vmul.f32 %v1586, %v1565
  %v1593 = vmul.f32 %v1587, %v1568
  %v1594 = vmul.f32 %v1588, %v1571
  %v1595 = vmul.f32 %v1589, %v1574
  %v1596 = vmul.f32 %v1590, %v1577
  %v1597 = vmul.f32 %v1591, %v1562
  %v1598 = vmul.f32 %v1592, %v1565
  %v1599 = vmul.f32 %v1593, %v1568
  %v1600 = vmul.f32 %v1594, %v1571
  %v1601 = vmul.f32 %v1595, %v1574
  %v1602 = vmul.f32 %v1596, %v1577
  %v1603 = vadd.f32 %v1562, %v1597
  %v1604 = vadd.f32 %v1565, %v1598
  %v1605 = vadd.f32 %v1568, %v1599
  %v1606 = vadd.f32 %v1571, %v1600
  %v1607 = vadd.f32 %v1574, %v1601
  %v1608 = vadd.f32 %v1577, %v1602
  %v1609 = vmul.f32 %v1603, 0.7978846
  %v1610 = vmul.f32 %v1604, 0.7978846
  %v1611 = vmul.f32 %v1605, 0.7978846
  %v1612 = vmul.f32 %v1606, 0.7978846
  %v1613 = vmul.f32 %v1607, 0.7978846
  %v1614 = vmul.f32 %v1608, 0.7978846
  %v1615 = vtanh.pop %v1609
  %v1616 = vtanh.pop %v1610
  %v1617 = vtanh.pop %v1611
  %v1618 = vtanh.pop %v1612
  %v1619 = vtanh.pop %v1613
  %v1620 = vtanh.pop %v1614
  %v1621 = vadd.f32 %v1615, 1.0
  %v1622 = vadd.f32 %v1616, 1.0
  %v1623 = vadd.f32 %v1617, 1.0
  %v1624 = vadd.f32 %v1618, 1.0
  %v1625 = vadd.f32 %v1619, 1.0
  %v1626 = vadd.f32 %v1620, 1.0
  %v1627 = vmul.f32 %v1579, %v1621
  %v1628 = vmul.f32 %v1580, %v1622
  %v1629 = vmul.f32 %v1581, %v1623
  %v1630 = vmul.f32 %v1582, %v1624
  %v1631 = vmul.f32 %v1583, %v1625
  %v1632 = vmul.f32 %v1584, %v1626
  %v1633 = vld [vmem:[%s1 + $0x180] sm:$0xff]
  %v1634 = vld [vmem:[%s1 + $0x190] sm:$0xff]
  %v1635 = vld [vmem:[%s1 + $0x1a0] sm:$0xff]
  %v1636 = vld [vmem:[%s1 + $0x1b0] sm:$0xff]
  %v1637 = vld [vmem:[%s1 + $0x1c0] sm:$0xff]
  %v1638 = vld [vmem:[%s1 + $0x1d0] sm:$0xff]
  %v1639 = vld [vmem:[%s1 + $0x1e0] sm:$0xff]
  %v1640 = vld [vmem:[%s1 + $0x1f0] sm:$0xff]
  %v1641 = vld [vmem:[%s1 + $0x3d4] ss:$0 sm:$0xff]
  %v1643 = vsel %vm19, %v1627, 0
  %v1646 = vsel %vm19, %v1628, 0
  %v1649 = vsel %vm19, %v1629, 0
  %v1652 = vsel %vm19, %v1630, 0
  %v1655 = vsel %vm19, %v1631, 0
  %v1658 = vsel %vm19, %v1632, 0
  %1660 = vmatpush.msra.mxu0 0.0
  %1661 = vmatpush.msra.mxu0 0.0
  %1662 = vmatpush.msra.mxu0 0.0
  %1663 = vmatpush.msra.mxu0 0.0
  %1664 = vmatpush.msra.mxu0 0.0
  %1665 = vmatpush.msra.mxu0 0.0
  %1666 = vmatpush.msra.mxu0 0.0
  %1667 = vmatpush.msra.mxu0 0.0
  %1668 = vmatpush.msra.mxu0 %v1640
  %1669 = vmatpush.msra.mxu0 %v1639
  %1670 = vmatpush.msra.mxu0 %v1638
  %1671 = vmatpush.msra.mxu0 %v1637
  %1672 = vmatpush.msra.mxu0 %v1636
  %1673 = vmatpush.msra.mxu0 %v1635
  %1674 = vmatpush.msra.mxu0 %v1634
  %1675 = vmatpush.msra.mxu0 %v1633
  %1676 = vmatmul.f32.gmra.mxu0 %v1643
  %v1677 = vpop.f32.mrf.mxu0
  %v1678 = vadd.f32 %v1641, %v1677
  %1679 = vmatmul.f32.gmra.mxu0 %v1646
  %v1680 = vpop.f32.mrf.mxu0
  %v1681 = vadd.f32 %v1641, %v1680
  %1682 = vmatmul.f32.gmra.mxu0 %v1649
  %v1683 = vpop.f32.mrf.mxu0
  %v1684 = vadd.f32 %v1641, %v1683
  %1685 = vmatmul.f32.gmra.mxu0 %v1652
  %v1686 = vpop.f32.mrf.mxu0
  %v1687 = vadd.f32 %v1641, %v1686
  %1688 = vmatmul.f32.gmra.mxu0 %v1655
  %v1689 = vpop.f32.mrf.mxu0
  %v1690 = vadd.f32 %v1641, %v1689
  %1691 = vmatmul.f32.gmra.mxu0 %v1658
  %v1692 = vpop.f32.mrf.mxu0
  %v1693 = vadd.f32 %v1641, %v1692
  %1694 = vdwg.mxu0
  %v1695 = vadd.f32 %v1678, %v1357
  %v1696 = vadd.f32 %v1681, %v1358
  %v1697 = vadd.f32 %v1684, %v1359
  %v1698 = vadd.f32 %v1687, %v1360
  %v1699 = vadd.f32 %v1690, %v1361
  %v1700 = vadd.f32 %v1693, %v1362
  %v1701 = vld [vmem:[%s1 + $0x3d5] ss:$0 sm:$0xff]
  %v1702 = vld [vmem:[%s1 + $0x3d6] ss:$0 sm:$0xff]
  %v1703 = vsel %vm247, %v1695, 0.0
  %1704 = vadd.xlane.f32.xlu0 %v1703
  %v1705 = vpop.xlane.xlu0 %1704
  %v1706 = vsel %vm247, %v1696, 0.0
  %1707 = vadd.xlane.f32.xlu0 %v1706
  %v1708 = vpop.xlane.xlu0 %1707
  %v1709 = vsel %vm247, %v1697, 0.0
  %1710 = vadd.xlane.f32.xlu0 %v1709
  %v1711 = vpop.xlane.xlu0 %1710
  %v1712 = vsel %vm247, %v1698, 0.0
  %1713 = vadd.xlane.f32.xlu0 %v1712
  %v1714 = vpop.xlane.xlu0 %1713
  %v1715 = vsel %vm247, %v1699, 0.0
  %1716 = vadd.xlane.f32.xlu0 %v1715
  %v1717 = vpop.xlane.xlu0 %1716
  %v1718 = vsel %vm247, %v1700, 0.0
  %1719 = vadd.xlane.f32.xlu0 %v1718
  %v1720 = vpop.xlane.xlu0 %1719
  %v1721 = vmul.f32 %v1705, %v272
  %v1722 = vmul.f32 %v1708, %v272
  %v1723 = vmul.f32 %v1711, %v272
  %v1724 = vmul.f32 %v1714, %v272
  %v1725 = vmul.f32 %v1717, %v272
  %v1726 = vmul.f32 %v1720, %v272
  %v1727 = vmul.f32 %v1695, %v1695
  %v1728 = vmul.f32 %v1696, %v1696
  %v1729 = vmul.f32 %v1697, %v1697
  %v1730 = vmul.f32 %v1698, %v1698
  %v1731 = vmul.f32 %v1699, %v1699
  %v1732 = vmul.f32 %v1700, %v1700
  %v1733 = vsel %vm247, %v1727, 0.0
  %1734 = vadd.xlane.f32.xlu0 %v1733
  %v1735 = vpop.xlane.xlu0 %1734
  %v1736 = vsel %vm247, %v1728, 0.0
  %1737 = vadd.xlane.f32.xlu0 %v1736
  %v1738 = vpop.xlane.xlu0 %1737
  %v1739 = vsel %vm247, %v1729, 0.0
  %1740 = vadd.xlane.f32.xlu0 %v1739
  %v1741 = vpop.xlane.xlu0 %1740
  %v1742 = vsel %vm247, %v1730, 0.0
  %1743 = vadd.xlane.f32.xlu0 %v1742
  %v1744 = vpop.xlane.xlu0 %1743
  %v1745 = vsel %vm247, %v1731, 0.0
  %1746 = vadd.xlane.f32.xlu0 %v1745
  %v1747 = vpop.xlane.xlu0 %1746
  %v1748 = vsel %vm247, %v1732, 0.0
  %1749 = vadd.xlane.f32.xlu0 %v1748
  %v1750 = vpop.xlane.xlu0 %1749
  %v1751 = vmul.f32 %v1735, %v272
  %v1752 = vmul.f32 %v1738, %v272
  %v1753 = vmul.f32 %v1741, %v272
  %v1754 = vmul.f32 %v1744, %v272
  %v1755 = vmul.f32 %v1747, %v272
  %v1756 = vmul.f32 %v1750, %v272
  %v1757 = vmul.f32 %v1721, %v1721
  %v1758 = vmul.f32 %v1722, %v1722
  %v1759 = vmul.f32 %v1723, %v1723
  %v1760 = vmul.f32 %v1724, %v1724
  %v1761 = vmul.f32 %v1725, %v1725
  %v1762 = vmul.f32 %v1726, %v1726
  %v1763 = vsub.f32 %v1751, %v1757
  %v1764 = vsub.f32 %v1752, %v1758
  %v1765 = vsub.f32 %v1753, %v1759
  %v1766 = vsub.f32 %v1754, %v1760
  %v1767 = vsub.f32 %v1755, %v1761
  %v1768 = vsub.f32 %v1756, %v1762
  %v1769 = vsub.f32 %v1695, %v1721
  %v1770 = vsub.f32 %v1696, %v1722
  %v1771 = vsub.f32 %v1697, %v1723
  %v1772 = vsub.f32 %v1698, %v1724
  %v1773 = vsub.f32 %v1699, %v1725
  %v1774 = vsub.f32 %v1700, %v1726
  %v1775 = vadd.f32 %v1763, 1e-05
  %v1776 = vadd.f32 %v1764, 1e-05
  %v1777 = vadd.f32 %v1765, 1e-05
  %v1778 = vadd.f32 %v1766, 1e-05
  %v1779 = vadd.f32 %v1767, 1e-05
  %v1780 = vadd.f32 %v1768, 1e-05
  %v1781 = vrsqrt.pop %v1775
  %v1782 = vmul.f32 %v1781, %v1775
  %v1783 = vmul.f32 %v1782, %v1781
  %v1784 = vmul.f32 0.5, %v1783
  %v1785 = vsub.f32 1.5, %v1784
  %v1786 = vmul.f32 %v1781, %v1785
  %vm1787 = vweird.f32 %v1775
  %vm1788 = vweird.f32 %v1781
  %vm1789 = vmor %vm1787, %vm1788
  %v1790 = vsel %vm1789, %v1781, %v1786
  %v1791 = vrsqrt.pop %v1776
  %v1792 = vmul.f32 %v1791, %v1776
  %v1793 = vmul.f32 %v1792, %v1791
  %v1794 = vmul.f32 0.5, %v1793
  %v1795 = vsub.f32 1.5, %v1794
  %v1796 = vmul.f32 %v1791, %v1795
  %vm1797 = vweird.f32 %v1776
  %vm1798 = vweird.f32 %v1791
  %vm1799 = vmor %vm1797, %vm1798
  %v1800 = vsel %vm1799, %v1791, %v1796
  %v1801 = vrsqrt.pop %v1777
  %v1802 = vmul.f32 %v1801, %v1777
  %v1803 = vmul.f32 %v1802, %v1801
  %v1804 = vmul.f32 0.5, %v1803
  %v1805 = vsub.f32 1.5, %v1804
  %v1806 = vmul.f32 %v1801, %v1805
  %vm1807 = vweird.f32 %v1777
  %vm1808 = vweird.f32 %v1801
  %vm1809 = vmor %vm1807, %vm1808
  %v1810 = vsel %vm1809, %v1801, %v1806
  %v1811 = vrsqrt.pop %v1778
  %v1812 = vmul.f32 %v1811, %v1778
  %v1813 = vmul.f32 %v1812, %v1811
  %v1814 = vmul.f32 0.5, %v1813
  %v1815 = vsub.f32 1.5, %v1814
  %v1816 = vmul.f32 %v1811, %v1815
  %vm1817 = vweird.f32 %v1778
  %vm1818 = vweird.f32 %v1811
  %vm1819 = vmor %vm1817, %vm1818
  %v1820 = vsel %vm1819, %v1811, %v1816
  %v1821 = vrsqrt.pop %v1779
  %v1822 = vmul.f32 %v1821, %v1779
  %v1823 = vmul.f32 %v1822, %v1821
  %v1824 = vmul.f32 0.5, %v1823
  %v1825 = vsub.f32 1.5, %v1824
  %v1826 = vmul.f32 %v1821, %v1825
  %vm1827 = vweird.f32 %v1779
  %vm1828 = vweird.f32 %v1821
  %vm1829 = vmor %vm1827, %vm1828
  %v1830 = vsel %vm1829, %v1821, %v1826
  %v1831 = vrsqrt.pop %v1780
  %v1832 = vmul.f32 %v1831, %v1780
  %v1833 = vmul.f32 %v1832, %v1831
  %v1834 = vmul.f32 0.5, %v1833
  %v1835 = vsub.f32 1.5, %v1834
  %v1836 = vmul.f32 %v1831, %v1835
  %vm1837 = vweird.f32 %v1780
  %vm1838 = vweird.f32 %v1831
  %vm1839 = vmor %vm1837, %vm1838
  %v1840 = vsel %vm1839, %v1831, %v1836
  %v1841 = vmul.f32 %v1769, %v1790
  %v1842 = vmul.f32 %v1770, %v1800
  %v1843 = vmul.f32 %v1771, %v1810
  %v1844 = vmul.f32 %v1772, %v1820
  %v1845 = vmul.f32 %v1773, %v1830
  %v1846 = vmul.f32 %v1774, %v1840
  %v1847 = vmul.f32 %v1841, %v1701
  %v1848 = vmul.f32 %v1842, %v1701
  %v1849 = vmul.f32 %v1843, %v1701
  %v1850 = vmul.f32 %v1844, %v1701
  %v1851 = vmul.f32 %v1845, %v1701
  %v1852 = vmul.f32 %v1846, %v1701
  %v1853 = vadd.f32 %v1847, %v1702
  %v1854 = vadd.f32 %v1848, %v1702
  %v1855 = vadd.f32 %v1849, %v1702
  %v1856 = vadd.f32 %v1850, %v1702
  %v1857 = vadd.f32 %v1851, %v1702
  %v1858 = vadd.f32 %v1852, %v1702
  %v1859 = vld [vmem:[%s1 + $0x200] sm:$0xff]
  %v1860 = vld [vmem:[%s1 + $0x208] sm:$0xff]
  %v1861 = vld [vmem:[%s1 + $0x210] sm:$0xff]
  %v1862 = vld [vmem:[%s1 + $0x218] sm:$0xff]
  %v1863 = vld [vmem:[%s1 + $0x220] sm:$0xff]
  %v1864 = vld [vmem:[%s1 + $0x228] sm:$0xff]
  %v1865 = vld [vmem:[%s1 + $0x230] sm:$0xff]
  %v1866 = vld [vmem:[%s1 + $0x238] sm:$0xff]
  %s1867 = scalar_lea.vmem %s1, 983
  %v1868 = vld [vmem:[%s1867] ss:$8 sm:$0x3]
  %v1870 = vperm.slane %v1868, 0
  %v1871 = vperm.slane %v1868, 1
  %v1875 = vsel %vm247, %v1853, 0
  %v1878 = vsel %vm247, %v1854, 0
  %v1881 = vsel %vm247, %v1855, 0
  %v1884 = vsel %vm247, %v1856, 0
  %v1887 = vsel %vm247, %v1857, 0
  %v1890 = vsel %vm247, %v1858, 0
  %1892 = vmatpush.msra.mxu0 0.0
  %1893 = vmatpush.msra.mxu0 0.0
  %1894 = vmatpush.msra.mxu0 0.0
  %1895 = vmatpush.msra.mxu0 0.0
  %1896 = vmatpush.msra.mxu0 0.0
  %1897 = vmatpush.msra.mxu0 0.0
  %1898 = vmatpush.msra.mxu0 0.0
  %1899 = vmatpush.msra.mxu0 0.0
  %1900 = vmatpush.msra.mxu0 0.0
  %1901 = vmatpush.msra.mxu0 0.0
  %1902 = vmatpush.msra.mxu0 0.0
  %1903 = vmatpush.msra.mxu0 0.0
  %1904 = vmatpush.msra.mxu0 %v1865
  %1905 = vmatpush.msra.mxu0 %v1863
  %1906 = vmatpush.msra.mxu0 %v1861
  %1907 = vmatpush.msra.mxu0 %v1859
  %1908 = vmatmul.f32.gmra.mxu0 %v1875
  %v1909 = vpop.f32.mrf.mxu0
  %v1910 = vadd.f32 %v1870, %v1909
  %1911 = vmatmul.f32.gmra.mxu0 %v1878
  %v1912 = vpop.f32.mrf.mxu0
  %v1913 = vadd.f32 %v1870, %v1912
  %1914 = vmatmul.f32.gmra.mxu0 %v1881
  %v1915 = vpop.f32.mrf.mxu0
  %v1916 = vadd.f32 %v1870, %v1915
  %1917 = vmatmul.f32.gmra.mxu0 %v1884
  %v1918 = vpop.f32.mrf.mxu0
  %v1919 = vadd.f32 %v1870, %v1918
  %1920 = vmatmul.f32.gmra.mxu0 %v1887
  %v1921 = vpop.f32.mrf.mxu0
  %v1922 = vadd.f32 %v1870, %v1921
  %1923 = vmatmul.f32.gmra.mxu0 %v1890
  %v1924 = vpop.f32.mrf.mxu0
  %v1925 = vadd.f32 %v1870, %v1924
  %1926 = vdwg.mxu0
  %1927 = vmatpush.msra.mxu0 0.0
  %1928 = vmatpush.msra.mxu0 0.0
  %1929 = vmatpush.msra.mxu0 0.0
  %1930 = vmatpush.msra.mxu0 0.0
  %1931 = vmatpush.msra.mxu0 0.0
  %1932 = vmatpush.msra.mxu0 0.0
  %1933 = vmatpush.msra.mxu0 0.0
  %1934 = vmatpush.msra.mxu0 0.0
  %1935 = vmatpush.msra.mxu0 0.0
  %1936 = vmatpush.msra.mxu0 0.0
  %1937 = vmatpush.msra.mxu0 0.0
  %1938 = vmatpush.msra.mxu0 0.0
  %1939 = vmatpush.msra.mxu0 %v1866
  %1940 = vmatpush.msra.mxu0 %v1864
  %1941 = vmatpush.msra.mxu0 %v1862
  %1942 = vmatpush.msra.mxu0 %v1860
  %1943 = vmatmul.f32.gmra.mxu0 %v1875
  %v1944 = vpop.f32.mrf.mxu0
  %v1945 = vadd.f32 %v1871, %v1944
  %1946 = vmatmul.f32.gmra.mxu0 %v1878
  %v1947 = vpop.f32.mrf.mxu0
  %v1948 = vadd.f32 %v1871, %v1947
  %1949 = vmatmul.f32.gmra.mxu0 %v1881
  %v1950 = vpop.f32.mrf.mxu0
  %v1951 = vadd.f32 %v1871, %v1950
  %1952 = vmatmul.f32.gmra.mxu0 %v1884
  %v1953 = vpop.f32.mrf.mxu0
  %v1954 = vadd.f32 %v1871, %v1953
  %1955 = vmatmul.f32.gmra.mxu0 %v1887
  %v1956 = vpop.f32.mrf.mxu0
  %v1957 = vadd.f32 %v1871, %v1956
  %1958 = vmatmul.f32.gmra.mxu0 %v1890
  %v1959 = vpop.f32.mrf.mxu0
  %v1960 = vadd.f32 %v1871, %v1959
  %1961 = vdwg.mxu0
  %v1962 = vld [vmem:[%s1 + $0x240] sm:$0xff]
  %v1963 = vld [vmem:[%s1 + $0x250] sm:$0xff]
  %v1964 = vld [vmem:[%s1 + $0x260] sm:$0xff]
  %v1965 = vld [vmem:[%s1 + $0x270] sm:$0xff]
  %v1966 = vld [vmem:[%s1 + $0x280] sm:$0xff]
  %v1967 = vld [vmem:[%s1 + $0x290] sm:$0xff]
  %v1968 = vld [vmem:[%s1 + $0x2a0] sm:$0xff]
  %v1969 = vld [vmem:[%s1 + $0x2b0] sm:$0xff]
  %v1970 = vld [vmem:[%s1 + $0x3e0] ss:$0 sm:$0xff]
  %1977 = vrot.lane.b32.xlu0 %v1910, 64
  %v1978 = vpop.permute.xlu0 %1977
  %1979 = vrot.lane.b32.xlu0 %v1913, 64
  %v1980 = vpop.permute.xlu0 %1979
  %1981 = vrot.lane.b32.xlu0 %v1916, 64
  %v1982 = vpop.permute.xlu0 %1981
  %1983 = vrot.lane.b32.xlu0 %v1919, 64
  %v1984 = vpop.permute.xlu0 %1983
  %1985 = vrot.lane.b32.xlu0 %v1922, 64
  %v1986 = vpop.permute.xlu0 %1985
  %1987 = vrot.lane.b32.xlu0 %v1925, 64
  %v1988 = vpop.permute.xlu0 %1987
  %v1989 = vsel %vm247, %v1910, 0
  %v1991 = vsel %vm247, %v1913, 0
  %v1993 = vsel %vm247, %v1916, 0
  %v1995 = vsel %vm247, %v1919, 0
  %v1997 = vsel %vm247, %v1922, 0
  %v1999 = vsel %vm247, %v1925, 0
  %v2001 = vsel %vm247, %v1978, 0
  %v2003 = vsel %vm247, %v1980, 0
  %v2005 = vsel %vm247, %v1982, 0
  %v2007 = vsel %vm247, %v1984, 0
  %v2009 = vsel %vm247, %v1986, 0
  %v2011 = vsel %vm247, %v1988, 0
  %2013 = vmatpush.xpose.msra.mxu0 0.0
  %2014 = vmatpush.xpose.msra.mxu0 0.0
  %2015 = vmatpush.xpose.msra.mxu0 0.0
  %2016 = vmatpush.xpose.msra.mxu0 0.0
  %2017 = vmatpush.xpose.msra.mxu0 0.0
  %2018 = vmatpush.xpose.msra.mxu0 0.0
  %2019 = vmatpush.xpose.msra.mxu0 0.0
  %2020 = vmatpush.xpose.msra.mxu0 0.0
  %2021 = vmatpush.xpose.msra.mxu0 0.0
  %2022 = vmatpush.xpose.msra.mxu0 0.0
  %2023 = vmatpush.xpose.msra.mxu0 %v2011
  %2024 = vmatpush.xpose.msra.mxu0 %v2009
  %2025 = vmatpush.xpose.msra.mxu0 %v2007
  %2026 = vmatpush.xpose.msra.mxu0 %v2005
  %2027 = vmatpush.xpose.msra.mxu0 %v2003
  %2028 = vmatpush.xpose.msra.mxu0 %v2001
  %2029 = vmatmul.f32.gmra.mxu0 %v1989
  %v2030 = vpop.f32.mrf.mxu0
  %v2031 = vadd.f32 0.0, %v2030
  %2032 = vmatmul.f32.gmra.mxu0 %v1991
  %v2033 = vpop.f32.mrf.mxu0
  %v2034 = vadd.f32 0.0, %v2033
  %2035 = vmatmul.f32.gmra.mxu0 %v1993
  %v2036 = vpop.f32.mrf.mxu0
  %v2037 = vadd.f32 0.0, %v2036
  %2038 = vmatmul.f32.gmra.mxu0 %v1995
  %v2039 = vpop.f32.mrf.mxu0
  %v2040 = vadd.f32 0.0, %v2039
  %2041 = vmatmul.f32.gmra.mxu0 %v1997
  %v2042 = vpop.f32.mrf.mxu0
  %v2043 = vadd.f32 0.0, %v2042
  %2044 = vmatmul.f32.gmra.mxu0 %v1999
  %v2045 = vpop.f32.mrf.mxu0
  %v2046 = vadd.f32 0.0, %v2045
  %2047 = vdwg.mxu0
  %v2048 = vmul.f32 %v2031, 0.17677669
  %v2049 = vmul.f32 %v2034, 0.17677669
  %v2050 = vmul.f32 %v2037, 0.17677669
  %v2051 = vmul.f32 %v2040, 0.17677669
  %v2052 = vmul.f32 %v2043, 0.17677669
  %v2053 = vmul.f32 %v2046, 0.17677669
  %v2054 = vsel %vm510, %v2048, -1e+30
  %v2055 = vsel %vm511, %v2049, -1e+30
  %v2056 = vsel %vm512, %v2050, -1e+30
  %v2057 = vsel %vm513, %v2051, -1e+30
  %v2058 = vsel %vm514, %v2052, -1e+30
  %v2059 = vsel %vm515, %v2053, -1e+30
  %v2060 = vsel %vm875, %v2054, -inf
  %2061 = vmax.xlane.f32.xlu0 %v2060
  %v2062 = vpop.xlane.xlu0 %2061
  %v2063 = vsel %vm875, %v2055, -inf
  %2064 = vmax.xlane.f32.xlu0 %v2063
  %v2065 = vpop.xlane.xlu0 %2064
  %v2066 = vsel %vm875, %v2056, -inf
  %2067 = vmax.xlane.f32.xlu0 %v2066
  %v2068 = vpop.xlane.xlu0 %2067
  %v2069 = vsel %vm875, %v2057, -inf
  %2070 = vmax.xlane.f32.xlu0 %v2069
  %v2071 = vpop.xlane.xlu0 %2070
  %v2072 = vsel %vm875, %v2058, -inf
  %2073 = vmax.xlane.f32.xlu0 %v2072
  %v2074 = vpop.xlane.xlu0 %2073
  %v2075 = vsel %vm875, %v2059, -inf
  %2076 = vmax.xlane.f32.xlu0 %v2075
  %v2077 = vpop.xlane.xlu0 %2076
  %v2078 = vsub.f32 %v2054, %v2062
  %v2079 = vsub.f32 %v2055, %v2065
  %v2080 = vsub.f32 %v2056, %v2068
  %v2081 = vsub.f32 %v2057, %v2071
  %v2082 = vsub.f32 %v2058, %v2074
  %v2083 = vsub.f32 %v2059, %v2077
  %v2084 = vmul.f32 %v2078, 1.442695
  %v2085 = vpow.pop %v2084
  %v2086 = vmul.f32 %v2079, 1.442695
  %v2087 = vpow.pop %v2086
  %v2088 = vmul.f32 %v2080, 1.442695
  %v2089 = vpow.pop %v2088
  %v2090 = vmul.f32 %v2081, 1.442695
  %v2091 = vpow.pop %v2090
  %v2092 = vmul.f32 %v2082, 1.442695
  %v2093 = vpow.pop %v2092
  %v2094 = vmul.f32 %v2083, 1.442695
  %v2095 = vpow.pop %v2094
  %v2096 = vsel %vm875, %v2085, 0.0
  %2097 = vadd.xlane.f32.xlu0 %v2096
  %v2098 = vpop.xlane.xlu0 %2097
  %v2099 = vsel %vm875, %v2087, 0.0
  %2100 = vadd.xlane.f32.xlu0 %v2099
  %v2101 = vpop.xlane.xlu0 %2100
  %v2102 = vsel %vm875, %v2089, 0.0
  %2103 = vadd.xlane.f32.xlu0 %v2102
  %v2104 = vpop.xlane.xlu0 %2103
  %v2105 = vsel %vm875, %v2091, 0.0
  %2106 = vadd.xlane.f32.xlu0 %v2105
  %v2107 = vpop.xlane.xlu0 %2106
  %v2108 = vsel %vm875, %v2093, 0.0
  %2109 = vadd.xlane.f32.xlu0 %v2108
  %v2110 = vpop.xlane.xlu0 %2109
  %v2111 = vsel %vm875, %v2095, 0.0
  %2112 = vadd.xlane.f32.xlu0 %v2111
  %v2113 = vpop.xlane.xlu0 %2112
  %v2114 = vrcp.pop %v2098
  %v2115 = vrcp.pop %v2101
  %v2116 = vrcp.pop %v2104
  %v2117 = vrcp.pop %v2107
  %v2118 = vrcp.pop %v2110
  %v2119 = vrcp.pop %v2113
  %v2120 = vmul.f32 %v2085, %v2114
  %v2121 = vmul.f32 %v2087, %v2115
  %v2122 = vmul.f32 %v2089, %v2116
  %v2123 = vmul.f32 %v2091, %v2117
  %v2124 = vmul.f32 %v2093, %v2118
  %v2125 = vmul.f32 %v2095, %v2119
  %v2127 = vsel %vm875, %v2120, 0
  %v2130 = vsel %vm875, %v2121, 0
  %v2133 = vsel %vm875, %v2122, 0
  %v2136 = vsel %vm875, %v2123, 0
  %v2139 = vsel %vm875, %v2124, 0
  %v2142 = vsel %vm875, %v2125, 0
  %2144 = vmatpush.msra.mxu0 0.0
  %2145 = vmatpush.msra.mxu0 0.0
  %2146 = vmatpush.msra.mxu0 0.0
  %2147 = vmatpush.msra.mxu0 0.0
  %2148 = vmatpush.msra.mxu0 0.0
  %2149 = vmatpush.msra.mxu0 0.0
  %2150 = vmatpush.msra.mxu0 0.0
  %2151 = vmatpush.msra.mxu0 0.0
  %2152 = vmatpush.msra.mxu0 0.0
  %2153 = vmatpush.msra.mxu0 0.0
  %2154 = vmatpush.msra.mxu0 %v1960
  %2155 = vmatpush.msra.mxu0 %v1957
  %2156 = vmatpush.msra.mxu0 %v1954
  %2157 = vmatpush.msra.mxu0 %v1951
  %2158 = vmatpush.msra.mxu0 %v1948
  %2159 = vmatpush.msra.mxu0 %v1945
  %2160 = vmatmul.f32.gmra.mxu0 %v2127
  %v2161 = vpop.f32.mrf.mxu0
  %v2162 = vadd.f32 0.0, %v2161
  %2163 = vmatmul.f32.gmra.mxu0 %v2130
  %v2164 = vpop.f32.mrf.mxu0
  %v2165 = vadd.f32 0.0, %v2164
  %2166 = vmatmul.f32.gmra.mxu0 %v2133
  %v2167 = vpop.f32.mrf.mxu0
  %v2168 = vadd.f32 0.0, %v2167
  %2169 = vmatmul.f32.gmra.mxu0 %v2136
  %v2170 = vpop.f32.mrf.mxu0
  %v2171 = vadd.f32 0.0, %v2170
  %2172 = vmatmul.f32.gmra.mxu0 %v2139
  %v2173 = vpop.f32.mrf.mxu0
  %v2174 = vadd.f32 0.0, %v2173
  %2175 = vmatmul.f32.gmra.mxu0 %v2142
  %v2176 = vpop.f32.mrf.mxu0
  %v2177 = vadd.f32 0.0, %v2176
  %2178 = vdwg.mxu0
  %v2180 = vsel %vm247, %v2162, 0
  %v2183 = vsel %vm247, %v2165, 0
  %v2186 = vsel %vm247, %v2168, 0
  %v2189 = vsel %vm247, %v2171, 0
  %v2192 = vsel %vm247, %v2174, 0
  %v2195 = vsel %vm247, %v2177, 0
  %2197 = vmatpush.msra.mxu0 0.0
  %2198 = vmatpush.msra.mxu0 0.0
  %2199 = vmatpush.msra.mxu0 0.0
  %2200 = vmatpush.msra.mxu0 0.0
  %2201 = vmatpush.msra.mxu0 0.0
  %2202 = vmatpush.msra.mxu0 0.0
  %2203 = vmatpush.msra.mxu0 0.0
  %2204 = vmatpush.msra.mxu0 0.0
  %2205 = vmatpush.msra.mxu0 0.0
  %2206 = vmatpush.msra.mxu0 0.0
  %2207 = vmatpush.msra.mxu0 0.0
  %2208 = vmatpush.msra.mxu0 0.0
  %2209 = vmatpush.msra.mxu0 %v1965
  %2210 = vmatpush.msra.mxu0 %v1964
  %2211 = vmatpush.msra.mxu0 %v1963
  %2212 = vmatpush.msra.mxu0 %v1962
  %2213 = vmatmul.f32.gmra.mxu0 %v2180
  %v2214 = vpop.f32.mrf.mxu0
  %v2215 = vadd.f32 0.0, %v2214
  %2216 = vmatmul.f32.gmra.mxu0 %v2183
  %v2217 = vpop.f32.mrf.mxu0
  %v2218 = vadd.f32 0.0, %v2217
  %2219 = vmatmul.f32.gmra.mxu0 %v2186
  %v2220 = vpop.f32.mrf.mxu0
  %v2221 = vadd.f32 0.0, %v2220
  %2222 = vmatmul.f32.gmra.mxu0 %v2189
  %v2223 = vpop.f32.mrf.mxu0
  %v2224 = vadd.f32 0.0, %v2223
  %2225 = vmatmul.f32.gmra.mxu0 %v2192
  %v2226 = vpop.f32.mrf.mxu0
  %v2227 = vadd.f32 0.0, %v2226
  %2228 = vmatmul.f32.gmra.mxu0 %v2195
  %v2229 = vpop.f32.mrf.mxu0
  %v2230 = vadd.f32 0.0, %v2229
  %2231 = vdwg.mxu0
  %v2232 = vadd.f32 %v1970, %v2215
  %v2233 = vadd.f32 %v1970, %v2218
  %v2234 = vadd.f32 %v1970, %v2221
  %v2235 = vadd.f32 %v1970, %v2224
  %v2236 = vadd.f32 %v1970, %v2227
  %v2237 = vadd.f32 %v1970, %v2230
  %2238 = vrot.lane.b32.xlu0 %v1910, 96
  %v2239 = vpop.permute.xlu0 %2238
  %2240 = vrot.lane.b32.xlu0 %v1913, 96
  %v2241 = vpop.permute.xlu0 %2240
  %2242 = vrot.lane.b32.xlu0 %v1916, 96
  %v2243 = vpop.permute.xlu0 %2242
  %2244 = vrot.lane.b32.xlu0 %v1919, 96
  %v2245 = vpop.permute.xlu0 %2244
  %2246 = vrot.lane.b32.xlu0 %v1922, 96
  %v2247 = vpop.permute.xlu0 %2246
  %2248 = vrot.lane.b32.xlu0 %v1925, 96
  %v2249 = vpop.permute.xlu0 %2248
  %2250 = vrot.lane.b32.xlu0 %v1910, 32
  %v2251 = vpop.permute.xlu0 %2250
  %2252 = vrot.lane.b32.xlu0 %v1913, 32
  %v2253 = vpop.permute.xlu0 %2252
  %2254 = vrot.lane.b32.xlu0 %v1916, 32
  %v2255 = vpop.permute.xlu0 %2254
  %2256 = vrot.lane.b32.xlu0 %v1919, 32
  %v2257 = vpop.permute.xlu0 %2256
  %2258 = vrot.lane.b32.xlu0 %v1922, 32
  %v2259 = vpop.permute.xlu0 %2258
  %2260 = vrot.lane.b32.xlu0 %v1925, 32
  %v2261 = vpop.permute.xlu0 %2260
  %v2262 = vsel %vm247, %v2239, 0
  %v2264 = vsel %vm247, %v2241, 0
  %v2266 = vsel %vm247, %v2243, 0
  %v2268 = vsel %vm247, %v2245, 0
  %v2270 = vsel %vm247, %v2247, 0
  %v2272 = vsel %vm247, %v2249, 0
  %v2274 = vsel %vm247, %v2251, 0
  %v2276 = vsel %vm247, %v2253, 0
  %v2278 = vsel %vm247, %v2255, 0
  %v2280 = vsel %vm247, %v2257, 0
  %v2282 = vsel %vm247, %v2259, 0
  %v2284 = vsel %vm247, %v2261, 0
  %2286 = vmatpush.xpose.msra.mxu0 0.0
  %2287 = vmatpush.xpose.msra.mxu0 0.0
  %2288 = vmatpush.xpose.msra.mxu0 0.0
  %2289 = vmatpush.xpose.msra.mxu0 0.0
  %2290 = vmatpush.xpose.msra.mxu0 0.0
  %2291 = vmatpush.xpose.msra.mxu0 0.0
  %2292 = vmatpush.xpose.msra.mxu0 0.0
  %2293 = vmatpush.xpose.msra.mxu0 0.0
  %2294 = vmatpush.xpose.msra.mxu0 0.0
  %2295 = vmatpush.xpose.msra.mxu0 0.0
  %2296 = vmatpush.xpose.msra.mxu0 %v2284
  %2297 = vmatpush.xpose.msra.mxu0 %v2282
  %2298 = vmatpush.xpose.msra.mxu0 %v2280
  %2299 = vmatpush.xpose.msra.mxu0 %v2278
  %2300 = vmatpush.xpose.msra.mxu0 %v2276
  %2301 = vmatpush.xpose.msra.mxu0 %v2274
  %2302 = vmatmul.f32.gmra.mxu0 %v2262
  %v2303 = vpop.f32.mrf.mxu0
  %v2304 = vadd.f32 0.0, %v2303
  %2305 = vmatmul.f32.gmra.mxu0 %v2264
  %v2306 = vpop.f32.mrf.mxu0
  %v2307 = vadd.f32 0.0, %v2306
  %2308 = vmatmul.f32.gmra.mxu0 %v2266
  %v2309 = vpop.f32.mrf.mxu0
  %v2310 = vadd.f32 0.0, %v2309
  %2311 = vmatmul.f32.gmra.mxu0 %v2268
  %v2312 = vpop.f32.mrf.mxu0
  %v2313 = vadd.f32 0.0, %v2312
  %2314 = vmatmul.f32.gmra.mxu0 %v2270
  %v2315 = vpop.f32.mrf.mxu0
  %v2316 = vadd.f32 0.0, %v2315
  %2317 = vmatmul.f32.gmra.mxu0 %v2272
  %v2318 = vpop.f32.mrf.mxu0
  %v2319 = vadd.f32 0.0, %v2318
  %2320 = vdwg.mxu0
  %v2321 = vmul.f32 %v2304, 0.17677669
  %v2322 = vmul.f32 %v2307, 0.17677669
  %v2323 = vmul.f32 %v2310, 0.17677669
  %v2324 = vmul.f32 %v2313, 0.17677669
  %v2325 = vmul.f32 %v2316, 0.17677669
  %v2326 = vmul.f32 %v2319, 0.17677669
  %v2327 = vsel %vm510, %v2321, -1e+30
  %v2328 = vsel %vm511, %v2322, -1e+30
  %v2329 = vsel %vm512, %v2323, -1e+30
  %v2330 = vsel %vm513, %v2324, -1e+30
  %v2331 = vsel %vm514, %v2325, -1e+30
  %v2332 = vsel %vm515, %v2326, -1e+30
  %v2333 = vsel %vm875, %v2327, -inf
  %2334 = vmax.xlane.f32.xlu0 %v2333
  %v2335 = vpop.xlane.xlu0 %2334
  %v2336 = vsel %vm875, %v2328, -inf
  %2337 = vmax.xlane.f32.xlu0 %v2336
  %v2338 = vpop.xlane.xlu0 %2337
  %v2339 = vsel %vm875, %v2329, -inf
  %2340 = vmax.xlane.f32.xlu0 %v2339
  %v2341 = vpop.xlane.xlu0 %2340
  %v2342 = vsel %vm875, %v2330, -inf
  %2343 = vmax.xlane.f32.xlu0 %v2342
  %v2344 = vpop.xlane.xlu0 %2343
  %v2345 = vsel %vm875, %v2331, -inf
  %2346 = vmax.xlane.f32.xlu0 %v2345
  %v2347 = vpop.xlane.xlu0 %2346
  %v2348 = vsel %vm875, %v2332, -inf
  %2349 = vmax.xlane.f32.xlu0 %v2348
  %v2350 = vpop.xlane.xlu0 %2349
  %v2351 = vsub.f32 %v2327, %v2335
  %v2352 = vsub.f32 %v2328, %v2338
  %v2353 = vsub.f32 %v2329, %v2341
  %v2354 = vsub.f32 %v2330, %v2344
  %v2355 = vsub.f32 %v2331, %v2347
  %v2356 = vsub.f32 %v2332, %v2350
  %v2357 = vmul.f32 %v2351, 1.442695
  %v2358 = vpow.pop %v2357
  %v2359 = vmul.f32 %v2352, 1.442695
  %v2360 = vpow.pop %v2359
  %v2361 = vmul.f32 %v2353, 1.442695
  %v2362 = vpow.pop %v2361
  %v2363 = vmul.f32 %v2354, 1.442695
  %v2364 = vpow.pop %v2363
  %v2365 = vmul.f32 %v2355, 1.442695
  %v2366 = vpow.pop %v2365
  %v2367 = vmul.f32 %v2356, 1.442695
  %v2368 = vpow.pop %v2367
  %v2369 = vsel %vm875, %v2358, 0.0
  %2370 = vadd.xlane.f32.xlu0 %v2369
  %v2371 = vpop.xlane.xlu0 %2370
  %v2372 = vsel %vm875, %v2360, 0.0
  %2373 = vadd.xlane.f32.xlu0 %v2372
  %v2374 = vpop.xlane.xlu0 %2373
  %v2375 = vsel %vm875, %v2362, 0.0
  %2376 = vadd.xlane.f32.xlu0 %v2375
  %v2377 = vpop.xlane.xlu0 %2376
  %v2378 = vsel %vm875, %v2364, 0.0
  %2379 = vadd.xlane.f32.xlu0 %v2378
  %v2380 = vpop.xlane.xlu0 %2379
  %v2381 = vsel %vm875, %v2366, 0.0
  %2382 = vadd.xlane.f32.xlu0 %v2381
  %v2383 = vpop.xlane.xlu0 %2382
  %v2384 = vsel %vm875, %v2368, 0.0
  %2385 = vadd.xlane.f32.xlu0 %v2384
  %v2386 = vpop.xlane.xlu0 %2385
  %v2387 = vrcp.pop %v2371
  %v2388 = vrcp.pop %v2374
  %v2389 = vrcp.pop %v2377
  %v2390 = vrcp.pop %v2380
  %v2391 = vrcp.pop %v2383
  %v2392 = vrcp.pop %v2386
  %v2393 = vmul.f32 %v2358, %v2387
  %v2394 = vmul.f32 %v2360, %v2388
  %v2395 = vmul.f32 %v2362, %v2389
  %v2396 = vmul.f32 %v2364, %v2390
  %v2397 = vmul.f32 %v2366, %v2391
  %v2398 = vmul.f32 %v2368, %v2392
  %2405 = vrot.lane.b32.xlu0 %v1945, 96
  %v2406 = vpop.permute.xlu0 %2405
  %2407 = vrot.lane.b32.xlu0 %v1948, 96
  %v2408 = vpop.permute.xlu0 %2407
  %2409 = vrot.lane.b32.xlu0 %v1951, 96
  %v2410 = vpop.permute.xlu0 %2409
  %2411 = vrot.lane.b32.xlu0 %v1954, 96
  %v2412 = vpop.permute.xlu0 %2411
  %2413 = vrot.lane.b32.xlu0 %v1957, 96
  %v2414 = vpop.permute.xlu0 %2413
  %2415 = vrot.lane.b32.xlu0 %v1960, 96
  %v2416 = vpop.permute.xlu0 %2415
  %v2424 = vsel %vm875, %v2393, 0
  %v2427 = vsel %vm875, %v2394, 0
  %v2430 = vsel %vm875, %v2395, 0
  %v2433 = vsel %vm875, %v2396, 0
  %v2436 = vsel %vm875, %v2397, 0
  %v2439 = vsel %vm875, %v2398, 0
  %2441 = vmatpush.msra.mxu0 0.0
  %2442 = vmatpush.msra.mxu0 0.0
  %2443 = vmatpush.msra.mxu0 0.0
  %2444 = vmatpush.msra.mxu0 0.0
  %2445 = vmatpush.msra.mxu0 0.0
  %2446 = vmatpush.msra.mxu0 0.0
  %2447 = vmatpush.msra.mxu0 0.0
  %2448 = vmatpush.msra.mxu0 0.0
  %2449 = vmatpush.msra.mxu0 0.0
  %2450 = vmatpush.msra.mxu0 0.0
  %2451 = vmatpush.msra.mxu0 %v2416
  %2452 = vmatpush.msra.mxu0 %v2414
  %2453 = vmatpush.msra.mxu0 %v2412
  %2454 = vmatpush.msra.mxu0 %v2410
  %2455 = vmatpush.msra.mxu0 %v2408
  %2456 = vmatpush.msra.mxu0 %v2406
  %2457 = vmatmul.f32.gmra.mxu0 %v2424
  %v2458 = vpop.f32.mrf.mxu0
  %v2459 = vadd.f32 0.0, %v2458
  %2460 = vmatmul.f32.gmra.mxu0 %v2427
  %v2461 = vpop.f32.mrf.mxu0
  %v2462 = vadd.f32 0.0, %v2461
  %2463 = vmatmul.f32.gmra.mxu0 %v2430
  %v2464 = vpop.f32.mrf.mxu0
  %v2465 = vadd.f32 0.0, %v2464
  %2466 = vmatmul.f32.gmra.mxu0 %v2433
  %v2467 = vpop.f32.mrf.mxu0
  %v2468 = vadd.f32 0.0, %v2467
  %2469 = vmatmul.f32.gmra.mxu0 %v2436
  %v2470 = vpop.f32.mrf.mxu0
  %v2471 = vadd.f32 0.0, %v2470
  %2472 = vmatmul.f32.gmra.mxu0 %v2439
  %v2473 = vpop.f32.mrf.mxu0
  %v2474 = vadd.f32 0.0, %v2473
  %2475 = vdwg.mxu0
  %v2477 = vsel %vm247, %v2459, 0
  %v2480 = vsel %vm247, %v2462, 0
  %v2483 = vsel %vm247, %v2465, 0
  %v2486 = vsel %vm247, %v2468, 0
  %v2489 = vsel %vm247, %v2471, 0
  %v2492 = vsel %vm247, %v2474, 0
  %2494 = vmatpush.msra.mxu0 0.0
  %2495 = vmatpush.msra.mxu0 0.0
  %2496 = vmatpush.msra.mxu0 0.0
  %2497 = vmatpush.msra.mxu0 0.0
  %2498 = vmatpush.msra.mxu0 0.0
  %2499 = vmatpush.msra.mxu0 0.0
  %2500 = vmatpush.msra.mxu0 0.0
  %2501 = vmatpush.msra.mxu0 0.0
  %2502 = vmatpush.msra.mxu0 0.0
  %2503 = vmatpush.msra.mxu0 0.0
  %2504 = vmatpush.msra.mxu0 0.0
  %2505 = vmatpush.msra.mxu0 0.0
  %2506 = vmatpush.msra.mxu0 %v1969
  %2507 = vmatpush.msra.mxu0 %v1968
  %2508 = vmatpush.msra.mxu0 %v1967
  %2509 = vmatpush.msra.mxu0 %v1966
  %2510 = vmatmul.f32.gmra.mxu0 %v2477
  %v2511 = vpop.f32.mrf.mxu0
  %v2512 = vadd.f32 0.0, %v2511
  %2513 = vmatmul.f32.gmra.mxu0 %v2480
  %v2514 = vpop.f32.mrf.mxu0
  %v2515 = vadd.f32 0.0, %v2514
  %2516 = vmatmul.f32.gmra.mxu0 %v2483
  %v2517 = vpop.f32.mrf.mxu0
  %v2518 = vadd.f32 0.0, %v2517
  %2519 = vmatmul.f32.gmra.mxu0 %v2486
  %v2520 = vpop.f32.mrf.mxu0
  %v2521 = vadd.f32 0.0, %v2520
  %2522 = vmatmul.f32.gmra.mxu0 %v2489
  %v2523 = vpop.f32.mrf.mxu0
  %v2524 = vadd.f32 0.0, %v2523
  %2525 = vmatmul.f32.gmra.mxu0 %v2492
  %v2526 = vpop.f32.mrf.mxu0
  %v2527 = vadd.f32 0.0, %v2526
  %2528 = vdwg.mxu0
  %v2529 = vadd.f32 %v2232, %v2512
  %v2530 = vadd.f32 %v2233, %v2515
  %v2531 = vadd.f32 %v2234, %v2518
  %v2532 = vadd.f32 %v2235, %v2521
  %v2533 = vadd.f32 %v2236, %v2524
  %v2534 = vadd.f32 %v2237, %v2527
  %v2535 = vadd.f32 %v1853, %v2529
  %v2536 = vadd.f32 %v1854, %v2530
  %v2537 = vadd.f32 %v1855, %v2531
  %v2538 = vadd.f32 %v1856, %v2532
  %v2539 = vadd.f32 %v1857, %v2533
  %v2540 = vadd.f32 %v1858, %v2534
  %v2541 = vadd.f32 %v2535, %v1695
  %v2542 = vadd.f32 %v2536, %v1696
  %v2543 = vadd.f32 %v2537, %v1697
  %v2544 = vadd.f32 %v2538, %v1698
  %v2545 = vadd.f32 %v2539, %v1699
  %v2546 = vadd.f32 %v2540, %v1700
  %v2547 = vld [vmem:[%s1 + $0x3e1] ss:$0 sm:$0xff]
  %v2548 = vld [vmem:[%s1 + $0x3e2] ss:$0 sm:$0xff]
  %v2549 = vsel %vm247, %v2541, 0.0
  %2550 = vadd.xlane.f32.xlu0 %v2549
  %v2551 = vpop.xlane.xlu0 %2550
  %v2552 = vsel %vm247, %v2542, 0.0
  %2553 = vadd.xlane.f32.xlu0 %v2552
  %v2554 = vpop.xlane.xlu0 %2553
  %v2555 = vsel %vm247, %v2543, 0.0
  %2556 = vadd.xlane.f32.xlu0 %v2555
  %v2557 = vpop.xlane.xlu0 %2556
  %v2558 = vsel %vm247, %v2544, 0.0
  %2559 = vadd.xlane.f32.xlu0 %v2558
  %v2560 = vpop.xlane.xlu0 %2559
  %v2561 = vsel %vm247, %v2545, 0.0
  %2562 = vadd.xlane.f32.xlu0 %v2561
  %v2563 = vpop.xlane.xlu0 %2562
  %v2564 = vsel %vm247, %v2546, 0.0
  %2565 = vadd.xlane.f32.xlu0 %v2564
  %v2566 = vpop.xlane.xlu0 %2565
  %v2567 = vmul.f32 %v2551, %v272
  %v2568 = vmul.f32 %v2554, %v272
  %v2569 = vmul.f32 %v2557, %v272
  %v2570 = vmul.f32 %v2560, %v272
  %v2571 = vmul.f32 %v2563, %v272
  %v2572 = vmul.f32 %v2566, %v272
  %v2573 = vmul.f32 %v2541, %v2541
  %v2574 = vmul.f32 %v2542, %v2542
  %v2575 = vmul.f32 %v2543, %v2543
  %v2576 = vmul.f32 %v2544, %v2544
  %v2577 = vmul.f32 %v2545, %v2545
  %v2578 = vmul.f32 %v2546, %v2546
  %v2579 = vsel %vm247, %v2573, 0.0
  %2580 = vadd.xlane.f32.xlu0 %v2579
  %v2581 = vpop.xlane.xlu0 %2580
  %v2582 = vsel %vm247, %v2574, 0.0
  %2583 = vadd.xlane.f32.xlu0 %v2582
  %v2584 = vpop.xlane.xlu0 %2583
  %v2585 = vsel %vm247, %v2575, 0.0
  %2586 = vadd.xlane.f32.xlu0 %v2585
  %v2587 = vpop.xlane.xlu0 %2586
  %v2588 = vsel %vm247, %v2576, 0.0
  %2589 = vadd.xlane.f32.xlu0 %v2588
  %v2590 = vpop.xlane.xlu0 %2589
  %v2591 = vsel %vm247, %v2577, 0.0
  %2592 = vadd.xlane.f32.xlu0 %v2591
  %v2593 = vpop.xlane.xlu0 %2592
  %v2594 = vsel %vm247, %v2578, 0.0
  %2595 = vadd.xlane.f32.xlu0 %v2594
  %v2596 = vpop.xlane.xlu0 %2595
  %v2597 = vmul.f32 %v2581, %v272
  %v2598 = vmul.f32 %v2584, %v272
  %v2599 = vmul.f32 %v2587, %v272
  %v2600 = vmul.f32 %v2590, %v272
  %v2601 = vmul.f32 %v2593, %v272
  %v2602 = vmul.f32 %v2596, %v272
  %v2603 = vmul.f32 %v2567, %v2567
  %v2604 = vmul.f32 %v2568, %v2568
  %v2605 = vmul.f32 %v2569, %v2569
  %v2606 = vmul.f32 %v2570, %v2570
  %v2607 = vmul.f32 %v2571, %v2571
  %v2608 = vmul.f32 %v2572, %v2572
  %v2609 = vsub.f32 %v2597, %v2603
  %v2610 = vsub.f32 %v2598, %v2604
  %v2611 = vsub.f32 %v2599, %v2605
  %v2612 = vsub.f32 %v2600, %v2606
  %v2613 = vsub.f32 %v2601, %v2607
  %v2614 = vsub.f32 %v2602, %v2608
  %v2615 = vsub.f32 %v2541, %v2567
  %v2616 = vsub.f32 %v2542, %v2568
  %v2617 = vsub.f32 %v2543, %v2569
  %v2618 = vsub.f32 %v2544, %v2570
  %v2619 = vsub.f32 %v2545, %v2571
  %v2620 = vsub.f32 %v2546, %v2572
  %v2621 = vadd.f32 %v2609, 1e-05
  %v2622 = vadd.f32 %v2610, 1e-05
  %v2623 = vadd.f32 %v2611, 1e-05
  %v2624 = vadd.f32 %v2612, 1e-05
  %v2625 = vadd.f32 %v2613, 1e-05
  %v2626 = vadd.f32 %v2614, 1e-05
  %v2627 = vrsqrt.pop %v2621
  %v2628 = vmul.f32 %v2627, %v2621
  %v2629 = vmul.f32 %v2628, %v2627
  %v2630 = vmul.f32 0.5, %v2629
  %v2631 = vsub.f32 1.5, %v2630
  %v2632 = vmul.f32 %v2627, %v2631
  %vm2633 = vweird.f32 %v2621
  %vm2634 = vweird.f32 %v2627
  %vm2635 = vmor %vm2633, %vm2634
  %v2636 = vsel %vm2635, %v2627, %v2632
  %v2637 = vrsqrt.pop %v2622
  %v2638 = vmul.f32 %v2637, %v2622
  %v2639 = vmul.f32 %v2638, %v2637
  %v2640 = vmul.f32 0.5, %v2639
  %v2641 = vsub.f32 1.5, %v2640
  %v2642 = vmul.f32 %v2637, %v2641
  %vm2643 = vweird.f32 %v2622
  %vm2644 = vweird.f32 %v2637
  %vm2645 = vmor %vm2643, %vm2644
  %v2646 = vsel %vm2645, %v2637, %v2642
  %v2647 = vrsqrt.pop %v2623
  %v2648 = vmul.f32 %v2647, %v2623
  %v2649 = vmul.f32 %v2648, %v2647
  %v2650 = vmul.f32 0.5, %v2649
  %v2651 = vsub.f32 1.5, %v2650
  %v2652 = vmul.f32 %v2647, %v2651
  %vm2653 = vweird.f32 %v2623
  %vm2654 = vweird.f32 %v2647
  %vm2655 = vmor %vm2653, %vm2654
  %v2656 = vsel %vm2655, %v2647, %v2652
  %v2657 = vrsqrt.pop %v2624
  %v2658 = vmul.f32 %v2657, %v2624
  %v2659 = vmul.f32 %v2658, %v2657
  %v2660 = vmul.f32 0.5, %v2659
  %v2661 = vsub.f32 1.5, %v2660
  %v2662 = vmul.f32 %v2657, %v2661
  %vm2663 = vweird.f32 %v2624
  %vm2664 = vweird.f32 %v2657
  %vm2665 = vmor %vm2663, %vm2664
  %v2666 = vsel %vm2665, %v2657, %v2662
  %v2667 = vrsqrt.pop %v2625
  %v2668 = vmul.f32 %v2667, %v2625
  %v2669 = vmul.f32 %v2668, %v2667
  %v2670 = vmul.f32 0.5, %v2669
  %v2671 = vsub.f32 1.5, %v2670
  %v2672 = vmul.f32 %v2667, %v2671
  %vm2673 = vweird.f32 %v2625
  %vm2674 = vweird.f32 %v2667
  %vm2675 = vmor %vm2673, %vm2674
  %v2676 = vsel %vm2675, %v2667, %v2672
  %v2677 = vrsqrt.pop %v2626
  %v2678 = vmul.f32 %v2677, %v2626
  %v2679 = vmul.f32 %v2678, %v2677
  %v2680 = vmul.f32 0.5, %v2679
  %v2681 = vsub.f32 1.5, %v2680
  %v2682 = vmul.f32 %v2677, %v2681
  %vm2683 = vweird.f32 %v2626
  %vm2684 = vweird.f32 %v2677
  %vm2685 = vmor %vm2683, %vm2684
  %v2686 = vsel %vm2685, %v2677, %v2682
  %v2687 = vmul.f32 %v2615, %v2636
  %v2688 = vmul.f32 %v2616, %v2646
  %v2689 = vmul.f32 %v2617, %v2656
  %v2690 = vmul.f32 %v2618, %v2666
  %v2691 = vmul.f32 %v2619, %v2676
  %v2692 = vmul.f32 %v2620, %v2686
  %v2693 = vmul.f32 %v2687, %v2547
  %v2694 = vmul.f32 %v2688, %v2547
  %v2695 = vmul.f32 %v2689, %v2547
  %v2696 = vmul.f32 %v2690, %v2547
  %v2697 = vmul.f32 %v2691, %v2547
  %v2698 = vmul.f32 %v2692, %v2547
  %v2699 = vadd.f32 %v2693, %v2548
  %v2700 = vadd.f32 %v2694, %v2548
  %v2701 = vadd.f32 %v2695, %v2548
  %v2702 = vadd.f32 %v2696, %v2548
  %v2703 = vadd.f32 %v2697, %v2548
  %v2704 = vadd.f32 %v2698, %v2548
  %v2705 = vld [vmem:[%s1 + $0x2c0] sm:$0xff]
  %v2706 = vld [vmem:[%s1 + $0x2d0] sm:$0xff]
  %v2707 = vld [vmem:[%s1 + $0x2e0] sm:$0xff]
  %v2708 = vld [vmem:[%s1 + $0x2f0] sm:$0xff]
  %v2709 = vld [vmem:[%s1 + $0x3e3] ss:$0 sm:$0xff]
  %v2711 = vsel %vm247, %v2699, 0
  %v2714 = vsel %vm247, %v2700, 0
  %v2717 = vsel %vm247, %v2701, 0
  %v2720 = vsel %vm247, %v2702, 0
  %v2723 = vsel %vm247, %v2703, 0
  %v2726 = vsel %vm247, %v2704, 0
  %2728 = vmatpush.msra.mxu0 0.0
  %2729 = vmatpush.msra.mxu0 0.0
  %2730 = vmatpush.msra.mxu0 0.0
  %2731 = vmatpush.msra.mxu0 0.0
  %2732 = vmatpush.msra.mxu0 0.0
  %2733 = vmatpush.msra.mxu0 0.0
  %2734 = vmatpush.msra.mxu0 0.0
  %2735 = vmatpush.msra.mxu0 0.0
  %2736 = vmatpush.msra.mxu0 0.0
  %2737 = vmatpush.msra.mxu0 0.0
  %2738 = vmatpush.msra.mxu0 0.0
  %2739 = vmatpush.msra.mxu0 0.0
  %2740 = vmatpush.msra.mxu0 %v2708
  %2741 = vmatpush.msra.mxu0 %v2707
  %2742 = vmatpush.msra.mxu0 %v2706
  %2743 = vmatpush.msra.mxu0 %v2705
  %2744 = vmatmul.f32.gmra.mxu0 %v2711
  %v2745 = vpop.f32.mrf.mxu0
  %v2746 = vadd.f32 %v2709, %v2745
  %2747 = vmatmul.f32.gmra.mxu0 %v2714
  %v2748 = vpop.f32.mrf.mxu0
  %v2749 = vadd.f32 %v2709, %v2748
  %2750 = vmatmul.f32.gmra.mxu0 %v2717
  %v2751 = vpop.f32.mrf.mxu0
  %v2752 = vadd.f32 %v2709, %v2751
  %2753 = vmatmul.f32.gmra.mxu0 %v2720
  %v2754 = vpop.f32.mrf.mxu0
  %v2755 = vadd.f32 %v2709, %v2754
  %2756 = vmatmul.f32.gmra.mxu0 %v2723
  %v2757 = vpop.f32.mrf.mxu0
  %v2758 = vadd.f32 %v2709, %v2757
  %2759 = vmatmul.f32.gmra.mxu0 %v2726
  %v2760 = vpop.f32.mrf.mxu0
  %v2761 = vadd.f32 %v2709, %v2760
  %2762 = vdwg.mxu0
  %v2763 = vmul.f32 %v2746, 0.5
  %v2764 = vmul.f32 %v2749, 0.5
  %v2765 = vmul.f32 %v2752, 0.5
  %v2766 = vmul.f32 %v2755, 0.5
  %v2767 = vmul.f32 %v2758, 0.5
  %v2768 = vmul.f32 %v2761, 0.5
  %v2769 = vmul.f32 %v2746, 0.044715
  %v2770 = vmul.f32 %v2749, 0.044715
  %v2771 = vmul.f32 %v2752, 0.044715
  %v2772 = vmul.f32 %v2755, 0.044715
  %v2773 = vmul.f32 %v2758, 0.044715
  %v2774 = vmul.f32 %v2761, 0.044715
  %v2775 = vmul.f32 %v2769, %v2746
  %v2776 = vmul.f32 %v2770, %v2749
  %v2777 = vmul.f32 %v2771, %v2752
  %v2778 = vmul.f32 %v2772, %v2755
  %v2779 = vmul.f32 %v2773, %v2758
  %v2780 = vmul.f32 %v2774, %v2761
  %v2781 = vmul.f32 %v2775, %v2746
  %v2782 = vmul.f32 %v2776, %v2749
  %v2783 = vmul.f32 %v2777, %v2752
  %v2784 = vmul.f32 %v2778, %v2755
  %v2785 = vmul.f32 %v2779, %v2758
  %v2786 = vmul.f32 %v2780, %v2761
  %v2787 = vadd.f32 %v2746, %v2781
  %v2788 = vadd.f32 %v2749, %v2782
  %v2789 = vadd.f32 %v2752, %v2783
  %v2790 = vadd.f32 %v2755, %v2784
  %v2791 = vadd.f32 %v2758, %v2785
  %v2792 = vadd.f32 %v2761, %v2786
  %v2793 = vmul.f32 %v2787, 0.7978846
  %v2794 = vmul.f32 %v2788, 0.7978846
  %v2795 = vmul.f32 %v2789, 0.7978846
  %v2796 = vmul.f32 %v2790, 0.7978846
  %v2797 = vmul.f32 %v2791, 0.7978846
  %v2798 = vmul.f32 %v2792, 0.7978846
  %v2799 = vtanh.pop %v2793
  %v2800 = vtanh.pop %v2794
  %v2801 = vtanh.pop %v2795
  %v2802 = vtanh.pop %v2796
  %v2803 = vtanh.pop %v2797
  %v2804 = vtanh.pop %v2798
  %v2805 = vadd.f32 %v2799, 1.0
  %v2806 = vadd.f32 %v2800, 1.0
  %v2807 = vadd.f32 %v2801, 1.0
  %v2808 = vadd.f32 %v2802, 1.0
  %v2809 = vadd.f32 %v2803, 1.0
  %v2810 = vadd.f32 %v2804, 1.0
  %v2811 = vmul.f32 %v2763, %v2805
  %v2812 = vmul.f32 %v2764, %v2806
  %v2813 = vmul.f32 %v2765, %v2807
  %v2814 = vmul.f32 %v2766, %v2808
  %v2815 = vmul.f32 %v2767, %v2809
  %v2816 = vmul.f32 %v2768, %v2810
  %v2817 = vld [vmem:[%s1 + $0x300] sm:$0xff]
  %v2818 = vld [vmem:[%s1 + $0x310] sm:$0xff]
  %v2819 = vld [vmem:[%s1 + $0x320] sm:$0xff]
  %v2820 = vld [vmem:[%s1 + $0x330] sm:$0xff]
  %v2821 = vld [vmem:[%s1 + $0x340] sm:$0xff]
  %v2822 = vld [vmem:[%s1 + $0x350] sm:$0xff]
  %v2823 = vld [vmem:[%s1 + $0x360] sm:$0xff]
  %v2824 = vld [vmem:[%s1 + $0x370] sm:$0xff]
  %v2825 = vld [vmem:[%s1 + $0x3e4] ss:$0 sm:$0xff]
  %v2827 = vsel %vm19, %v2811, 0
  %v2830 = vsel %vm19, %v2812, 0
  %v2833 = vsel %vm19, %v2813, 0
  %v2836 = vsel %vm19, %v2814, 0
  %v2839 = vsel %vm19, %v2815, 0
  %v2842 = vsel %vm19, %v2816, 0
  %2844 = vmatpush.msra.mxu0 0.0
  %2845 = vmatpush.msra.mxu0 0.0
  %2846 = vmatpush.msra.mxu0 0.0
  %2847 = vmatpush.msra.mxu0 0.0
  %2848 = vmatpush.msra.mxu0 0.0
  %2849 = vmatpush.msra.mxu0 0.0
  %2850 = vmatpush.msra.mxu0 0.0
  %2851 = vmatpush.msra.mxu0 0.0
  %2852 = vmatpush.msra.mxu0 %v2824
  %2853 = vmatpush.msra.mxu0 %v2823
  %2854 = vmatpush.msra.mxu0 %v2822
  %2855 = vmatpush.msra.mxu0 %v2821
  %2856 = vmatpush.msra.mxu0 %v2820
  %2857 = vmatpush.msra.mxu0 %v2819
  %2858 = vmatpush.msra.mxu0 %v2818
  %2859 = vmatpush.msra.mxu0 %v2817
  %2860 = vmatmul.f32.gmra.mxu0 %v2827
  %v2861 = vpop.f32.mrf.mxu0
  %v2862 = vadd.f32 %v2825, %v2861
  %2863 = vmatmul.f32.gmra.mxu0 %v2830
  %v2864 = vpop.f32.mrf.mxu0
  %v2865 = vadd.f32 %v2825, %v2864
  %2866 = vmatmul.f32.gmra.mxu0 %v2833
  %v2867 = vpop.f32.mrf.mxu0
  %v2868 = vadd.f32 %v2825, %v2867
  %2869 = vmatmul.f32.gmra.mxu0 %v2836
  %v2870 = vpop.f32.mrf.mxu0
  %v2871 = vadd.f32 %v2825, %v2870
  %2872 = vmatmul.f32.gmra.mxu0 %v2839
  %v2873 = vpop.f32.mrf.mxu0
  %v2874 = vadd.f32 %v2825, %v2873
  %2875 = vmatmul.f32.gmra.mxu0 %v2842
  %v2876 = vpop.f32.mrf.mxu0
  %v2877 = vadd.f32 %v2825, %v2876
  %2878 = vdwg.mxu0
  %v2879 = vadd.f32 %v2862, %v2541
  %v2880 = vadd.f32 %v2865, %v2542
  %v2881 = vadd.f32 %v2868, %v2543
  %v2882 = vadd.f32 %v2871, %v2544
  %v2883 = vadd.f32 %v2874, %v2545
  %v2884 = vadd.f32 %v2877, %v2546
  %v2885 = vld [vmem:[%s1 + $0x3e5] ss:$0 sm:$0xff]
  %v2886 = vld [vmem:[%s1 + $0x3e6] ss:$0 sm:$0xff]
  %v2887 = vsel %vm247, %v2879, 0.0
  %2888 = vadd.xlane.f32.xlu0 %v2887
  %v2889 = vpop.xlane.xlu0 %2888
  %v2890 = vsel %vm247, %v2880, 0.0
  %2891 = vadd.xlane.f32.xlu0 %v2890
  %v2892 = vpop.xlane.xlu0 %2891
  %v2893 = vsel %vm247, %v2881, 0.0
  %2894 = vadd.xlane.f32.xlu0 %v2893
  %v2895 = vpop.xlane.xlu0 %2894
  %v2896 = vsel %vm247, %v2882, 0.0
  %2897 = vadd.xlane.f32.xlu0 %v2896
  %v2898 = vpop.xlane.xlu0 %2897
  %v2899 = vsel %vm247, %v2883, 0.0
  %2900 = vadd.xlane.f32.xlu0 %v2899
  %v2901 = vpop.xlane.xlu0 %2900
  %v2902 = vsel %vm247, %v2884, 0.0
  %2903 = vadd.xlane.f32.xlu0 %v2902
  %v2904 = vpop.xlane.xlu0 %2903
  %v2905 = vmul.f32 %v2889, %v272
  %v2906 = vmul.f32 %v2892, %v272
  %v2907 = vmul.f32 %v2895, %v272
  %v2908 = vmul.f32 %v2898, %v272
  %v2909 = vmul.f32 %v2901, %v272
  %v2910 = vmul.f32 %v2904, %v272
  %v2911 = vmul.f32 %v2879, %v2879
  %v2912 = vmul.f32 %v2880, %v2880
  %v2913 = vmul.f32 %v2881, %v2881
  %v2914 = vmul.f32 %v2882, %v2882
  %v2915 = vmul.f32 %v2883, %v2883
  %v2916 = vmul.f32 %v2884, %v2884
  %v2917 = vsel %vm247, %v2911, 0.0
  %2918 = vadd.xlane.f32.xlu0 %v2917
  %v2919 = vpop.xlane.xlu0 %2918
  %v2920 = vsel %vm247, %v2912, 0.0
  %2921 = vadd.xlane.f32.xlu0 %v2920
  %v2922 = vpop.xlane.xlu0 %2921
  %v2923 = vsel %vm247, %v2913, 0.0
  %2924 = vadd.xlane.f32.xlu0 %v2923
  %v2925 = vpop.xlane.xlu0 %2924
  %v2926 = vsel %vm247, %v2914, 0.0
  %2927 = vadd.xlane.f32.xlu0 %v2926
  %v2928 = vpop.xlane.xlu0 %2927
  %v2929 = vsel %vm247, %v2915, 0.0
  %2930 = vadd.xlane.f32.xlu0 %v2929
  %v2931 = vpop.xlane.xlu0 %2930
  %v2932 = vsel %vm247, %v2916, 0.0
  %2933 = vadd.xlane.f32.xlu0 %v2932
  %v2934 = vpop.xlane.xlu0 %2933
  %v2935 = vmul.f32 %v2919, %v272
  %v2936 = vmul.f32 %v2922, %v272
  %v2937 = vmul.f32 %v2925, %v272
  %v2938 = vmul.f32 %v2928, %v272
  %v2939 = vmul.f32 %v2931, %v272
  %v2940 = vmul.f32 %v2934, %v272
  %v2941 = vmul.f32 %v2905, %v2905
  %v2942 = vmul.f32 %v2906, %v2906
  %v2943 = vmul.f32 %v2907, %v2907
  %v2944 = vmul.f32 %v2908, %v2908
  %v2945 = vmul.f32 %v2909, %v2909
  %v2946 = vmul.f32 %v2910, %v2910
  %v2947 = vsub.f32 %v2935, %v2941
  %v2948 = vsub.f32 %v2936, %v2942
  %v2949 = vsub.f32 %v2937, %v2943
  %v2950 = vsub.f32 %v2938, %v2944
  %v2951 = vsub.f32 %v2939, %v2945
  %v2952 = vsub.f32 %v2940, %v2946
  %v2953 = vsub.f32 %v2879, %v2905
  %v2954 = vsub.f32 %v2880, %v2906
  %v2955 = vsub.f32 %v2881, %v2907
  %v2956 = vsub.f32 %v2882, %v2908
  %v2957 = vsub.f32 %v2883, %v2909
  %v2958 = vsub.f32 %v2884, %v2910
  %v2959 = vadd.f32 %v2947, 1e-05
  %v2960 = vadd.f32 %v2948, 1e-05
  %v2961 = vadd.f32 %v2949, 1e-05
  %v2962 = vadd.f32 %v2950, 1e-05
  %v2963 = vadd.f32 %v2951, 1e-05
  %v2964 = vadd.f32 %v2952, 1e-05
  %v2965 = vrsqrt.pop %v2959
  %v2966 = vmul.f32 %v2965, %v2959
  %v2967 = vmul.f32 %v2966, %v2965
  %v2968 = vmul.f32 0.5, %v2967
  %v2969 = vsub.f32 1.5, %v2968
  %v2970 = vmul.f32 %v2965, %v2969
  %vm2971 = vweird.f32 %v2959
  %vm2972 = vweird.f32 %v2965
  %vm2973 = vmor %vm2971, %vm2972
  %v2974 = vsel %vm2973, %v2965, %v2970
  %v2975 = vrsqrt.pop %v2960
  %v2976 = vmul.f32 %v2975, %v2960
  %v2977 = vmul.f32 %v2976, %v2975
  %v2978 = vmul.f32 0.5, %v2977
  %v2979 = vsub.f32 1.5, %v2978
  %v2980 = vmul.f32 %v2975, %v2979
  %vm2981 = vweird.f32 %v2960
  %vm2982 = vweird.f32 %v2975
  %vm2983 = vmor %vm2981, %vm2982
  %v2984 = vsel %vm2983, %v2975, %v2980
  %v2985 = vrsqrt.pop %v2961
  %v2986 = vmul.f32 %v2985, %v2961
  %v2987 = vmul.f32 %v2986, %v2985
  %v2988 = vmul.f32 0.5, %v2987
  %v2989 = vsub.f32 1.5, %v2988
  %v2990 = vmul.f32 %v2985, %v2989
  %vm2991 = vweird.f32 %v2961
  %vm2992 = vweird.f32 %v2985
  %vm2993 = vmor %vm2991, %vm2992
  %v2994 = vsel %vm2993, %v2985, %v2990
  %v2995 = vrsqrt.pop %v2962
  %v2996 = vmul.f32 %v2995, %v2962
  %v2997 = vmul.f32 %v2996, %v2995
  %v2998 = vmul.f32 0.5, %v2997
  %v2999 = vsub.f32 1.5, %v2998
  %v3000 = vmul.f32 %v2995, %v2999
  %vm3001 = vweird.f32 %v2962
  %vm3002 = vweird.f32 %v2995
  %vm3003 = vmor %vm3001, %vm3002
  %v3004 = vsel %vm3003, %v2995, %v3000
  %v3005 = vrsqrt.pop %v2963
  %v3006 = vmul.f32 %v3005, %v2963
  %v3007 = vmul.f32 %v3006, %v3005
  %v3008 = vmul.f32 0.5, %v3007
  %v3009 = vsub.f32 1.5, %v3008
  %v3010 = vmul.f32 %v3005, %v3009
  %vm3011 = vweird.f32 %v2963
  %vm3012 = vweird.f32 %v3005
  %vm3013 = vmor %vm3011, %vm3012
  %v3014 = vsel %vm3013, %v3005, %v3010
  %v3015 = vrsqrt.pop %v2964
  %v3016 = vmul.f32 %v3015, %v2964
  %v3017 = vmul.f32 %v3016, %v3015
  %v3018 = vmul.f32 0.5, %v3017
  %v3019 = vsub.f32 1.5, %v3018
  %v3020 = vmul.f32 %v3015, %v3019
  %vm3021 = vweird.f32 %v2964
  %vm3022 = vweird.f32 %v3015
  %vm3023 = vmor %vm3021, %vm3022
  %v3024 = vsel %vm3023, %v3015, %v3020
  %v3025 = vmul.f32 %v2953, %v2974
  %v3026 = vmul.f32 %v2954, %v2984
  %v3027 = vmul.f32 %v2955, %v2994
  %v3028 = vmul.f32 %v2956, %v3004
  %v3029 = vmul.f32 %v2957, %v3014
  %v3030 = vmul.f32 %v2958, %v3024
  %v3031 = vmul.f32 %v3025, %v2885
  %v3032 = vmul.f32 %v3026, %v2885
  %v3033 = vmul.f32 %v3027, %v2885
  %v3034 = vmul.f32 %v3028, %v2885
  %v3035 = vmul.f32 %v3029, %v2885
  %v3036 = vmul.f32 %v3030, %v2885
  %v3037 = vadd.f32 %v3031, %v2886
  %v3038 = vadd.f32 %v3032, %v2886
  %v3039 = vadd.f32 %v3033, %v2886
  %v3040 = vadd.f32 %v3034, %v2886
  %v3041 = vadd.f32 %v3035, %v2886
  %v3042 = vadd.f32 %v3036, %v2886
  %v3043 = vld [vmem:[%s1 + $0x380] sm:$0xff]
  %v3044 = vld [vmem:[%s1 + $0x390] sm:$0xff]
  %v3045 = vld [vmem:[%s1 + $0x3a0] sm:$0xff]
  %v3046 = vld [vmem:[%s1 + $0x3b0] sm:$0xff]
  %v3047 = vld [vmem:[%s1 + $0x3e7] ss:$0 sm:$0xff]
  %v3049 = vsel %vm247, %v3037, 0
  %v3052 = vsel %vm247, %v3038, 0
  %v3055 = vsel %vm247, %v3039, 0
  %v3058 = vsel %vm247, %v3040, 0
  %v3061 = vsel %vm247, %v3041, 0
  %v3064 = vsel %vm247, %v3042, 0
  %3066 = vmatpush.msra.mxu0 0.0
  %3067 = vmatpush.msra.mxu0 0.0
  %3068 = vmatpush.msra.mxu0 0.0
  %3069 = vmatpush.msra.mxu0 0.0
  %3070 = vmatpush.msra.mxu0 0.0
  %3071 = vmatpush.msra.mxu0 0.0
  %3072 = vmatpush.msra.mxu0 0.0
  %3073 = vmatpush.msra.mxu0 0.0
  %3074 = vmatpush.msra.mxu0 0.0
  %3075 = vmatpush.msra.mxu0 0.0
  %3076 = vmatpush.msra.mxu0 0.0
  %3077 = vmatpush.msra.mxu0 0.0
  %3078 = vmatpush.msra.mxu0 %v3046
  %3079 = vmatpush.msra.mxu0 %v3045
  %3080 = vmatpush.msra.mxu0 %v3044
  %3081 = vmatpush.msra.mxu0 %v3043
  %3082 = vmatmul.f32.gmra.mxu0 %v3049
  %v3083 = vpop.f32.mrf.mxu0
  %v3084 = vadd.f32 %v3047, %v3083
  %3085 = vmatmul.f32.gmra.mxu0 %v3052
  %v3086 = vpop.f32.mrf.mxu0
  %v3087 = vadd.f32 %v3047, %v3086
  %3088 = vmatmul.f32.gmra.mxu0 %v3055
  %v3089 = vpop.f32.mrf.mxu0
  %v3090 = vadd.f32 %v3047, %v3089
  %3091 = vmatmul.f32.gmra.mxu0 %v3058
  %v3092 = vpop.f32.mrf.mxu0
  %v3093 = vadd.f32 %v3047, %v3092
  %3094 = vmatmul.f32.gmra.mxu0 %v3061
  %v3095 = vpop.f32.mrf.mxu0
  %v3096 = vadd.f32 %v3047, %v3095
  %3097 = vmatmul.f32.gmra.mxu0 %v3064
  %v3098 = vpop.f32.mrf.mxu0
  %v3099 = vadd.f32 %v3047, %v3098
  %3100 = vdwg.mxu0
  %3101 = vst [vmem:[%s2] sm:$0xff] %v3084
  %3102 = vst [vmem:[%s2 + $0x8] sm:$0xff] %v3087
  %3103 = vst [vmem:[%s2 + $0x10] sm:$0xff] %v3090
  %3104 = vst [vmem:[%s2 + $0x18] sm:$0xff] %v3093
  %3105 = vst [vmem:[%s2 + $0x20] sm:$0xff] %v3096
  %3106 = vst [vmem:[%s2 + $0x28] sm:$0xff] %v3099
  // Predicated region
  $region10: #{vit_forward.1} parent=0 // pred_check
    _
  $region11: #{vit_forward.1} parent=0 // pred_check_branch
    %3108 = sbr.rel (0) target = $region13
  $region12: #{vit_forward.1} parent=0 // pred_region
    _
  $region13: #{vit_forward.1} parent=0 // pred_fallthru
    _
  // Predicated region
  $region14: #{vit_forward.1} parent=0 // pred_check
    _
  $region15: #{vit_forward.1} parent=0 // pred_check_branch
    %3110 = sbr.rel (0) target = $region17
  $region16: #{vit_forward.1} parent=0 // pred_region
    _
  $region17: #{vit_forward.1} parent=0 // pred_fallthru
    _

</llo_original>
